<compile_context>
chip_gen: v7x
topology: tpu7x:2x2x1
jax: 0.10.0
libtpu: 0.0.40
codegen_flags: <defaults>
</compile_context>

<pallas_src>
import functools
import math

import jax
import jax.numpy as jnp
import numpy as np
from jax.experimental import pallas as pl
from jax.experimental.pallas import tpu as pltpu


# ----------------------------- kernel-side math -----------------------------

def unit_decoder_kernel(num_heads,
                        x_ref, y_ref, bias_s_ref, bias_c_ref,
                        w_self_ref, w_cross_ref, b_attn_ref,
                        w1_ref, w2_ref, b_ffn_ref, ln_ref,
                        out_ref):
    f32, bf16 = jnp.float32, jnp.bfloat16

    x = x_ref[...]            # (Te, D)  f32  encoder tokens (batch folded in)
    y = y_ref[...]            # (Td, D)  f32  decoder tokens (batch folded in)
    bias_s = bias_s_ref[...]  # (Td, Td) f32  additive mask (block-diag, 0 / -1e9)
    bias_c = bias_c_ref[...]  # (Td, Te) f32
    w_self = w_self_ref[...]  # (D, 4D)  bf16  [Wq|Wk|Wv|Wo]
    w_cross = w_cross_ref[...]
    b_attn = b_attn_ref[...]  # (2, 4D)  f32   row0=self, row1=cross biases
    w1 = w1_ref[...]          # (D, hidden)  bf16
    w2 = w2_ref[...]          # (hidden, D)  bf16
    b_ffn = b_ffn_ref[...]    # (1, hidden+D) f32  [b1 | b2]
    ln = ln_ref[...]          # (6, D)  f32   rows 0-2 gamma, 3-5 beta

    D = y.shape[-1]
    H = num_heads
    dh = D // H
    hidden = w1.shape[-1]
    scale = 1.0 / math.sqrt(dh)

    def layer_norm(z, g, b, eps=1e-5):
        mu = jnp.mean(z, axis=-1, keepdims=True)
        var = jnp.mean((z - mu) ** 2, axis=-1, keepdims=True)
        return (z - mu) * jax.lax.rsqrt(var + eps) * g + b

    def attend(q, k, v, bias, wo, bo):
        """Multi-head attention core.

        q: (Tq, D), k/v: (Tk, D) f32 (already projected); bias: (Tq, Tk) additive;
        wo: (D, D) bf16; bo: (1, D) f32.
        """
        out = jnp.zeros((q.shape[0], D), f32)
        for h in range(H):  # unrolled; per-head matmuls contract only dh=8 lanes
            sl = slice(h * dh, (h + 1) * dh)
            s = jnp.dot(q[:, sl].astype(bf16), k[:, sl].T.astype(bf16),
                        preferred_element_type=f32) * scale + bias
            s = s - jnp.max(s, axis=-1, keepdims=True)
            p = jnp.exp(s)
            p = p * pl.reciprocal(jnp.sum(p, axis=-1, keepdims=True), approx=True)
            o_h = jnp.dot(p.astype(bf16), v[:, sl].astype(bf16),
                          preferred_element_type=f32)
            # sum_h o_h @ Wo[h*dh:(h+1)*dh, :] == concat_h(o_h) @ Wo
            out = out + jnp.dot(o_h.astype(bf16), wo[sl, :],
                                preferred_element_type=f32)
        return out + bo

    # --- masked self-attention + (Dropout_1: identity) + residual + LN1 ---
    qkv = jnp.dot(y.astype(bf16), w_self[:, :3 * D],
                  preferred_element_type=f32) + b_attn[0:1, :3 * D]
    sa = attend(qkv[:, :D], qkv[:, D:2 * D], qkv[:, 2 * D:],
                bias_s, w_self[:, 3 * D:], b_attn[0:1, 3 * D:])
    y = layer_norm(y + sa, ln[0], ln[3])

    # --- cross-attention: queries from decoder y, keys/values from encoder x ---
    q_c = jnp.dot(y.astype(bf16), w_cross[:, :D],
                  preferred_element_type=f32) + b_attn[1:2, :D]
    kv_c = jnp.dot(x.astype(bf16), w_cross[:, D:3 * D],
                   preferred_element_type=f32) + b_attn[1:2, D:3 * D]
    ca = attend(q_c, kv_c[:, :D], kv_c[:, D:],
                bias_c, w_cross[:, 3 * D:], b_attn[1:2, 3 * D:])
    y = layer_norm(y + ca, ln[1], ln[4])

    # --- position-wise feed-forward (ReLU) + residual + LN3 ---
    h1 = jnp.maximum(
        jnp.dot(y.astype(bf16), w1, preferred_element_type=f32)
        + b_ffn[0:1, :hidden], 0.0)
    ff = jnp.dot(h1.astype(bf16), w2, preferred_element_type=f32) \
        + b_ffn[0:1, hidden:]
    y = layer_norm(y + ff, ln[2], ln[5])

    out_ref[...] = y.astype(out_ref.dtype)


# ------------------------------- host wrapper --------------------------------

def unit_decoder(x, y, mask_ds, mask_en_ds, params, num_heads):
    B, S_dec, D = y.shape
    _, S_enc, _ = x.shape
    Td, Te = B * S_dec, B * S_enc
    hidden = params["w1"].shape[-1]
    bf16 = jnp.bfloat16

    # Flatten batch into the token/sublane dimension -> dense 2-D slabs.
    y2 = y.reshape(Td, D)
    x2 = x.reshape(Te, D)

    # Block-diagonal additive attention bias: keeps each batch element attending
    # only to its own tokens; masked / cross-batch entries get -1e9.
    def block_diag_bias(mask):
        Bm, Sq, Sk = mask.shape
        eye = jnp.eye(Bm, dtype=mask.dtype)
        big = (mask[:, :, None, :] * eye[:, None, :, None]).reshape(Bm * Sq, Bm * Sk)
        return jnp.where(big > 0, 0.0, -1e9).astype(jnp.float32)

    bias_self = block_diag_bias(mask_ds)       # (Td, Td)
    bias_cross = block_diag_bias(mask_en_ds)   # (Td, Te)

    # Pack weights (stored bf16): fused [Wq|Wk|Wv|Wo] per attention branch.
    w_self = jnp.concatenate([params["w_self"][i] for i in range(4)],
                             axis=1).astype(bf16)                      # (D, 4D)
    w_cross = jnp.concatenate([params["w_cross"][i] for i in range(4)],
                              axis=1).astype(bf16)                     # (D, 4D)
    b_attn = jnp.stack(
        [jnp.concatenate([params["b_self"][i] for i in range(4)]),
         jnp.concatenate([params["b_cross"][i] for i in range(4)])]
    ).astype(jnp.float32)                                              # (2, 4D)
    w1 = params["w1"].astype(bf16)
    w2 = params["w2"].astype(bf16)
    b_ffn = jnp.concatenate([params["b1"].reshape(1, -1),
                             params["b2"].reshape(1, -1)], axis=1)     # (1, hid+D)
    ln = jnp.concatenate([params["ln_g"], params["ln_b"]], axis=0)     # (6, D)

    inputs = (x2, y2, bias_self, bias_cross, w_self, w_cross, b_attn,
              w1, w2, b_ffn, ln)

    def full_spec(a):
        return pl.BlockSpec(a.shape, lambda i, _nd=a.ndim: (0,) * _nd)

    grid_spec = pltpu.PrefetchScalarGridSpec(
        num_scalar_prefetch=0,
        grid=(1,),  # single invocation: whole problem resident in VMEM
        in_specs=[full_spec(a) for a in inputs],
        out_specs=pl.BlockSpec((Td, D), lambda i: (0, 0)),
    )
    out2 = pl.pallas_call(
        functools.partial(unit_decoder_kernel, num_heads),
        out_shape=jax.ShapeDtypeStruct((Td, D), y.dtype),
        grid_spec=grid_spec,
        compiler_params=pltpu.CompilerParams(dimension_semantics=("arbitrary",)),
    )(*inputs)
    return out2.reshape(B, S_dec, D)


# --------------------------- plain-JAX reference ------------------------------

def reference(x, y, mask_ds, mask_en_ds, params, num_heads):
    def mha(q_in, kv_in, mask, w, b):
        B, Sq, D = q_in.shape
        Sk = kv_in.shape[1]
        dh = D // num_heads
        q = q_in @ w[0] + b[0]
        k = kv_in @ w[1] + b[1]
        v = kv_in @ w[2] + b[2]
        q = q.reshape(B, Sq, num_heads, dh).transpose(0, 2, 1, 3)
        k = k.reshape(B, Sk, num_heads, dh).transpose(0, 2, 1, 3)
        v = v.reshape(B, Sk, num_heads, dh).transpose(0, 2, 1, 3)
        s = jnp.einsum("bhqd,bhkd->bhqk", q, k, precision="highest") / jnp.sqrt(
            jnp.float32(dh))
        s = jnp.where(mask[:, None] > 0, s, -1e9)
        p = jax.nn.softmax(s, axis=-1)
        o = jnp.einsum("bhqk,bhkd->bhqd", p, v, precision="highest")
        o = o.transpose(0, 2, 1, 3).reshape(B, Sq, D)
        return o @ w[3] + b[3]

    def ln(z, g, bb, eps=1e-5):
        mu = z.mean(-1, keepdims=True)
        var = ((z - mu) ** 2).mean(-1, keepdims=True)
        return (z - mu) / jnp.sqrt(var + eps) * g + bb

    with jax.default_matmul_precision("highest"):
        yy = ln(y + mha(y, y, mask_ds, params["w_self"], params["b_self"]),
                params["ln_g"][0], params["ln_b"][0])
        yy = ln(yy + mha(yy, x, mask_en_ds, params["w_cross"], params["b_cross"]),
                params["ln_g"][1], params["ln_b"][1])
        h = jax.nn.relu(yy @ params["w1"] + params["b1"][0])
        ff = h @ params["w2"] + params["b2"][0]
        return ln(yy + ff, params["ln_g"][2], params["ln_b"][2])


# ----------------------------------- main -------------------------------------

if __name__ == "__main__":
    B, S_enc, S_dec = 2, 8, 8
    d_model, num_heads, hidden = 32, 4, 64

    key = jax.random.PRNGKey(0)
    keys = jax.random.split(key, 12)

    params = {
        "w_self": 0.05 * jax.random.normal(keys[0], (4, d_model, d_model), jnp.float32),
        "b_self": 0.02 * jax.random.normal(keys[1], (4, d_model), jnp.float32),
        "w_cross": 0.05 * jax.random.normal(keys[2], (4, d_model, d_model), jnp.float32),
        "b_cross": 0.02 * jax.random.normal(keys[3], (4, d_model), jnp.float32),
        "w1": 0.05 * jax.random.normal(keys[4], (d_model, hidden), jnp.float32),
        "b1": 0.02 * jax.random.normal(keys[5], (1, hidden), jnp.float32),
        "w2": 0.05 * jax.random.normal(keys[6], (hidden, d_model), jnp.float32),
        "b2": 0.02 * jax.random.normal(keys[7], (1, d_model), jnp.float32),
        "ln_g": jnp.ones((3, d_model), jnp.float32),
        "ln_b": jnp.zeros((3, d_model), jnp.float32),
    }

    x = jax.random.normal(keys[8], (B, S_enc, d_model), jnp.float32)   # encoder output
    y = jax.random.normal(keys[9], (B, S_dec, d_model), jnp.float32)   # decoder input

    # causal self-attention mask; full cross-attention mask
    mask_ds = jnp.broadcast_to(
        jnp.tril(jnp.ones((S_dec, S_dec), jnp.float32)), (B, S_dec, S_dec))
    mask_en_ds = jnp.ones((B, S_dec, S_enc), jnp.float32)

    out = unit_decoder(x, y, mask_ds, mask_en_ds, params, num_heads)
    out = jax.block_until_ready(out)

    ref = jax.block_until_ready(reference(x, y, mask_ds, mask_en_ds, params, num_heads))
    np.testing.assert_allclose(np.asarray(out), np.asarray(ref), rtol=2e-2, atol=2e-2)

    print("KERNEL_OK")
</pallas_src>

<mosaic_0001>
module attributes {stable_mosaic.version = 11 : i64} {
  func.func @unit_decoder_kernel(%arg0: i32, %arg1: memref<16x32xf32, #tpu.memory_space<vmem>>, %arg2: memref<16x32xf32, #tpu.memory_space<vmem>>, %arg3: memref<16x16xf32, #tpu.memory_space<vmem>>, %arg4: memref<16x16xf32, #tpu.memory_space<vmem>>, %arg5: memref<32x128xbf16, #tpu.memory_space<vmem>>, %arg6: memref<32x128xbf16, #tpu.memory_space<vmem>>, %arg7: memref<2x128xf32, #tpu.memory_space<vmem>>, %arg8: memref<32x64xbf16, #tpu.memory_space<vmem>>, %arg9: memref<64x32xbf16, #tpu.memory_space<vmem>>, %arg10: memref<1x96xf32, #tpu.memory_space<vmem>>, %arg11: memref<6x32xf32, #tpu.memory_space<vmem>>, %arg12: memref<16x32xf32, #tpu.memory_space<vmem>>) attributes {dimension_semantics = [#tpu.dimension_semantics<arbitrary>], iteration_bounds = array<i64: 1>, scalar_prefetch = 0 : i64, scratch_operands = 0 : i64, tpu.core_type = #tpu.core_type<tc>, window_params = [{pipeline_mode = #tpu.pipeline_mode<synchronous>, transform_indices = @transform_0, window_bounds = array<i64: 16, 32>}, {pipeline_mode = #tpu.pipeline_mode<synchronous>, transform_indices = @transform_1, window_bounds = array<i64: 16, 32>}, {pipeline_mode = #tpu.pipeline_mode<synchronous>, transform_indices = @transform_2, window_bounds = array<i64: 16, 16>}, {pipeline_mode = #tpu.pipeline_mode<synchronous>, transform_indices = @transform_3, window_bounds = array<i64: 16, 16>}, {pipeline_mode = #tpu.pipeline_mode<synchronous>, transform_indices = @transform_4, window_bounds = array<i64: 32, 128>}, {pipeline_mode = #tpu.pipeline_mode<synchronous>, transform_indices = @transform_5, window_bounds = array<i64: 32, 128>}, {pipeline_mode = #tpu.pipeline_mode<synchronous>, transform_indices = @transform_6, window_bounds = array<i64: 2, 128>}, {pipeline_mode = #tpu.pipeline_mode<synchronous>, transform_indices = @transform_7, window_bounds = array<i64: 32, 64>}, {pipeline_mode = #tpu.pipeline_mode<synchronous>, transform_indices = @transform_8, window_bounds = array<i64: 64, 32>}, {pipeline_mode = #tpu.pipeline_mode<synchronous>, transform_indices = @transform_9, window_bounds = array<i64: 1, 96>}, {pipeline_mode = #tpu.pipeline_mode<synchronous>, transform_indices = @transform_10, window_bounds = array<i64: 6, 32>}, {pipeline_mode = #tpu.pipeline_mode<synchronous>, transform_indices = @transform_11, window_bounds = array<i64: 16, 32>}]} {
    %c0 = arith.constant 0 : index
    %c0_0 = arith.constant 0 : index
    %0 = vector.load %arg1[%c0, %c0_0] : memref<16x32xf32, #tpu.memory_space<vmem>>, vector<16x32xf32>
    %c0_1 = arith.constant 0 : index
    %c0_2 = arith.constant 0 : index
    %1 = vector.load %arg2[%c0_1, %c0_2] : memref<16x32xf32, #tpu.memory_space<vmem>>, vector<16x32xf32>
    %c0_3 = arith.constant 0 : index
    %c0_4 = arith.constant 0 : index
    %2 = vector.load %arg3[%c0_3, %c0_4] : memref<16x16xf32, #tpu.memory_space<vmem>>, vector<16x16xf32>
    %c0_5 = arith.constant 0 : index
    %c0_6 = arith.constant 0 : index
    %3 = vector.load %arg4[%c0_5, %c0_6] : memref<16x16xf32, #tpu.memory_space<vmem>>, vector<16x16xf32>
    %c0_7 = arith.constant 0 : index
    %c0_8 = arith.constant 0 : index
    %4 = vector.load %arg5[%c0_7, %c0_8] : memref<32x128xbf16, #tpu.memory_space<vmem>>, vector<32x128xbf16>
    %c0_9 = arith.constant 0 : index
    %c0_10 = arith.constant 0 : index
    %5 = vector.load %arg6[%c0_9, %c0_10] : memref<32x128xbf16, #tpu.memory_space<vmem>>, vector<32x128xbf16>
    %c0_11 = arith.constant 0 : index
    %c0_12 = arith.constant 0 : index
    %6 = vector.load %arg7[%c0_11, %c0_12] : memref<2x128xf32, #tpu.memory_space<vmem>>, vector<2x128xf32>
    %c0_13 = arith.constant 0 : index
    %c0_14 = arith.constant 0 : index
    %7 = vector.load %arg8[%c0_13, %c0_14] : memref<32x64xbf16, #tpu.memory_space<vmem>>, vector<32x64xbf16>
    %c0_15 = arith.constant 0 : index
    %c0_16 = arith.constant 0 : index
    %8 = vector.load %arg9[%c0_15, %c0_16] : memref<64x32xbf16, #tpu.memory_space<vmem>>, vector<64x32xbf16>
    %c0_17 = arith.constant 0 : index
    %c0_18 = arith.constant 0 : index
    %9 = vector.load %arg10[%c0_17, %c0_18] : memref<1x96xf32, #tpu.memory_space<vmem>>, vector<1x96xf32>
    %c0_19 = arith.constant 0 : index
    %c0_20 = arith.constant 0 : index
    %10 = vector.load %arg11[%c0_19, %c0_20] : memref<6x32xf32, #tpu.memory_space<vmem>>, vector<6x32xf32>
    %11 = arith.truncf %1 : vector<16x32xf32> to vector<16x32xbf16>
    %12 = vector.extract_strided_slice %4 {offsets = [0, 0], sizes = [32, 96], strides = [1, 1]} : vector<32x128xbf16> to vector<32x96xbf16>
    %cst = arith.constant dense<0.000000e+00> : vector<16x96xf32>
    %13 = tpu.matmul %11, %12, %cst {dimension_numbers = #tpu.dot_dimension_numbers<[1], [0], [0], [1], [0, 0, 1, 1], [], []>} : vector<16x32xbf16>, vector<32x96xbf16>, vector<16x96xf32> -> vector<16x96xf32>
    %14 = vector.extract_strided_slice %6 {offsets = [0, 0], sizes = [1, 96], strides = [1, 1]} : vector<2x128xf32> to vector<1x96xf32>
    %15 = vector.broadcast %14 : vector<1x96xf32> to vector<16x96xf32>
    %16 = arith.addf %13, %15 : vector<16x96xf32>
    %17 = vector.extract_strided_slice %16 {offsets = [0, 0], sizes = [16, 32], strides = [1, 1]} : vector<16x96xf32> to vector<16x32xf32>
    %18 = vector.extract_strided_slice %16 {offsets = [0, 32], sizes = [16, 32], strides = [1, 1]} : vector<16x96xf32> to vector<16x32xf32>
    %19 = vector.extract_strided_slice %16 {offsets = [0, 64], sizes = [16, 32], strides = [1, 1]} : vector<16x96xf32> to vector<16x32xf32>
    %20 = vector.extract_strided_slice %4 {offsets = [0, 96], sizes = [32, 32], strides = [1, 1]} : vector<32x128xbf16> to vector<32x32xbf16>
    %21 = vector.extract_strided_slice %6 {offsets = [0, 96], sizes = [1, 32], strides = [1, 1]} : vector<2x128xf32> to vector<1x32xf32>
    %cst_21 = arith.constant 0.000000e+00 : f32
    %22 = vector.broadcast %cst_21 : f32 to vector<16x32xf32>
    %23 = vector.extract_strided_slice %17 {offsets = [0, 0], sizes = [16, 8], strides = [1, 1]} : vector<16x32xf32> to vector<16x8xf32>
    %24 = arith.truncf %23 : vector<16x8xf32> to vector<16x8xbf16>
    %25 = vector.extract_strided_slice %18 {offsets = [0, 0], sizes = [16, 8], strides = [1, 1]} : vector<16x32xf32> to vector<16x8xf32>
    %26 = tpu.transpose %25, [1, 0] : vector<16x8xf32> -> vector<8x16xf32>
    %27 = arith.truncf %26 : vector<8x16xf32> to vector<8x16xbf16>
    %cst_22 = arith.constant dense<0.000000e+00> : vector<16x16xf32>
    %28 = tpu.matmul %24, %27, %cst_22 {dimension_numbers = #tpu.dot_dimension_numbers<[1], [0], [0], [1], [0, 0, 1, 1], [], []>} : vector<16x8xbf16>, vector<8x16xbf16>, vector<16x16xf32> -> vector<16x16xf32>
    %cst_23 = arith.constant 0.353553385 : f32
    %29 = vector.broadcast %cst_23 : f32 to vector<16x16xf32>
    %30 = arith.mulf %28, %29 : vector<16x16xf32>
    %31 = arith.addf %30, %2 : vector<16x16xf32>
    %cst_24 = arith.constant dense<0xFF800000> : vector<16xf32>
    %32 = vector.multi_reduction <maximumf>, %31, %cst_24 [1] : vector<16x16xf32> to vector<16xf32>
    %33 = vector.shape_cast %32 : vector<16xf32> to vector<16x1xf32>
    %34 = vector.broadcast %33 : vector<16x1xf32> to vector<16x16xf32>
    %35 = arith.subf %31, %34 : vector<16x16xf32>
    %36 = math.exp %35 : vector<16x16xf32>
    %cst_25 = arith.constant dense<0.000000e+00> : vector<16xf32>
    %37 = vector.multi_reduction <add>, %36, %cst_25 [1] : vector<16x16xf32> to vector<16xf32>
    %38 = vector.shape_cast %37 : vector<16xf32> to vector<16x1xf32>
    %39 = tpu.reciprocal %38 {approx = true} : vector<16x1xf32> -> vector<16x1xf32>
    %40 = vector.broadcast %39 : vector<16x1xf32> to vector<16x16xf32>
    %41 = arith.mulf %36, %40 : vector<16x16xf32>
    %42 = arith.truncf %41 : vector<16x16xf32> to vector<16x16xbf16>
    %43 = vector.extract_strided_slice %19 {offsets = [0, 0], sizes = [16, 8], strides = [1, 1]} : vector<16x32xf32> to vector<16x8xf32>
    %44 = arith.truncf %43 : vector<16x8xf32> to vector<16x8xbf16>
    %cst_26 = arith.constant dense<0.000000e+00> : vector<16x8xf32>
    %45 = tpu.matmul %42, %44, %cst_26 {dimension_numbers = #tpu.dot_dimension_numbers<[1], [0], [0], [1], [0, 0, 1, 1], [], []>} : vector<16x16xbf16>, vector<16x8xbf16>, vector<16x8xf32> -> vector<16x8xf32>
    %46 = arith.truncf %45 : vector<16x8xf32> to vector<16x8xbf16>
    %47 = vector.extract_strided_slice %20 {offsets = [0, 0], sizes = [8, 32], strides = [1, 1]} : vector<32x32xbf16> to vector<8x32xbf16>
    %cst_27 = arith.constant dense<0.000000e+00> : vector<16x32xf32>
    %48 = tpu.matmul %46, %47, %cst_27 {dimension_numbers = #tpu.dot_dimension_numbers<[1], [0], [0], [1], [0, 0, 1, 1], [], []>} : vector<16x8xbf16>, vector<8x32xbf16>, vector<16x32xf32> -> vector<16x32xf32>
    %49 = arith.addf %22, %48 : vector<16x32xf32>
    %50 = vector.extract_strided_slice %17 {offsets = [0, 8], sizes = [16, 8], strides = [1, 1]} : vector<16x32xf32> to vector<16x8xf32>
    %51 = arith.truncf %50 : vector<16x8xf32> to vector<16x8xbf16>
    %52 = vector.extract_strided_slice %18 {offsets = [0, 8], sizes = [16, 8], strides = [1, 1]} : vector<16x32xf32> to vector<16x8xf32>
    %53 = tpu.transpose %52, [1, 0] : vector<16x8xf32> -> vector<8x16xf32>
    %54 = arith.truncf %53 : vector<8x16xf32> to vector<8x16xbf16>
    %cst_28 = arith.constant dense<0.000000e+00> : vector<16x16xf32>
    %55 = tpu.matmul %51, %54, %cst_28 {dimension_numbers = #tpu.dot_dimension_numbers<[1], [0], [0], [1], [0, 0, 1, 1], [], []>} : vector<16x8xbf16>, vector<8x16xbf16>, vector<16x16xf32> -> vector<16x16xf32>
    %cst_29 = arith.constant 0.353553385 : f32
    %56 = vector.broadcast %cst_29 : f32 to vector<16x16xf32>
    %57 = arith.mulf %55, %56 : vector<16x16xf32>
    %58 = arith.addf %57, %2 : vector<16x16xf32>
    %cst_30 = arith.constant dense<0xFF800000> : vector<16xf32>
    %59 = vector.multi_reduction <maximumf>, %58, %cst_30 [1] : vector<16x16xf32> to vector<16xf32>
    %60 = vector.shape_cast %59 : vector<16xf32> to vector<16x1xf32>
    %61 = vector.broadcast %60 : vector<16x1xf32> to vector<16x16xf32>
    %62 = arith.subf %58, %61 : vector<16x16xf32>
    %63 = math.exp %62 : vector<16x16xf32>
    %cst_31 = arith.constant dense<0.000000e+00> : vector<16xf32>
    %64 = vector.multi_reduction <add>, %63, %cst_31 [1] : vector<16x16xf32> to vector<16xf32>
    %65 = vector.shape_cast %64 : vector<16xf32> to vector<16x1xf32>
    %66 = tpu.reciprocal %65 {approx = true} : vector<16x1xf32> -> vector<16x1xf32>
    %67 = vector.broadcast %66 : vector<16x1xf32> to vector<16x16xf32>
    %68 = arith.mulf %63, %67 : vector<16x16xf32>
    %69 = arith.truncf %68 : vector<16x16xf32> to vector<16x16xbf16>
    %70 = vector.extract_strided_slice %19 {offsets = [0, 8], sizes = [16, 8], strides = [1, 1]} : vector<16x32xf32> to vector<16x8xf32>
    %71 = arith.truncf %70 : vector<16x8xf32> to vector<16x8xbf16>
    %cst_32 = arith.constant dense<0.000000e+00> : vector<16x8xf32>
    %72 = tpu.matmul %69, %71, %cst_32 {dimension_numbers = #tpu.dot_dimension_numbers<[1], [0], [0], [1], [0, 0, 1, 1], [], []>} : vector<16x16xbf16>, vector<16x8xbf16>, vector<16x8xf32> -> vector<16x8xf32>
    %73 = arith.truncf %72 : vector<16x8xf32> to vector<16x8xbf16>
    %74 = vector.extract_strided_slice %20 {offsets = [8, 0], sizes = [8, 32], strides = [1, 1]} : vector<32x32xbf16> to vector<8x32xbf16>
    %cst_33 = arith.constant dense<0.000000e+00> : vector<16x32xf32>
    %75 = tpu.matmul %73, %74, %cst_33 {dimension_numbers = #tpu.dot_dimension_numbers<[1], [0], [0], [1], [0, 0, 1, 1], [], []>} : vector<16x8xbf16>, vector<8x32xbf16>, vector<16x32xf32> -> vector<16x32xf32>
    %76 = arith.addf %49, %75 : vector<16x32xf32>
    %77 = vector.extract_strided_slice %17 {offsets = [0, 16], sizes = [16, 8], strides = [1, 1]} : vector<16x32xf32> to vector<16x8xf32>
    %78 = arith.truncf %77 : vector<16x8xf32> to vector<16x8xbf16>
    %79 = vector.extract_strided_slice %18 {offsets = [0, 16], sizes = [16, 8], strides = [1, 1]} : vector<16x32xf32> to vector<16x8xf32>
    %80 = tpu.transpose %79, [1, 0] : vector<16x8xf32> -> vector<8x16xf32>
    %81 = arith.truncf %80 : vector<8x16xf32> to vector<8x16xbf16>
    %cst_34 = arith.constant dense<0.000000e+00> : vector<16x16xf32>
    %82 = tpu.matmul %78, %81, %cst_34 {dimension_numbers = #tpu.dot_dimension_numbers<[1], [0], [0], [1], [0, 0, 1, 1], [], []>} : vector<16x8xbf16>, vector<8x16xbf16>, vector<16x16xf32> -> vector<16x16xf32>
    %cst_35 = arith.constant 0.353553385 : f32
    %83 = vector.broadcast %cst_35 : f32 to vector<16x16xf32>
    %84 = arith.mulf %82, %83 : vector<16x16xf32>
    %85 = arith.addf %84, %2 : vector<16x16xf32>
    %cst_36 = arith.constant dense<0xFF800000> : vector<16xf32>
    %86 = vector.multi_reduction <maximumf>, %85, %cst_36 [1] : vector<16x16xf32> to vector<16xf32>
    %87 = vector.shape_cast %86 : vector<16xf32> to vector<16x1xf32>
    %88 = vector.broadcast %87 : vector<16x1xf32> to vector<16x16xf32>
    %89 = arith.subf %85, %88 : vector<16x16xf32>
    %90 = math.exp %89 : vector<16x16xf32>
    %cst_37 = arith.constant dense<0.000000e+00> : vector<16xf32>
    %91 = vector.multi_reduction <add>, %90, %cst_37 [1] : vector<16x16xf32> to vector<16xf32>
    %92 = vector.shape_cast %91 : vector<16xf32> to vector<16x1xf32>
    %93 = tpu.reciprocal %92 {approx = true} : vector<16x1xf32> -> vector<16x1xf32>
    %94 = vector.broadcast %93 : vector<16x1xf32> to vector<16x16xf32>
    %95 = arith.mulf %90, %94 : vector<16x16xf32>
    %96 = arith.truncf %95 : vector<16x16xf32> to vector<16x16xbf16>
    %97 = vector.extract_strided_slice %19 {offsets = [0, 16], sizes = [16, 8], strides = [1, 1]} : vector<16x32xf32> to vector<16x8xf32>
    %98 = arith.truncf %97 : vector<16x8xf32> to vector<16x8xbf16>
    %cst_38 = arith.constant dense<0.000000e+00> : vector<16x8xf32>
    %99 = tpu.matmul %96, %98, %cst_38 {dimension_numbers = #tpu.dot_dimension_numbers<[1], [0], [0], [1], [0, 0, 1, 1], [], []>} : vector<16x16xbf16>, vector<16x8xbf16>, vector<16x8xf32> -> vector<16x8xf32>
    %100 = arith.truncf %99 : vector<16x8xf32> to vector<16x8xbf16>
    %101 = vector.extract_strided_slice %20 {offsets = [16, 0], sizes = [8, 32], strides = [1, 1]} : vector<32x32xbf16> to vector<8x32xbf16>
    %cst_39 = arith.constant dense<0.000000e+00> : vector<16x32xf32>
    %102 = tpu.matmul %100, %101, %cst_39 {dimension_numbers = #tpu.dot_dimension_numbers<[1], [0], [0], [1], [0, 0, 1, 1], [], []>} : vector<16x8xbf16>, vector<8x32xbf16>, vector<16x32xf32> -> vector<16x32xf32>
    %103 = arith.addf %76, %102 : vector<16x32xf32>
    %104 = vector.extract_strided_slice %17 {offsets = [0, 24], sizes = [16, 8], strides = [1, 1]} : vector<16x32xf32> to vector<16x8xf32>
    %105 = arith.truncf %104 : vector<16x8xf32> to vector<16x8xbf16>
    %106 = vector.extract_strided_slice %18 {offsets = [0, 24], sizes = [16, 8], strides = [1, 1]} : vector<16x32xf32> to vector<16x8xf32>
    %107 = tpu.transpose %106, [1, 0] : vector<16x8xf32> -> vector<8x16xf32>
    %108 = arith.truncf %107 : vector<8x16xf32> to vector<8x16xbf16>
    %cst_40 = arith.constant dense<0.000000e+00> : vector<16x16xf32>
    %109 = tpu.matmul %105, %108, %cst_40 {dimension_numbers = #tpu.dot_dimension_numbers<[1], [0], [0], [1], [0, 0, 1, 1], [], []>} : vector<16x8xbf16>, vector<8x16xbf16>, vector<16x16xf32> -> vector<16x16xf32>
    %cst_41 = arith.constant 0.353553385 : f32
    %110 = vector.broadcast %cst_41 : f32 to vector<16x16xf32>
    %111 = arith.mulf %109, %110 : vector<16x16xf32>
    %112 = arith.addf %111, %2 : vector<16x16xf32>
    %cst_42 = arith.constant dense<0xFF800000> : vector<16xf32>
    %113 = vector.multi_reduction <maximumf>, %112, %cst_42 [1] : vector<16x16xf32> to vector<16xf32>
    %114 = vector.shape_cast %113 : vector<16xf32> to vector<16x1xf32>
    %115 = vector.broadcast %114 : vector<16x1xf32> to vector<16x16xf32>
    %116 = arith.subf %112, %115 : vector<16x16xf32>
    %117 = math.exp %116 : vector<16x16xf32>
    %cst_43 = arith.constant dense<0.000000e+00> : vector<16xf32>
    %118 = vector.multi_reduction <add>, %117, %cst_43 [1] : vector<16x16xf32> to vector<16xf32>
    %119 = vector.shape_cast %118 : vector<16xf32> to vector<16x1xf32>
    %120 = tpu.reciprocal %119 {approx = true} : vector<16x1xf32> -> vector<16x1xf32>
    %121 = vector.broadcast %120 : vector<16x1xf32> to vector<16x16xf32>
    %122 = arith.mulf %117, %121 : vector<16x16xf32>
    %123 = arith.truncf %122 : vector<16x16xf32> to vector<16x16xbf16>
    %124 = vector.extract_strided_slice %19 {offsets = [0, 24], sizes = [16, 8], strides = [1, 1]} : vector<16x32xf32> to vector<16x8xf32>
    %125 = arith.truncf %124 : vector<16x8xf32> to vector<16x8xbf16>
    %cst_44 = arith.constant dense<0.000000e+00> : vector<16x8xf32>
    %126 = tpu.matmul %123, %125, %cst_44 {dimension_numbers = #tpu.dot_dimension_numbers<[1], [0], [0], [1], [0, 0, 1, 1], [], []>} : vector<16x16xbf16>, vector<16x8xbf16>, vector<16x8xf32> -> vector<16x8xf32>
    %127 = arith.truncf %126 : vector<16x8xf32> to vector<16x8xbf16>
    %128 = vector.extract_strided_slice %20 {offsets = [24, 0], sizes = [8, 32], strides = [1, 1]} : vector<32x32xbf16> to vector<8x32xbf16>
    %cst_45 = arith.constant dense<0.000000e+00> : vector<16x32xf32>
    %129 = tpu.matmul %127, %128, %cst_45 {dimension_numbers = #tpu.dot_dimension_numbers<[1], [0], [0], [1], [0, 0, 1, 1], [], []>} : vector<16x8xbf16>, vector<8x32xbf16>, vector<16x32xf32> -> vector<16x32xf32>
    %130 = arith.addf %103, %129 : vector<16x32xf32>
    %131 = vector.broadcast %21 : vector<1x32xf32> to vector<16x32xf32>
    %132 = arith.addf %130, %131 : vector<16x32xf32>
    %133 = arith.addf %1, %132 : vector<16x32xf32>
    %134 = vector.extract_strided_slice %10 {offsets = [0, 0], sizes = [1, 32], strides = [1, 1]} : vector<6x32xf32> to vector<1x32xf32>
    %135 = vector.shape_cast %134 : vector<1x32xf32> to vector<32xf32>
    %136 = vector.extract_strided_slice %10 {offsets = [3, 0], sizes = [1, 32], strides = [1, 1]} : vector<6x32xf32> to vector<1x32xf32>
    %137 = vector.shape_cast %136 : vector<1x32xf32> to vector<32xf32>
    %cst_46 = arith.constant dense<0.000000e+00> : vector<16xf32>
    %138 = vector.multi_reduction <add>, %133, %cst_46 [1] : vector<16x32xf32> to vector<16xf32>
    %139 = vector.shape_cast %138 : vector<16xf32> to vector<16x1xf32>
    %cst_47 = arith.constant 3.200000e+01 : f32
    %140 = vector.broadcast %cst_47 : f32 to vector<16x1xf32>
    %141 = arith.divf %139, %140 : vector<16x1xf32>
    %142 = vector.broadcast %141 : vector<16x1xf32> to vector<16x32xf32>
    %143 = arith.subf %133, %142 : vector<16x32xf32>
    %144 = arith.mulf %143, %143 : vector<16x32xf32>
    %cst_48 = arith.constant dense<0.000000e+00> : vector<16xf32>
    %145 = vector.multi_reduction <add>, %144, %cst_48 [1] : vector<16x32xf32> to vector<16xf32>
    %146 = vector.shape_cast %145 : vector<16xf32> to vector<16x1xf32>
    %cst_49 = arith.constant 3.200000e+01 : f32
    %147 = vector.broadcast %cst_49 : f32 to vector<16x1xf32>
    %148 = arith.divf %146, %147 : vector<16x1xf32>
    %149 = vector.broadcast %141 : vector<16x1xf32> to vector<16x32xf32>
    %150 = arith.subf %133, %149 : vector<16x32xf32>
    %cst_50 = arith.constant 9.99999974E-6 : f32
    %151 = vector.broadcast %cst_50 : f32 to vector<16x1xf32>
    %152 = arith.addf %148, %151 : vector<16x1xf32>
    %153 = math.rsqrt %152 : vector<16x1xf32>
    %154 = vector.broadcast %153 : vector<16x1xf32> to vector<16x32xf32>
    %155 = arith.mulf %150, %154 : vector<16x32xf32>
    %156 = vector.shape_cast %135 : vector<32xf32> to vector<1x32xf32>
    %157 = vector.broadcast %156 : vector<1x32xf32> to vector<16x32xf32>
    %158 = arith.mulf %155, %157 : vector<16x32xf32>
    %159 = vector.shape_cast %137 : vector<32xf32> to vector<1x32xf32>
    %160 = vector.broadcast %159 : vector<1x32xf32> to vector<16x32xf32>
    %161 = arith.addf %158, %160 : vector<16x32xf32>
    %162 = arith.truncf %161 : vector<16x32xf32> to vector<16x32xbf16>
    %163 = vector.extract_strided_slice %5 {offsets = [0, 0], sizes = [32, 32], strides = [1, 1]} : vector<32x128xbf16> to vector<32x32xbf16>
    %cst_51 = arith.constant dense<0.000000e+00> : vector<16x32xf32>
    %164 = tpu.matmul %162, %163, %cst_51 {dimension_numbers = #tpu.dot_dimension_numbers<[1], [0], [0], [1], [0, 0, 1, 1], [], []>} : vector<16x32xbf16>, vector<32x32xbf16>, vector<16x32xf32> -> vector<16x32xf32>
    %165 = vector.extract_strided_slice %6 {offsets = [1, 0], sizes = [1, 32], strides = [1, 1]} : vector<2x128xf32> to vector<1x32xf32>
    %166 = vector.broadcast %165 : vector<1x32xf32> to vector<16x32xf32>
    %167 = arith.addf %164, %166 : vector<16x32xf32>
    %168 = arith.truncf %0 : vector<16x32xf32> to vector<16x32xbf16>
    %169 = vector.extract_strided_slice %5 {offsets = [0, 32], sizes = [32, 64], strides = [1, 1]} : vector<32x128xbf16> to vector<32x64xbf16>
    %cst_52 = arith.constant dense<0.000000e+00> : vector<16x64xf32>
    %170 = tpu.matmul %168, %169, %cst_52 {dimension_numbers = #tpu.dot_dimension_numbers<[1], [0], [0], [1], [0, 0, 1, 1], [], []>} : vector<16x32xbf16>, vector<32x64xbf16>, vector<16x64xf32> -> vector<16x64xf32>
    %171 = vector.extract_strided_slice %6 {offsets = [1, 32], sizes = [1, 64], strides = [1, 1]} : vector<2x128xf32> to vector<1x64xf32>
    %172 = vector.broadcast %171 : vector<1x64xf32> to vector<16x64xf32>
    %173 = arith.addf %170, %172 : vector<16x64xf32>
    %174 = vector.extract_strided_slice %173 {offsets = [0, 0], sizes = [16, 32], strides = [1, 1]} : vector<16x64xf32> to vector<16x32xf32>
    %175 = vector.extract_strided_slice %173 {offsets = [0, 32], sizes = [16, 32], strides = [1, 1]} : vector<16x64xf32> to vector<16x32xf32>
    %176 = vector.extract_strided_slice %5 {offsets = [0, 96], sizes = [32, 32], strides = [1, 1]} : vector<32x128xbf16> to vector<32x32xbf16>
    %177 = vector.extract_strided_slice %6 {offsets = [1, 96], sizes = [1, 32], strides = [1, 1]} : vector<2x128xf32> to vector<1x32xf32>
    %cst_53 = arith.constant 0.000000e+00 : f32
    %178 = vector.broadcast %cst_53 : f32 to vector<16x32xf32>
    %179 = vector.extract_strided_slice %167 {offsets = [0, 0], sizes = [16, 8], strides = [1, 1]} : vector<16x32xf32> to vector<16x8xf32>
    %180 = arith.truncf %179 : vector<16x8xf32> to vector<16x8xbf16>
    %181 = vector.extract_strided_slice %174 {offsets = [0, 0], sizes = [16, 8], strides = [1, 1]} : vector<16x32xf32> to vector<16x8xf32>
    %182 = tpu.transpose %181, [1, 0] : vector<16x8xf32> -> vector<8x16xf32>
    %183 = arith.truncf %182 : vector<8x16xf32> to vector<8x16xbf16>
    %cst_54 = arith.constant dense<0.000000e+00> : vector<16x16xf32>
    %184 = tpu.matmul %180, %183, %cst_54 {dimension_numbers = #tpu.dot_dimension_numbers<[1], [0], [0], [1], [0, 0, 1, 1], [], []>} : vector<16x8xbf16>, vector<8x16xbf16>, vector<16x16xf32> -> vector<16x16xf32>
    %cst_55 = arith.constant 0.353553385 : f32
    %185 = vector.broadcast %cst_55 : f32 to vector<16x16xf32>
    %186 = arith.mulf %184, %185 : vector<16x16xf32>
    %187 = arith.addf %186, %3 : vector<16x16xf32>
    %cst_56 = arith.constant dense<0xFF800000> : vector<16xf32>
    %188 = vector.multi_reduction <maximumf>, %187, %cst_56 [1] : vector<16x16xf32> to vector<16xf32>
    %189 = vector.shape_cast %188 : vector<16xf32> to vector<16x1xf32>
    %190 = vector.broadcast %189 : vector<16x1xf32> to vector<16x16xf32>
    %191 = arith.subf %187, %190 : vector<16x16xf32>
    %192 = math.exp %191 : vector<16x16xf32>
    %cst_57 = arith.constant dense<0.000000e+00> : vector<16xf32>
    %193 = vector.multi_reduction <add>, %192, %cst_57 [1] : vector<16x16xf32> to vector<16xf32>
    %194 = vector.shape_cast %193 : vector<16xf32> to vector<16x1xf32>
    %195 = tpu.reciprocal %194 {approx = true} : vector<16x1xf32> -> vector<16x1xf32>
    %196 = vector.broadcast %195 : vector<16x1xf32> to vector<16x16xf32>
    %197 = arith.mulf %192, %196 : vector<16x16xf32>
    %198 = arith.truncf %197 : vector<16x16xf32> to vector<16x16xbf16>
    %199 = vector.extract_strided_slice %175 {offsets = [0, 0], sizes = [16, 8], strides = [1, 1]} : vector<16x32xf32> to vector<16x8xf32>
    %200 = arith.truncf %199 : vector<16x8xf32> to vector<16x8xbf16>
    %cst_58 = arith.constant dense<0.000000e+00> : vector<16x8xf32>
    %201 = tpu.matmul %198, %200, %cst_58 {dimension_numbers = #tpu.dot_dimension_numbers<[1], [0], [0], [1], [0, 0, 1, 1], [], []>} : vector<16x16xbf16>, vector<16x8xbf16>, vector<16x8xf32> -> vector<16x8xf32>
    %202 = arith.truncf %201 : vector<16x8xf32> to vector<16x8xbf16>
    %203 = vector.extract_strided_slice %176 {offsets = [0, 0], sizes = [8, 32], strides = [1, 1]} : vector<32x32xbf16> to vector<8x32xbf16>
    %cst_59 = arith.constant dense<0.000000e+00> : vector<16x32xf32>
    %204 = tpu.matmul %202, %203, %cst_59 {dimension_numbers = #tpu.dot_dimension_numbers<[1], [0], [0], [1], [0, 0, 1, 1], [], []>} : vector<16x8xbf16>, vector<8x32xbf16>, vector<16x32xf32> -> vector<16x32xf32>
    %205 = arith.addf %178, %204 : vector<16x32xf32>
    %206 = vector.extract_strided_slice %167 {offsets = [0, 8], sizes = [16, 8], strides = [1, 1]} : vector<16x32xf32> to vector<16x8xf32>
    %207 = arith.truncf %206 : vector<16x8xf32> to vector<16x8xbf16>
    %208 = vector.extract_strided_slice %174 {offsets = [0, 8], sizes = [16, 8], strides = [1, 1]} : vector<16x32xf32> to vector<16x8xf32>
    %209 = tpu.transpose %208, [1, 0] : vector<16x8xf32> -> vector<8x16xf32>
    %210 = arith.truncf %209 : vector<8x16xf32> to vector<8x16xbf16>
    %cst_60 = arith.constant dense<0.000000e+00> : vector<16x16xf32>
    %211 = tpu.matmul %207, %210, %cst_60 {dimension_numbers = #tpu.dot_dimension_numbers<[1], [0], [0], [1], [0, 0, 1, 1], [], []>} : vector<16x8xbf16>, vector<8x16xbf16>, vector<16x16xf32> -> vector<16x16xf32>
    %cst_61 = arith.constant 0.353553385 : f32
    %212 = vector.broadcast %cst_61 : f32 to vector<16x16xf32>
    %213 = arith.mulf %211, %212 : vector<16x16xf32>
    %214 = arith.addf %213, %3 : vector<16x16xf32>
    %cst_62 = arith.constant dense<0xFF800000> : vector<16xf32>
    %215 = vector.multi_reduction <maximumf>, %214, %cst_62 [1] : vector<16x16xf32> to vector<16xf32>
    %216 = vector.shape_cast %215 : vector<16xf32> to vector<16x1xf32>
    %217 = vector.broadcast %216 : vector<16x1xf32> to vector<16x16xf32>
    %218 = arith.subf %214, %217 : vector<16x16xf32>
    %219 = math.exp %218 : vector<16x16xf32>
    %cst_63 = arith.constant dense<0.000000e+00> : vector<16xf32>
    %220 = vector.multi_reduction <add>, %219, %cst_63 [1] : vector<16x16xf32> to vector<16xf32>
    %221 = vector.shape_cast %220 : vector<16xf32> to vector<16x1xf32>
    %222 = tpu.reciprocal %221 {approx = true} : vector<16x1xf32> -> vector<16x1xf32>
    %223 = vector.broadcast %222 : vector<16x1xf32> to vector<16x16xf32>
    %224 = arith.mulf %219, %223 : vector<16x16xf32>
    %225 = arith.truncf %224 : vector<16x16xf32> to vector<16x16xbf16>
    %226 = vector.extract_strided_slice %175 {offsets = [0, 8], sizes = [16, 8], strides = [1, 1]} : vector<16x32xf32> to vector<16x8xf32>
    %227 = arith.truncf %226 : vector<16x8xf32> to vector<16x8xbf16>
    %cst_64 = arith.constant dense<0.000000e+00> : vector<16x8xf32>
    %228 = tpu.matmul %225, %227, %cst_64 {dimension_numbers = #tpu.dot_dimension_numbers<[1], [0], [0], [1], [0, 0, 1, 1], [], []>} : vector<16x16xbf16>, vector<16x8xbf16>, vector<16x8xf32> -> vector<16x8xf32>
    %229 = arith.truncf %228 : vector<16x8xf32> to vector<16x8xbf16>
    %230 = vector.extract_strided_slice %176 {offsets = [8, 0], sizes = [8, 32], strides = [1, 1]} : vector<32x32xbf16> to vector<8x32xbf16>
    %cst_65 = arith.constant dense<0.000000e+00> : vector<16x32xf32>
    %231 = tpu.matmul %229, %230, %cst_65 {dimension_numbers = #tpu.dot_dimension_numbers<[1], [0], [0], [1], [0, 0, 1, 1], [], []>} : vector<16x8xbf16>, vector<8x32xbf16>, vector<16x32xf32> -> vector<16x32xf32>
    %232 = arith.addf %205, %231 : vector<16x32xf32>
    %233 = vector.extract_strided_slice %167 {offsets = [0, 16], sizes = [16, 8], strides = [1, 1]} : vector<16x32xf32> to vector<16x8xf32>
    %234 = arith.truncf %233 : vector<16x8xf32> to vector<16x8xbf16>
    %235 = vector.extract_strided_slice %174 {offsets = [0, 16], sizes = [16, 8], strides = [1, 1]} : vector<16x32xf32> to vector<16x8xf32>
    %236 = tpu.transpose %235, [1, 0] : vector<16x8xf32> -> vector<8x16xf32>
    %237 = arith.truncf %236 : vector<8x16xf32> to vector<8x16xbf16>
    %cst_66 = arith.constant dense<0.000000e+00> : vector<16x16xf32>
    %238 = tpu.matmul %234, %237, %cst_66 {dimension_numbers = #tpu.dot_dimension_numbers<[1], [0], [0], [1], [0, 0, 1, 1], [], []>} : vector<16x8xbf16>, vector<8x16xbf16>, vector<16x16xf32> -> vector<16x16xf32>
    %cst_67 = arith.constant 0.353553385 : f32
    %239 = vector.broadcast %cst_67 : f32 to vector<16x16xf32>
    %240 = arith.mulf %238, %239 : vector<16x16xf32>
    %241 = arith.addf %240, %3 : vector<16x16xf32>
    %cst_68 = arith.constant dense<0xFF800000> : vector<16xf32>
    %242 = vector.multi_reduction <maximumf>, %241, %cst_68 [1] : vector<16x16xf32> to vector<16xf32>
    %243 = vector.shape_cast %242 : vector<16xf32> to vector<16x1xf32>
    %244 = vector.broadcast %243 : vector<16x1xf32> to vector<16x16xf32>
    %245 = arith.subf %241, %244 : vector<16x16xf32>
    %246 = math.exp %245 : vector<16x16xf32>
    %cst_69 = arith.constant dense<0.000000e+00> : vector<16xf32>
    %247 = vector.multi_reduction <add>, %246, %cst_69 [1] : vector<16x16xf32> to vector<16xf32>
    %248 = vector.shape_cast %247 : vector<16xf32> to vector<16x1xf32>
    %249 = tpu.reciprocal %248 {approx = true} : vector<16x1xf32> -> vector<16x1xf32>
    %250 = vector.broadcast %249 : vector<16x1xf32> to vector<16x16xf32>
    %251 = arith.mulf %246, %250 : vector<16x16xf32>
    %252 = arith.truncf %251 : vector<16x16xf32> to vector<16x16xbf16>
    %253 = vector.extract_strided_slice %175 {offsets = [0, 16], sizes = [16, 8], strides = [1, 1]} : vector<16x32xf32> to vector<16x8xf32>
    %254 = arith.truncf %253 : vector<16x8xf32> to vector<16x8xbf16>
    %cst_70 = arith.constant dense<0.000000e+00> : vector<16x8xf32>
    %255 = tpu.matmul %252, %254, %cst_70 {dimension_numbers = #tpu.dot_dimension_numbers<[1], [0], [0], [1], [0, 0, 1, 1], [], []>} : vector<16x16xbf16>, vector<16x8xbf16>, vector<16x8xf32> -> vector<16x8xf32>
    %256 = arith.truncf %255 : vector<16x8xf32> to vector<16x8xbf16>
    %257 = vector.extract_strided_slice %176 {offsets = [16, 0], sizes = [8, 32], strides = [1, 1]} : vector<32x32xbf16> to vector<8x32xbf16>
    %cst_71 = arith.constant dense<0.000000e+00> : vector<16x32xf32>
    %258 = tpu.matmul %256, %257, %cst_71 {dimension_numbers = #tpu.dot_dimension_numbers<[1], [0], [0], [1], [0, 0, 1, 1], [], []>} : vector<16x8xbf16>, vector<8x32xbf16>, vector<16x32xf32> -> vector<16x32xf32>
    %259 = arith.addf %232, %258 : vector<16x32xf32>
    %260 = vector.extract_strided_slice %167 {offsets = [0, 24], sizes = [16, 8], strides = [1, 1]} : vector<16x32xf32> to vector<16x8xf32>
    %261 = arith.truncf %260 : vector<16x8xf32> to vector<16x8xbf16>
    %262 = vector.extract_strided_slice %174 {offsets = [0, 24], sizes = [16, 8], strides = [1, 1]} : vector<16x32xf32> to vector<16x8xf32>
    %263 = tpu.transpose %262, [1, 0] : vector<16x8xf32> -> vector<8x16xf32>
    %264 = arith.truncf %263 : vector<8x16xf32> to vector<8x16xbf16>
    %cst_72 = arith.constant dense<0.000000e+00> : vector<16x16xf32>
    %265 = tpu.matmul %261, %264, %cst_72 {dimension_numbers = #tpu.dot_dimension_numbers<[1], [0], [0], [1], [0, 0, 1, 1], [], []>} : vector<16x8xbf16>, vector<8x16xbf16>, vector<16x16xf32> -> vector<16x16xf32>
    %cst_73 = arith.constant 0.353553385 : f32
    %266 = vector.broadcast %cst_73 : f32 to vector<16x16xf32>
    %267 = arith.mulf %265, %266 : vector<16x16xf32>
    %268 = arith.addf %267, %3 : vector<16x16xf32>
    %cst_74 = arith.constant dense<0xFF800000> : vector<16xf32>
    %269 = vector.multi_reduction <maximumf>, %268, %cst_74 [1] : vector<16x16xf32> to vector<16xf32>
    %270 = vector.shape_cast %269 : vector<16xf32> to vector<16x1xf32>
    %271 = vector.broadcast %270 : vector<16x1xf32> to vector<16x16xf32>
    %272 = arith.subf %268, %271 : vector<16x16xf32>
    %273 = math.exp %272 : vector<16x16xf32>
    %cst_75 = arith.constant dense<0.000000e+00> : vector<16xf32>
    %274 = vector.multi_reduction <add>, %273, %cst_75 [1] : vector<16x16xf32> to vector<16xf32>
    %275 = vector.shape_cast %274 : vector<16xf32> to vector<16x1xf32>
    %276 = tpu.reciprocal %275 {approx = true} : vector<16x1xf32> -> vector<16x1xf32>
    %277 = vector.broadcast %276 : vector<16x1xf32> to vector<16x16xf32>
    %278 = arith.mulf %273, %277 : vector<16x16xf32>
    %279 = arith.truncf %278 : vector<16x16xf32> to vector<16x16xbf16>
    %280 = vector.extract_strided_slice %175 {offsets = [0, 24], sizes = [16, 8], strides = [1, 1]} : vector<16x32xf32> to vector<16x8xf32>
    %281 = arith.truncf %280 : vector<16x8xf32> to vector<16x8xbf16>
    %cst_76 = arith.constant dense<0.000000e+00> : vector<16x8xf32>
    %282 = tpu.matmul %279, %281, %cst_76 {dimension_numbers = #tpu.dot_dimension_numbers<[1], [0], [0], [1], [0, 0, 1, 1], [], []>} : vector<16x16xbf16>, vector<16x8xbf16>, vector<16x8xf32> -> vector<16x8xf32>
    %283 = arith.truncf %282 : vector<16x8xf32> to vector<16x8xbf16>
    %284 = vector.extract_strided_slice %176 {offsets = [24, 0], sizes = [8, 32], strides = [1, 1]} : vector<32x32xbf16> to vector<8x32xbf16>
    %cst_77 = arith.constant dense<0.000000e+00> : vector<16x32xf32>
    %285 = tpu.matmul %283, %284, %cst_77 {dimension_numbers = #tpu.dot_dimension_numbers<[1], [0], [0], [1], [0, 0, 1, 1], [], []>} : vector<16x8xbf16>, vector<8x32xbf16>, vector<16x32xf32> -> vector<16x32xf32>
    %286 = arith.addf %259, %285 : vector<16x32xf32>
    %287 = vector.broadcast %177 : vector<1x32xf32> to vector<16x32xf32>
    %288 = arith.addf %286, %287 : vector<16x32xf32>
    %289 = arith.addf %161, %288 : vector<16x32xf32>
    %290 = vector.extract_strided_slice %10 {offsets = [1, 0], sizes = [1, 32], strides = [1, 1]} : vector<6x32xf32> to vector<1x32xf32>
    %291 = vector.shape_cast %290 : vector<1x32xf32> to vector<32xf32>
    %292 = vector.extract_strided_slice %10 {offsets = [4, 0], sizes = [1, 32], strides = [1, 1]} : vector<6x32xf32> to vector<1x32xf32>
    %293 = vector.shape_cast %292 : vector<1x32xf32> to vector<32xf32>
    %cst_78 = arith.constant dense<0.000000e+00> : vector<16xf32>
    %294 = vector.multi_reduction <add>, %289, %cst_78 [1] : vector<16x32xf32> to vector<16xf32>
    %295 = vector.shape_cast %294 : vector<16xf32> to vector<16x1xf32>
    %cst_79 = arith.constant 3.200000e+01 : f32
    %296 = vector.broadcast %cst_79 : f32 to vector<16x1xf32>
    %297 = arith.divf %295, %296 : vector<16x1xf32>
    %298 = vector.broadcast %297 : vector<16x1xf32> to vector<16x32xf32>
    %299 = arith.subf %289, %298 : vector<16x32xf32>
    %300 = arith.mulf %299, %299 : vector<16x32xf32>
    %cst_80 = arith.constant dense<0.000000e+00> : vector<16xf32>
    %301 = vector.multi_reduction <add>, %300, %cst_80 [1] : vector<16x32xf32> to vector<16xf32>
    %302 = vector.shape_cast %301 : vector<16xf32> to vector<16x1xf32>
    %cst_81 = arith.constant 3.200000e+01 : f32
    %303 = vector.broadcast %cst_81 : f32 to vector<16x1xf32>
    %304 = arith.divf %302, %303 : vector<16x1xf32>
    %305 = vector.broadcast %297 : vector<16x1xf32> to vector<16x32xf32>
    %306 = arith.subf %289, %305 : vector<16x32xf32>
    %cst_82 = arith.constant 9.99999974E-6 : f32
    %307 = vector.broadcast %cst_82 : f32 to vector<16x1xf32>
    %308 = arith.addf %304, %307 : vector<16x1xf32>
    %309 = math.rsqrt %308 : vector<16x1xf32>
    %310 = vector.broadcast %309 : vector<16x1xf32> to vector<16x32xf32>
    %311 = arith.mulf %306, %310 : vector<16x32xf32>
    %312 = vector.shape_cast %291 : vector<32xf32> to vector<1x32xf32>
    %313 = vector.broadcast %312 : vector<1x32xf32> to vector<16x32xf32>
    %314 = arith.mulf %311, %313 : vector<16x32xf32>
    %315 = vector.shape_cast %293 : vector<32xf32> to vector<1x32xf32>
    %316 = vector.broadcast %315 : vector<1x32xf32> to vector<16x32xf32>
    %317 = arith.addf %314, %316 : vector<16x32xf32>
    %318 = arith.truncf %317 : vector<16x32xf32> to vector<16x32xbf16>
    %cst_83 = arith.constant dense<0.000000e+00> : vector<16x64xf32>
    %319 = tpu.matmul %318, %7, %cst_83 {dimension_numbers = #tpu.dot_dimension_numbers<[1], [0], [0], [1], [0, 0, 1, 1], [], []>} : vector<16x32xbf16>, vector<32x64xbf16>, vector<16x64xf32> -> vector<16x64xf32>
    %320 = vector.extract_strided_slice %9 {offsets = [0, 0], sizes = [1, 64], strides = [1, 1]} : vector<1x96xf32> to vector<1x64xf32>
    %321 = vector.broadcast %320 : vector<1x64xf32> to vector<16x64xf32>
    %322 = arith.addf %319, %321 : vector<16x64xf32>
    %cst_84 = arith.constant 0.000000e+00 : f32
    %323 = vector.broadcast %cst_84 : f32 to vector<16x64xf32>
    %324 = arith.maximumf %322, %323 : vector<16x64xf32>
    %325 = arith.truncf %324 : vector<16x64xf32> to vector<16x64xbf16>
    %cst_85 = arith.constant dense<0.000000e+00> : vector<16x32xf32>
    %326 = tpu.matmul %325, %8, %cst_85 {dimension_numbers = #tpu.dot_dimension_numbers<[1], [0], [0], [1], [0, 0, 1, 1], [], []>} : vector<16x64xbf16>, vector<64x32xbf16>, vector<16x32xf32> -> vector<16x32xf32>
    %327 = vector.extract_strided_slice %9 {offsets = [0, 64], sizes = [1, 32], strides = [1, 1]} : vector<1x96xf32> to vector<1x32xf32>
    %328 = vector.broadcast %327 : vector<1x32xf32> to vector<16x32xf32>
    %329 = arith.addf %326, %328 : vector<16x32xf32>
    %330 = arith.addf %317, %329 : vector<16x32xf32>
    %331 = vector.extract_strided_slice %10 {offsets = [2, 0], sizes = [1, 32], strides = [1, 1]} : vector<6x32xf32> to vector<1x32xf32>
    %332 = vector.shape_cast %331 : vector<1x32xf32> to vector<32xf32>
    %333 = vector.extract_strided_slice %10 {offsets = [5, 0], sizes = [1, 32], strides = [1, 1]} : vector<6x32xf32> to vector<1x32xf32>
    %334 = vector.shape_cast %333 : vector<1x32xf32> to vector<32xf32>
    %cst_86 = arith.constant dense<0.000000e+00> : vector<16xf32>
    %335 = vector.multi_reduction <add>, %330, %cst_86 [1] : vector<16x32xf32> to vector<16xf32>
    %336 = vector.shape_cast %335 : vector<16xf32> to vector<16x1xf32>
    %cst_87 = arith.constant 3.200000e+01 : f32
    %337 = vector.broadcast %cst_87 : f32 to vector<16x1xf32>
    %338 = arith.divf %336, %337 : vector<16x1xf32>
    %339 = vector.broadcast %338 : vector<16x1xf32> to vector<16x32xf32>
    %340 = arith.subf %330, %339 : vector<16x32xf32>
    %341 = arith.mulf %340, %340 : vector<16x32xf32>
    %cst_88 = arith.constant dense<0.000000e+00> : vector<16xf32>
    %342 = vector.multi_reduction <add>, %341, %cst_88 [1] : vector<16x32xf32> to vector<16xf32>
    %343 = vector.shape_cast %342 : vector<16xf32> to vector<16x1xf32>
    %cst_89 = arith.constant 3.200000e+01 : f32
    %344 = vector.broadcast %cst_89 : f32 to vector<16x1xf32>
    %345 = arith.divf %343, %344 : vector<16x1xf32>
    %346 = vector.broadcast %338 : vector<16x1xf32> to vector<16x32xf32>
    %347 = arith.subf %330, %346 : vector<16x32xf32>
    %cst_90 = arith.constant 9.99999974E-6 : f32
    %348 = vector.broadcast %cst_90 : f32 to vector<16x1xf32>
    %349 = arith.addf %345, %348 : vector<16x1xf32>
    %350 = math.rsqrt %349 : vector<16x1xf32>
    %351 = vector.broadcast %350 : vector<16x1xf32> to vector<16x32xf32>
    %352 = arith.mulf %347, %351 : vector<16x32xf32>
    %353 = vector.shape_cast %332 : vector<32xf32> to vector<1x32xf32>
    %354 = vector.broadcast %353 : vector<1x32xf32> to vector<16x32xf32>
    %355 = arith.mulf %352, %354 : vector<16x32xf32>
    %356 = vector.shape_cast %334 : vector<32xf32> to vector<1x32xf32>
    %357 = vector.broadcast %356 : vector<1x32xf32> to vector<16x32xf32>
    %358 = arith.addf %355, %357 : vector<16x32xf32>
    %c0_91 = arith.constant 0 : index
    %c0_92 = arith.constant 0 : index
    %359 = vector.load %arg12[%c0_91, %c0_92] : memref<16x32xf32, #tpu.memory_space<vmem>>, vector<16x32xf32>
    tpu.vector_store %arg12[%c0_91, %c0_92], %358 {strides = array<i32>} : memref<16x32xf32, #tpu.memory_space<vmem>>, vector<16x32xf32>,
    return
  }
  func.func @transform_0(%arg0: i32) -> (i32, i32) {
    %c0_i32 = arith.constant 0 : i32
    %c0_i32_0 = arith.constant 0 : i32
    %c0_i32_1 = arith.constant 0 : i32
    return %c0_i32, %c0_i32_0 : i32, i32
  }
  func.func @transform_1(%arg0: i32) -> (i32, i32) {
    %c0_i32 = arith.constant 0 : i32
    %c0_i32_0 = arith.constant 0 : i32
    %c0_i32_1 = arith.constant 0 : i32
    return %c0_i32, %c0_i32_0 : i32, i32
  }
  func.func @transform_2(%arg0: i32) -> (i32, i32) {
    %c0_i32 = arith.constant 0 : i32
    %c0_i32_0 = arith.constant 0 : i32
    %c0_i32_1 = arith.constant 0 : i32
    return %c0_i32, %c0_i32_0 : i32, i32
  }
  func.func @transform_3(%arg0: i32) -> (i32, i32) {
    %c0_i32 = arith.constant 0 : i32
    %c0_i32_0 = arith.constant 0 : i32
    %c0_i32_1 = arith.constant 0 : i32
    return %c0_i32, %c0_i32_0 : i32, i32
  }
  func.func @transform_4(%arg0: i32) -> (i32, i32) {
    %c0_i32 = arith.constant 0 : i32
    %c0_i32_0 = arith.constant 0 : i32
    %c0_i32_1 = arith.constant 0 : i32
    return %c0_i32, %c0_i32_0 : i32, i32
  }
  func.func @transform_5(%arg0: i32) -> (i32, i32) {
    %c0_i32 = arith.constant 0 : i32
    %c0_i32_0 = arith.constant 0 : i32
    %c0_i32_1 = arith.constant 0 : i32
    return %c0_i32, %c0_i32_0 : i32, i32
  }
  func.func @transform_6(%arg0: i32) -> (i32, i32) {
    %c0_i32 = arith.constant 0 : i32
    %c0_i32_0 = arith.constant 0 : i32
    %c0_i32_1 = arith.constant 0 : i32
    return %c0_i32, %c0_i32_0 : i32, i32
  }
  func.func @transform_7(%arg0: i32) -> (i32, i32) {
    %c0_i32 = arith.constant 0 : i32
    %c0_i32_0 = arith.constant 0 : i32
    %c0_i32_1 = arith.constant 0 : i32
    return %c0_i32, %c0_i32_0 : i32, i32
  }
  func.func @transform_8(%arg0: i32) -> (i32, i32) {
    %c0_i32 = arith.constant 0 : i32
    %c0_i32_0 = arith.constant 0 : i32
    %c0_i32_1 = arith.constant 0 : i32
    return %c0_i32, %c0_i32_0 : i32, i32
  }
  func.func @transform_9(%arg0: i32) -> (i32, i32) {
    %c0_i32 = arith.constant 0 : i32
    %c0_i32_0 = arith.constant 0 : i32
    %c0_i32_1 = arith.constant 0 : i32
    return %c0_i32, %c0_i32_0 : i32, i32
  }
  func.func @transform_10(%arg0: i32) -> (i32, i32) {
    %c0_i32 = arith.constant 0 : i32
    %c0_i32_0 = arith.constant 0 : i32
    %c0_i32_1 = arith.constant 0 : i32
    return %c0_i32, %c0_i32_0 : i32, i32
  }
  func.func @transform_11(%arg0: i32) -> (i32, i32) {
    %c0_i32 = arith.constant 0 : i32
    %c0_i32_0 = arith.constant 0 : i32
    %c0_i32_1 = arith.constant 0 : i32
    return %c0_i32, %c0_i32_0 : i32, i32
  }
}

</mosaic_0001>

<llo_original>
// kernel: tpu_custom_call.1
$region0: #{tpu_custom_call.1}
  #allocation0 [shape = 'u32[]', space=smem, size = 0x4, offset = 0x4, fixed_abs, tag = 'smem constant byte address 0x4 - core index']
  #allocation1 [shape = 'u32[144,128]{1,0:T(1,128)}', space=vmem, size = 0x12000, scoped, tag = 'internal scratch']
  %s0 = inlined_call_operand.vmem [shape: f32[16,32], index: 0, kind: input, shape index: {}]
  %s1 = inlined_call_operand.vmem [shape: f32[16,32], index: 1, kind: input, shape index: {}]
  %s2 = inlined_call_operand.vmem [shape: f32[16,16], index: 2, kind: input, shape index: {}]
  %s3 = inlined_call_operand.hbm [shape: f32[16,16], index: 3, kind: input, shape index: {}]
  %s4 = inlined_call_operand.hbm [shape: bf16[32,128], index: 4, kind: input, shape index: {}]
  %s5 = inlined_call_operand.hbm [shape: bf16[32,128], index: 5, kind: input, shape index: {}]
  %s6 = inlined_call_operand.vmem [shape: f32[2,128], index: 6, kind: input, shape index: {}]
  %s7 = inlined_call_operand.hbm [shape: bf16[32,64], index: 7, kind: input, shape index: {}]
  %s8 = inlined_call_operand.vmem [shape: bf16[64,32], index: 8, kind: input, shape index: {}]
  %s9 = inlined_call_operand.vmem [shape: f32[1,96], index: 9, kind: input, shape index: {}]
  %s10 = inlined_call_operand.vmem [shape: f32[6,32], index: 10, kind: input, shape index: {}]
  %s11 = inlined_call_operand.hbm [shape: f32[16,32], index: 11, kind: output, shape index: {}]
  %s12 = sld [smem:[#allocation0]]
  $region70: #{tpu_custom_call.1} parent=0
    _
  %s14 = ssub.s32 1, %s12
  %s15 = scalar_select 0, %s14, %s12
  $region1: #{tpu_custom_call.1} parent=0
    #allocation2 [shape = 'u8[8192]{0}', space=vmem, size = 0x2000, scoped, tag = 'input window, operand 3, single buffered']
    #allocation3 [shape = 's32[1]{0}', space=sflag, size = 0x4, scoped, tag = 'scoped memory for tpu_custom_call.1']
    #allocation4 [shape = 's32[1]{0}', space=sflag, size = 0x4, scoped, tag = 'scoped memory for tpu_custom_call.1']
    #allocation5 [shape = 'u8[8192]{0}', space=vmem, size = 0x2000, scoped, tag = 'input window, operand 4, single buffered']
    #allocation6 [shape = 's32[1]{0}', space=sflag, size = 0x4, scoped, tag = 'scoped memory for tpu_custom_call.1']
    #allocation7 [shape = 'u8[8192]{0}', space=vmem, size = 0x2000, scoped, tag = 'input window, operand 5, single buffered']
    #allocation8 [shape = 'u8[8192]{0}', space=vmem, size = 0x2000, scoped, tag = 'input window, operand 7, single buffered']
    #allocation9 [shape = 's32[1]{0}', space=sflag, size = 0x4, scoped, tag = 'scoped memory for tpu_custom_call.1']
    #allocation10 [shape = 'u8[8192]{0}', space=vmem, size = 0x2000, scoped, tag = 'output window, operand 0, single buffered']
    %16 = vsyncpa [#allocation3], 0
    %17 = vsyncpa [#allocation6], 0
    %18 = vsyncpa [#allocation9], 0
    %19 = vsyncpa [#allocation4], 0
    // Predicated region
    $region2: #{tpu_custom_call.1} parent=1 // pred_check
      _
    $region3: #{tpu_custom_call.1} parent=1 // pred_check_branch
      %21 = sbr.rel (0) target = $region5
    $region4: #{tpu_custom_call.1} parent=1 // pred_region
      _
    $region5: #{tpu_custom_call.1} parent=1 // pred_fallthru
      _
    // Predicated region
    $region6: #{tpu_custom_call.1} parent=1 // pred_check
      _
    $region7: #{tpu_custom_call.1} parent=1 // pred_check_branch
      %23 = sbr.rel (0) target = $region9
    $region8: #{tpu_custom_call.1} parent=1 // pred_region
      _
    $region9: #{tpu_custom_call.1} parent=1 // pred_fallthru
      _
    // Predicated region
    $region10: #{tpu_custom_call.1} parent=1 // pred_check
      _
    $region11: #{tpu_custom_call.1} parent=1 // pred_check_branch
      %25 = sbr.rel (0) target = $region13
    $region12: #{tpu_custom_call.1} parent=1 // pred_region
      _
    $region13: #{tpu_custom_call.1} parent=1 // pred_fallthru
      _
    // Predicated region
    $region14: #{tpu_custom_call.1} parent=1 // pred_check
      _
    $region15: #{tpu_custom_call.1} parent=1 // pred_check_branch
      %27 = sbr.rel (0) target = $region17
    $region16: #{tpu_custom_call.1} parent=1 // pred_region
      %s29 = ssub.s32 256, 256
      %30 = vsyncadd [#allocation3], %s29
      %s31 = sshll.u32 [#allocation2], 4
      %s32 = int_to_ptr.vmem [resolvable:$true] %s31
      %37 = dma.hbm_to_vmem [thread:$0]  %s3, 256, %s32, [#allocation3], 128, 128, 8
    $region17: #{tpu_custom_call.1} parent=1 // pred_fallthru
      _
    // Predicated region
    $region18: #{tpu_custom_call.1} parent=1 // pred_check
      _
    $region19: #{tpu_custom_call.1} parent=1 // pred_check_branch
      %39 = sbr.rel (0) target = $region21
    $region20: #{tpu_custom_call.1} parent=1 // pred_region
      %s41 = ssub.s32 256, 256
      %42 = vsyncadd [#allocation6], %s41
      %s43 = sshll.u32 [#allocation5], 4
      %s44 = int_to_ptr.vmem [resolvable:$true] %s43
      %49 = dma.hbm_to_vmem [thread:$0]  %s4, 256, %s44, [#allocation6], 64, 64, 4
    $region21: #{tpu_custom_call.1} parent=1 // pred_fallthru
      _
    // Predicated region
    $region22: #{tpu_custom_call.1} parent=1 // pred_check
      _
    $region23: #{tpu_custom_call.1} parent=1 // pred_check_branch
      %51 = sbr.rel (0) target = $region25
    $region24: #{tpu_custom_call.1} parent=1 // pred_region
      %s53 = ssub.s32 256, 256
      %54 = vsyncadd [#allocation6], %s53
      %s55 = sshll.u32 [#allocation7], 4
      %s56 = int_to_ptr.vmem [resolvable:$true] %s55
      %61 = dma.hbm_to_vmem [thread:$0]  %s5, 256, %s56, [#allocation6], 64, 64, 4
    $region25: #{tpu_custom_call.1} parent=1 // pred_fallthru
      _
    // Predicated region
    $region26: #{tpu_custom_call.1} parent=1 // pred_check
      _
    $region27: #{tpu_custom_call.1} parent=1 // pred_check_branch
      %63 = sbr.rel (0) target = $region29
    $region28: #{tpu_custom_call.1} parent=1 // pred_region
      _
    $region29: #{tpu_custom_call.1} parent=1 // pred_fallthru
      _
    // Predicated region
    $region30: #{tpu_custom_call.1} parent=1 // pred_check
      _
    $region31: #{tpu_custom_call.1} parent=1 // pred_check_branch
      %65 = sbr.rel (0) target = $region33
    $region32: #{tpu_custom_call.1} parent=1 // pred_region
      %s67 = ssub.s32 256, 256
      %68 = vsyncadd [#allocation9], %s67
      %s69 = sshll.u32 [#allocation8], 4
      %s70 = int_to_ptr.vmem [resolvable:$true] %s69
      %75 = dma.hbm_to_vmem [thread:$0]  %s7, 256, %s70, [#allocation9], 64, 64, 4
    $region33: #{tpu_custom_call.1} parent=1 // pred_fallthru
      _
    // Predicated region
    $region34: #{tpu_custom_call.1} parent=1 // pred_check
      _
    $region35: #{tpu_custom_call.1} parent=1 // pred_check_branch
      %77 = sbr.rel (0) target = $region37
    $region36: #{tpu_custom_call.1} parent=1 // pred_region
      _
    $region37: #{tpu_custom_call.1} parent=1 // pred_fallthru
      _
    // Predicated region
    $region38: #{tpu_custom_call.1} parent=1 // pred_check
      _
    $region39: #{tpu_custom_call.1} parent=1 // pred_check_branch
      %79 = sbr.rel (0) target = $region41
    $region40: #{tpu_custom_call.1} parent=1 // pred_region
      _
    $region41: #{tpu_custom_call.1} parent=1 // pred_fallthru
      _
    // Predicated region
    $region42: #{tpu_custom_call.1} parent=1 // pred_check
      _
    $region43: #{tpu_custom_call.1} parent=1 // pred_check_branch
      %81 = sbr.rel (0) target = $region45
    $region44: #{tpu_custom_call.1} parent=1 // pred_region
      _
    $region45: #{tpu_custom_call.1} parent=1 // pred_fallthru
      _
    // Predicated region
    $region46: #{tpu_custom_call.1} parent=1 // pred_check
      _
    $region47: #{tpu_custom_call.1} parent=1 // pred_check_branch
      %83 = sbr.rel (0) target = $region49
    $region48: #{tpu_custom_call.1} parent=1 // pred_region
      %84 = dma.done [#allocation3], 256
    $region49: #{tpu_custom_call.1} parent=1 // pred_fallthru
      _
    // Predicated region
    $region50: #{tpu_custom_call.1} parent=1 // pred_check
      _
    $region51: #{tpu_custom_call.1} parent=1 // pred_check_branch
      %86 = sbr.rel (0) target = $region53
    $region52: #{tpu_custom_call.1} parent=1 // pred_region
      %87 = dma.done [#allocation6], 256
    $region53: #{tpu_custom_call.1} parent=1 // pred_fallthru
      _
    // Predicated region
    $region54: #{tpu_custom_call.1} parent=1 // pred_check
      _
    $region55: #{tpu_custom_call.1} parent=1 // pred_check_branch
      %89 = sbr.rel (0) target = $region57
    $region56: #{tpu_custom_call.1} parent=1 // pred_region
      %90 = dma.done [#allocation6], 256
    $region57: #{tpu_custom_call.1} parent=1 // pred_fallthru
      _
    // Predicated region
    $region58: #{tpu_custom_call.1} parent=1 // pred_check
      _
    $region59: #{tpu_custom_call.1} parent=1 // pred_check_branch
      %92 = sbr.rel (0) target = $region61
    $region60: #{tpu_custom_call.1} parent=1 // pred_region
      %93 = dma.done [#allocation9], 256
    $region61: #{tpu_custom_call.1} parent=1 // pred_fallthru
      _
    %v95 = vld [vmem:[%s0] sm:$0xff]
    %v96 = vld [vmem:[%s0 + $0x8] sm:$0xff]
    %v97 = vld [vmem:[%s1] sm:$0xff]
    %v98 = vld [vmem:[%s1 + $0x8] sm:$0xff]
    %v99 = vld [vmem:[%s2] sm:$0xff]
    %v100 = vld [vmem:[%s2 + $0x8] sm:$0xff]
    %v101 = vld [vmem:[#allocation2] sm:$0xff]
    %v102 = vld [vmem:[#allocation2 + $0x8] sm:$0xff]
    %v103 = vld [vmem:[#allocation5] sm:$0xf]
    %v104 = vld [vmem:[#allocation5 + $0x4] sm:$0xf]
    %v105 = vld [vmem:[#allocation5 + $0x8] sm:$0xf]
    %v106 = vld [vmem:[#allocation5 + $0xc] sm:$0xf]
    %v107 = vld [vmem:[#allocation7] sm:$0xf]
    %v108 = vld [vmem:[#allocation7 + $0x4] sm:$0xf]
    %v109 = vld [vmem:[#allocation7 + $0x8] sm:$0xf]
    %v110 = vld [vmem:[#allocation7 + $0xc] sm:$0xf]
    %v111 = vld [vmem:[%s6] sm:$0x3]
    %v112 = vld [vmem:[#allocation8] sm:$0xf]
    %v113 = vld [vmem:[#allocation8 + $0x4] sm:$0xf]
    %v114 = vld [vmem:[#allocation8 + $0x8] sm:$0xf]
    %v115 = vld [vmem:[#allocation8 + $0xc] sm:$0xf]
    %v116 = vld [vmem:[%s8] sm:$0xf]
    %v117 = vld [vmem:[%s8 + $0x4] sm:$0xf]
    %v118 = vld [vmem:[%s8 + $0x8] sm:$0xf]
    %v119 = vld [vmem:[%s8 + $0xc] sm:$0xf]
    %v120 = vld [vmem:[%s8 + $0x10] sm:$0xf]
    %v121 = vld [vmem:[%s8 + $0x14] sm:$0xf]
    %v122 = vld [vmem:[%s8 + $0x18] sm:$0xf]
    %v123 = vld [vmem:[%s8 + $0x1c] sm:$0xf]
    %v124 = vld [vmem:[%s9] sm:$0x1]
    %v125 = vld [vmem:[%s10] sm:$0x3f]
    %v126 = vpack.c.bf16 %v98, %v97
    %v127 = vlaneseq
    %v128 = vshrl.u32 %v127, 7
    %v129 = vsub.s32 0, %v128
    %v130 = vrot.slane %v111, %v129
    %v135 = vunpack.c.l.b16 %v103
    %v136 = vunpack.c.l.b16 %v104
    %v137 = vunpack.c.l.b16 %v105
    %v138 = vunpack.c.l.b16 %v106
    %v139 = vpack.c.b16 %v136, %v135
    %v140 = vpack.c.b16 %v138, %v137
    %vm143 = vcmask 261120
    %v145 = vsel %vm143, %v126, 0
    %147 = vmatprep.subr.bf16.mxu0 0
    %148 = vmatpush1.bf16.msra.mxu0 %v139
    %149 = vmatprep.subr.bf16.mxu0 0
    %150 = vmatpush1.bf16.msra.mxu0 %v140
    %151 = vmatprep.subr.bf16.mxu0 0
    %152 = vmatpush1.bf16.msra.mxu0 0
    %153 = vmatprep.subr.bf16.mxu0 0
    %154 = vmatpush1.bf16.msra.mxu0 0
    %155 = vmatprep.subr.bf16.mxu0 0
    %156 = vmatpush1.bf16.msra.mxu0 0
    %157 = vmatprep.subr.bf16.mxu0 0
    %158 = vmatpush1.bf16.msra.mxu0 0
    %159 = vmatprep.subr.bf16.mxu0 0
    %160 = vmatpush1.bf16.msra.mxu0 0
    %161 = vmatprep.subr.bf16.mxu0 0
    %162 = vmatpush1.bf16.msra.mxu0 0
    %163 = vmatprep.subr.bf16.mxu0 0
    %164 = vmatpush1.bf16.msra.mxu0 0
    %165 = vmatprep.subr.bf16.mxu0 0
    %166 = vmatpush1.bf16.msra.mxu0 0
    %167 = vmatprep.subr.bf16.mxu0 0
    %168 = vmatpush1.bf16.msra.mxu0 0
    %169 = vmatprep.subr.bf16.mxu0 0
    %170 = vmatpush1.bf16.msra.mxu0 0
    %171 = vmatprep.subr.bf16.mxu0 0
    %172 = vmatpush1.bf16.msra.mxu0 0
    %173 = vmatprep.subr.bf16.mxu0 0
    %174 = vmatpush1.bf16.msra.mxu0 0
    %175 = vmatprep.subr.bf16.mxu0 0
    %176 = vmatpush1.bf16.msra.mxu0 0
    %177 = vmatprep.subr.bf16.mxu0 0
    %178 = vmatpush1.bf16.msra.mxu0 0
    %179 = vmatprep.mubr.bf16.mxu0 0
    %180 = vmatmul.mubr.bf16.gmra.mrb[0].mxu0 %v145
    %v181 = vpop.f32.mrb[0].mxu0
    %v182 = vadd.f32 %v130, %v181
    %v183 = vpop.f32.mrb[0].mxu0
    %v184 = vpop.f32.mrb[0].mxu0
    %v185 = vadd.f32 %v130, %v184
    %v186 = vpop.f32.mrb[0].mxu0
    %187 = vdwg.mxu0
    %v188 = vpack.c.bf16 %v185, %v182
    %191 = vrot.lane.b32.xlu0 %v182, 96
    %v192 = vpop.permute.xlu0 %191
    %193 = vrot.lane.b32.xlu0 %v185, 96
    %v194 = vpop.permute.xlu0 %193
    %197 = vxpose.xlu0.b32.start [1/16] %v192, 128
    %198 = vxpose.xlu0.b32.cont [2/16] %v194, 128
    %199 = vxpose.xlu0.b32.cont [3/16] 0.0, 128
    %200 = vxpose.xlu0.b32.cont [4/16] 0.0, 128
    %201 = vxpose.xlu0.b32.cont [5/16] 0.0, 128
    %202 = vxpose.xlu0.b32.cont [6/16] 0.0, 128
    %203 = vxpose.xlu0.b32.cont [7/16] 0.0, 128
    %204 = vxpose.xlu0.b32.cont [8/16] 0.0, 128
    %205 = vxpose.xlu0.b32.cont [9/16] 0.0, 128
    %206 = vxpose.xlu0.b32.cont [10/16] 0.0, 128
    %207 = vxpose.xlu0.b32.cont [11/16] 0.0, 128
    %208 = vxpose.xlu0.b32.cont [12/16] 0.0, 128
    %209 = vxpose.xlu0.b32.cont [13/16] 0.0, 128
    %210 = vxpose.xlu0.b32.cont [14/16] 0.0, 128
    %211 = vxpose.xlu0.b32.cont [15/16] 0.0, 128
    %212 = vxpose.xlu0.b32.end [16/16] 0.0, 128
    %v213 = vpop.trf.xlu0
    %v214 = vpop.trf.xlu0
    %v215 = vpop.trf.xlu0
    %v216 = vpop.trf.xlu0
    %v217 = vpop.trf.xlu0
    %v218 = vpop.trf.xlu0
    %v219 = vpop.trf.xlu0
    %v220 = vpop.trf.xlu0
    %v221 = vpop.trf.xlu0
    %v222 = vpop.trf.xlu0
    %v223 = vpop.trf.xlu0
    %v224 = vpop.trf.xlu0
    %v225 = vpop.trf.xlu0
    %v226 = vpop.trf.xlu0
    %v227 = vpop.trf.xlu0
    %v228 = vpop.trf.xlu0
    %v229 = vpack.c.bf16 %v213, %v213
    %vm230 = vcmask 64512
    %v232 = vsel %vm230, %v188, 0
    %vm234 = vcmask 1043456
    %v236 = vsel %vm234, %v229, 0
    %238 = vmatprep.subr.bf16.mxu0 0
    %239 = vmatpush1.bf16.msra.mxu0 %v236
    %240 = vmatprep.subr.bf16.mxu0 0
    %241 = vmatpush1.bf16.msra.mxu0 0
    %242 = vmatprep.subr.bf16.mxu0 0
    %243 = vmatpush1.bf16.msra.mxu0 0
    %244 = vmatprep.subr.bf16.mxu0 0
    %245 = vmatpush1.bf16.msra.mxu0 0
    %246 = vmatprep.subr.bf16.mxu0 0
    %247 = vmatpush1.bf16.msra.mxu0 0
    %248 = vmatprep.subr.bf16.mxu0 0
    %249 = vmatpush1.bf16.msra.mxu0 0
    %250 = vmatprep.subr.bf16.mxu0 0
    %251 = vmatpush1.bf16.msra.mxu0 0
    %252 = vmatprep.subr.bf16.mxu0 0
    %253 = vmatpush1.bf16.msra.mxu0 0
    %254 = vmatprep.subr.bf16.mxu0 0
    %255 = vmatpush1.bf16.msra.mxu0 0
    %256 = vmatprep.subr.bf16.mxu0 0
    %257 = vmatpush1.bf16.msra.mxu0 0
    %258 = vmatprep.subr.bf16.mxu0 0
    %259 = vmatpush1.bf16.msra.mxu0 0
    %260 = vmatprep.subr.bf16.mxu0 0
    %261 = vmatpush1.bf16.msra.mxu0 0
    %262 = vmatprep.subr.bf16.mxu0 0
    %263 = vmatpush1.bf16.msra.mxu0 0
    %264 = vmatprep.subr.bf16.mxu0 0
    %265 = vmatpush1.bf16.msra.mxu0 0
    %266 = vmatprep.subr.bf16.mxu0 0
    %267 = vmatpush1.bf16.msra.mxu0 0
    %268 = vmatprep.subr.bf16.mxu0 0
    %269 = vmatpush1.bf16.msra.mxu0 0
    %270 = vmatprep.mubr.bf16.mxu0 0
    %271 = vmatmul.mubr.bf16.gmra.mrb[0].mxu0 %v232
    %v272 = vpop.f32.mrb[0].mxu0
    %v273 = vadd.f32 0.0, %v272
    %v274 = vpop.f32.mrb[0].mxu0
    %v275 = vpop.f32.mrb[0].mxu0
    %v276 = vadd.f32 0.0, %v275
    %v277 = vpop.f32.mrb[0].mxu0
    %278 = vdwg.mxu0
    %v279 = vmul.f32 %v273, 0.35355338
    %v280 = vmul.f32 %v276, 0.35355338
    %v281 = vadd.f32 %v279, %v99
    %v282 = vadd.f32 %v280, %v100
    %vm283 = vcmask 130048
    %v284 = vsel %vm283, %v281, -inf
    %285 = vmax.xlane.f32.xlu0 %v284
    %v286 = vpop.xlane.xlu0 %285
    %v287 = vsel %vm283, %v282, -inf
    %288 = vmax.xlane.f32.xlu0 %v287
    %v289 = vpop.xlane.xlu0 %288
    %v290 = vsub.f32 %v281, %v286
    %v291 = vsub.f32 %v282, %v289
    %v292 = vmul.f32 %v290, 1.442695
    %v293 = vpow.pop %v292
    %v294 = vmul.f32 %v291, 1.442695
    %v295 = vpow.pop %v294
    %v296 = vsel %vm283, %v293, 0.0
    %297 = vadd.xlane.f32.xlu0 %v296
    %v298 = vpop.xlane.xlu0 %297
    %v299 = vsel %vm283, %v295, 0.0
    %300 = vadd.xlane.f32.xlu0 %v299
    %v301 = vpop.xlane.xlu0 %300
    %v302 = vrcp.pop %v298
    %v303 = vrcp.pop %v301
    %v304 = vmul.f32 %v293, %v302
    %v305 = vmul.f32 %v295, %v303
    %v306 = vpack.c.bf16 %v305, %v304
    %308 = vrot.lane.b32.xlu0 %v188, 64
    %v309 = vpop.permute.xlu0 %308
    %v312 = vsel %vm283, %v306, 0
    %314 = vmatprep.subr.bf16.mxu0 0
    %315 = vmatpush1.bf16.msra.mxu0 %v309
    %316 = vmatprep.subr.bf16.mxu0 0
    %317 = vmatpush1.bf16.msra.mxu0 0
    %318 = vmatprep.subr.bf16.mxu0 0
    %319 = vmatpush1.bf16.msra.mxu0 0
    %320 = vmatprep.subr.bf16.mxu0 0
    %321 = vmatpush1.bf16.msra.mxu0 0
    %322 = vmatprep.subr.bf16.mxu0 0
    %323 = vmatpush1.bf16.msra.mxu0 0
    %324 = vmatprep.subr.bf16.mxu0 0
    %325 = vmatpush1.bf16.msra.mxu0 0
    %326 = vmatprep.subr.bf16.mxu0 0
    %327 = vmatpush1.bf16.msra.mxu0 0
    %328 = vmatprep.subr.bf16.mxu0 0
    %329 = vmatpush1.bf16.msra.mxu0 0
    %330 = vmatprep.subr.bf16.mxu0 0
    %331 = vmatpush1.bf16.msra.mxu0 0
    %332 = vmatprep.subr.bf16.mxu0 0
    %333 = vmatpush1.bf16.msra.mxu0 0
    %334 = vmatprep.subr.bf16.mxu0 0
    %335 = vmatpush1.bf16.msra.mxu0 0
    %336 = vmatprep.subr.bf16.mxu0 0
    %337 = vmatpush1.bf16.msra.mxu0 0
    %338 = vmatprep.subr.bf16.mxu0 0
    %339 = vmatpush1.bf16.msra.mxu0 0
    %340 = vmatprep.subr.bf16.mxu0 0
    %341 = vmatpush1.bf16.msra.mxu0 0
    %342 = vmatprep.subr.bf16.mxu0 0
    %343 = vmatpush1.bf16.msra.mxu0 0
    %344 = vmatprep.subr.bf16.mxu0 0
    %345 = vmatpush1.bf16.msra.mxu0 0
    %346 = vmatprep.mubr.bf16.mxu0 0
    %347 = vmatmul.mubr.bf16.gmra.mrb[0].mxu0 %v312
    %v348 = vpop.f32.mrb[0].mxu0
    %v349 = vadd.f32 0.0, %v348
    %v350 = vpop.f32.mrb[0].mxu0
    %v351 = vpop.f32.mrb[0].mxu0
    %v352 = vadd.f32 0.0, %v351
    %v353 = vpop.f32.mrb[0].mxu0
    %354 = vdwg.mxu0
    %v355 = vpack.c.bf16 %v352, %v349
    %356 = vrot.lane.b32.xlu0 %v182, 88
    %v357 = vpop.permute.xlu0 %356
    %358 = vrot.lane.b32.xlu0 %v185, 88
    %v359 = vpop.permute.xlu0 %358
    %362 = vxpose.xlu0.b32.start [1/16] %v357, 128
    %363 = vxpose.xlu0.b32.cont [2/16] %v359, 128
    %364 = vxpose.xlu0.b32.cont [3/16] 0.0, 128
    %365 = vxpose.xlu0.b32.cont [4/16] 0.0, 128
    %366 = vxpose.xlu0.b32.cont [5/16] 0.0, 128
    %367 = vxpose.xlu0.b32.cont [6/16] 0.0, 128
    %368 = vxpose.xlu0.b32.cont [7/16] 0.0, 128
    %369 = vxpose.xlu0.b32.cont [8/16] 0.0, 128
    %370 = vxpose.xlu0.b32.cont [9/16] 0.0, 128
    %371 = vxpose.xlu0.b32.cont [10/16] 0.0, 128
    %372 = vxpose.xlu0.b32.cont [11/16] 0.0, 128
    %373 = vxpose.xlu0.b32.cont [12/16] 0.0, 128
    %374 = vxpose.xlu0.b32.cont [13/16] 0.0, 128
    %375 = vxpose.xlu0.b32.cont [14/16] 0.0, 128
    %376 = vxpose.xlu0.b32.cont [15/16] 0.0, 128
    %377 = vxpose.xlu0.b32.end [16/16] 0.0, 128
    %v378 = vpop.trf.xlu0
    %v379 = vpop.trf.xlu0
    %v380 = vpop.trf.xlu0
    %v381 = vpop.trf.xlu0
    %v382 = vpop.trf.xlu0
    %v383 = vpop.trf.xlu0
    %v384 = vpop.trf.xlu0
    %v385 = vpop.trf.xlu0
    %v386 = vpop.trf.xlu0
    %v387 = vpop.trf.xlu0
    %v388 = vpop.trf.xlu0
    %v389 = vpop.trf.xlu0
    %v390 = vpop.trf.xlu0
    %v391 = vpop.trf.xlu0
    %v392 = vpop.trf.xlu0
    %v393 = vpop.trf.xlu0
    %v394 = vpack.c.bf16 %v378, %v378
    %395 = vrot.lane.b32.xlu0 %v188, 120
    %v396 = vpop.permute.xlu0 %395
    %v398 = vsel %vm230, %v396, 0
    %v401 = vsel %vm234, %v394, 0
    %403 = vmatprep.subr.bf16.mxu0 0
    %404 = vmatpush1.bf16.msra.mxu0 %v401
    %405 = vmatprep.subr.bf16.mxu0 0
    %406 = vmatpush1.bf16.msra.mxu0 0
    %407 = vmatprep.subr.bf16.mxu0 0
    %408 = vmatpush1.bf16.msra.mxu0 0
    %409 = vmatprep.subr.bf16.mxu0 0
    %410 = vmatpush1.bf16.msra.mxu0 0
    %411 = vmatprep.subr.bf16.mxu0 0
    %412 = vmatpush1.bf16.msra.mxu0 0
    %413 = vmatprep.subr.bf16.mxu0 0
    %414 = vmatpush1.bf16.msra.mxu0 0
    %415 = vmatprep.subr.bf16.mxu0 0
    %416 = vmatpush1.bf16.msra.mxu0 0
    %417 = vmatprep.subr.bf16.mxu0 0
    %418 = vmatpush1.bf16.msra.mxu0 0
    %419 = vmatprep.subr.bf16.mxu0 0
    %420 = vmatpush1.bf16.msra.mxu0 0
    %421 = vmatprep.subr.bf16.mxu0 0
    %422 = vmatpush1.bf16.msra.mxu0 0
    %423 = vmatprep.subr.bf16.mxu0 0
    %424 = vmatpush1.bf16.msra.mxu0 0
    %425 = vmatprep.subr.bf16.mxu0 0
    %426 = vmatpush1.bf16.msra.mxu0 0
    %427 = vmatprep.subr.bf16.mxu0 0
    %428 = vmatpush1.bf16.msra.mxu0 0
    %429 = vmatprep.subr.bf16.mxu0 0
    %430 = vmatpush1.bf16.msra.mxu0 0
    %431 = vmatprep.subr.bf16.mxu0 0
    %432 = vmatpush1.bf16.msra.mxu0 0
    %433 = vmatprep.subr.bf16.mxu0 0
    %434 = vmatpush1.bf16.msra.mxu0 0
    %435 = vmatprep.mubr.bf16.mxu0 0
    %436 = vmatmul.mubr.bf16.gmra.mrb[0].mxu0 %v398
    %v437 = vpop.f32.mrb[0].mxu0
    %v438 = vadd.f32 0.0, %v437
    %v439 = vpop.f32.mrb[0].mxu0
    %v440 = vpop.f32.mrb[0].mxu0
    %v441 = vadd.f32 0.0, %v440
    %v442 = vpop.f32.mrb[0].mxu0
    %443 = vdwg.mxu0
    %v444 = vmul.f32 %v438, 0.35355338
    %v445 = vmul.f32 %v441, 0.35355338
    %v446 = vadd.f32 %v444, %v99
    %v447 = vadd.f32 %v445, %v100
    %v448 = vsel %vm283, %v446, -inf
    %449 = vmax.xlane.f32.xlu0 %v448
    %v450 = vpop.xlane.xlu0 %449
    %v451 = vsel %vm283, %v447, -inf
    %452 = vmax.xlane.f32.xlu0 %v451
    %v453 = vpop.xlane.xlu0 %452
    %v454 = vsub.f32 %v446, %v450
    %v455 = vsub.f32 %v447, %v453
    %v456 = vmul.f32 %v454, 1.442695
    %v457 = vpow.pop %v456
    %v458 = vmul.f32 %v455, 1.442695
    %v459 = vpow.pop %v458
    %v460 = vsel %vm283, %v457, 0.0
    %461 = vadd.xlane.f32.xlu0 %v460
    %v462 = vpop.xlane.xlu0 %461
    %v463 = vsel %vm283, %v459, 0.0
    %464 = vadd.xlane.f32.xlu0 %v463
    %v465 = vpop.xlane.xlu0 %464
    %v466 = vrcp.pop %v462
    %v467 = vrcp.pop %v465
    %v468 = vmul.f32 %v457, %v466
    %v469 = vmul.f32 %v459, %v467
    %v470 = vpack.c.bf16 %v469, %v468
    %471 = vrot.lane.b32.xlu0 %v188, 56
    %v472 = vpop.permute.xlu0 %471
    %v475 = vsel %vm283, %v470, 0
    %477 = vmatprep.subr.bf16.mxu0 0
    %478 = vmatpush1.bf16.msra.mxu0 %v472
    %479 = vmatprep.subr.bf16.mxu0 0
    %480 = vmatpush1.bf16.msra.mxu0 0
    %481 = vmatprep.subr.bf16.mxu0 0
    %482 = vmatpush1.bf16.msra.mxu0 0
    %483 = vmatprep.subr.bf16.mxu0 0
    %484 = vmatpush1.bf16.msra.mxu0 0
    %485 = vmatprep.subr.bf16.mxu0 0
    %486 = vmatpush1.bf16.msra.mxu0 0
    %487 = vmatprep.subr.bf16.mxu0 0
    %488 = vmatpush1.bf16.msra.mxu0 0
    %489 = vmatprep.subr.bf16.mxu0 0
    %490 = vmatpush1.bf16.msra.mxu0 0
    %491 = vmatprep.subr.bf16.mxu0 0
    %492 = vmatpush1.bf16.msra.mxu0 0
    %493 = vmatprep.subr.bf16.mxu0 0
    %494 = vmatpush1.bf16.msra.mxu0 0
    %495 = vmatprep.subr.bf16.mxu0 0
    %496 = vmatpush1.bf16.msra.mxu0 0
    %497 = vmatprep.subr.bf16.mxu0 0
    %498 = vmatpush1.bf16.msra.mxu0 0
    %499 = vmatprep.subr.bf16.mxu0 0
    %500 = vmatpush1.bf16.msra.mxu0 0
    %501 = vmatprep.subr.bf16.mxu0 0
    %502 = vmatpush1.bf16.msra.mxu0 0
    %503 = vmatprep.subr.bf16.mxu0 0
    %504 = vmatpush1.bf16.msra.mxu0 0
    %505 = vmatprep.subr.bf16.mxu0 0
    %506 = vmatpush1.bf16.msra.mxu0 0
    %507 = vmatprep.subr.bf16.mxu0 0
    %508 = vmatpush1.bf16.msra.mxu0 0
    %509 = vmatprep.mubr.bf16.mxu0 0
    %510 = vmatmul.mubr.bf16.gmra.mrb[0].mxu0 %v475
    %v511 = vpop.f32.mrb[0].mxu0
    %v512 = vadd.f32 0.0, %v511
    %v513 = vpop.f32.mrb[0].mxu0
    %v514 = vpop.f32.mrb[0].mxu0
    %v515 = vadd.f32 0.0, %v514
    %v516 = vpop.f32.mrb[0].mxu0
    %517 = vdwg.mxu0
    %v518 = vpack.c.bf16 %v515, %v512
    %v519 = vpack.c.b16 %v136, %v136
    %520 = vrot.lane.b32.xlu0 %v519, 32
    %v521 = vpop.permute.xlu0 %520
    %v523 = vsel %vm230, %v518, 0
    %v526 = vsel %vm234, %v521, 0
    %528 = vmatprep.subr.bf16.mxu0 0
    %529 = vmatpush1.bf16.msra.mxu0 %v526
    %530 = vmatprep.subr.bf16.mxu0 0
    %531 = vmatpush1.bf16.msra.mxu0 0
    %532 = vmatprep.subr.bf16.mxu0 0
    %533 = vmatpush1.bf16.msra.mxu0 0
    %534 = vmatprep.subr.bf16.mxu0 0
    %535 = vmatpush1.bf16.msra.mxu0 0
    %536 = vmatprep.subr.bf16.mxu0 0
    %537 = vmatpush1.bf16.msra.mxu0 0
    %538 = vmatprep.subr.bf16.mxu0 0
    %539 = vmatpush1.bf16.msra.mxu0 0
    %540 = vmatprep.subr.bf16.mxu0 0
    %541 = vmatpush1.bf16.msra.mxu0 0
    %542 = vmatprep.subr.bf16.mxu0 0
    %543 = vmatpush1.bf16.msra.mxu0 0
    %544 = vmatprep.subr.bf16.mxu0 0
    %545 = vmatpush1.bf16.msra.mxu0 0
    %546 = vmatprep.subr.bf16.mxu0 0
    %547 = vmatpush1.bf16.msra.mxu0 0
    %548 = vmatprep.subr.bf16.mxu0 0
    %549 = vmatpush1.bf16.msra.mxu0 0
    %550 = vmatprep.subr.bf16.mxu0 0
    %551 = vmatpush1.bf16.msra.mxu0 0
    %552 = vmatprep.subr.bf16.mxu0 0
    %553 = vmatpush1.bf16.msra.mxu0 0
    %554 = vmatprep.subr.bf16.mxu0 0
    %555 = vmatpush1.bf16.msra.mxu0 0
    %556 = vmatprep.subr.bf16.mxu0 0
    %557 = vmatpush1.bf16.msra.mxu0 0
    %558 = vmatprep.subr.bf16.mxu0 0
    %559 = vmatpush1.bf16.msra.mxu0 0
    %560 = vmatprep.mubr.bf16.mxu0 0
    %561 = vmatmul.mubr.bf16.gmra.mrb[0].mxu0 %v523
    %v562 = vpop.f32.mrb[0].mxu0
    %v563 = vadd.f32 0.0, %v562
    %v564 = vpop.f32.mrb[0].mxu0
    %v565 = vpop.f32.mrb[0].mxu0
    %v566 = vadd.f32 0.0, %v565
    %v567 = vpop.f32.mrb[0].mxu0
    %568 = vdwg.mxu0
    %v569 = vpack.c.b16 %v135, %v135
    %570 = vrot.lane.b32.xlu0 %v569, 32
    %v571 = vpop.permute.xlu0 %570
    %v573 = vsel %vm230, %v355, 0
    %v576 = vsel %vm234, %v571, 0
    %578 = vmatprep.subr.bf16.mxu0 0
    %579 = vmatpush1.bf16.msra.mxu0 %v576
    %580 = vmatprep.subr.bf16.mxu0 0
    %581 = vmatpush1.bf16.msra.mxu0 0
    %582 = vmatprep.subr.bf16.mxu0 0
    %583 = vmatpush1.bf16.msra.mxu0 0
    %584 = vmatprep.subr.bf16.mxu0 0
    %585 = vmatpush1.bf16.msra.mxu0 0
    %586 = vmatprep.subr.bf16.mxu0 0
    %587 = vmatpush1.bf16.msra.mxu0 0
    %588 = vmatprep.subr.bf16.mxu0 0
    %589 = vmatpush1.bf16.msra.mxu0 0
    %590 = vmatprep.subr.bf16.mxu0 0
    %591 = vmatpush1.bf16.msra.mxu0 0
    %592 = vmatprep.subr.bf16.mxu0 0
    %593 = vmatpush1.bf16.msra.mxu0 0
    %594 = vmatprep.subr.bf16.mxu0 0
    %595 = vmatpush1.bf16.msra.mxu0 0
    %596 = vmatprep.subr.bf16.mxu0 0
    %597 = vmatpush1.bf16.msra.mxu0 0
    %598 = vmatprep.subr.bf16.mxu0 0
    %599 = vmatpush1.bf16.msra.mxu0 0
    %600 = vmatprep.subr.bf16.mxu0 0
    %601 = vmatpush1.bf16.msra.mxu0 0
    %602 = vmatprep.subr.bf16.mxu0 0
    %603 = vmatpush1.bf16.msra.mxu0 0
    %604 = vmatprep.subr.bf16.mxu0 0
    %605 = vmatpush1.bf16.msra.mxu0 0
    %606 = vmatprep.subr.bf16.mxu0 0
    %607 = vmatpush1.bf16.msra.mxu0 0
    %608 = vmatprep.subr.bf16.mxu0 0
    %609 = vmatpush1.bf16.msra.mxu0 0
    %610 = vmatprep.mubr.bf16.mxu0 0
    %611 = vmatmul.mubr.bf16.gmra.mrb[0].mxu0 %v573
    %v612 = vpop.f32.mrb[0].mxu0
    %v613 = vadd.f32 %v563, %v612
    %v614 = vpop.f32.mrb[0].mxu0
    %v615 = vpop.f32.mrb[0].mxu0
    %v616 = vadd.f32 %v566, %v615
    %v617 = vpop.f32.mrb[0].mxu0
    %618 = vdwg.mxu0
    %619 = vrot.lane.b32.xlu0 %v182, 80
    %v620 = vpop.permute.xlu0 %619
    %621 = vrot.lane.b32.xlu0 %v185, 80
    %v622 = vpop.permute.xlu0 %621
    %625 = vxpose.xlu0.b32.start [1/16] %v620, 128
    %626 = vxpose.xlu0.b32.cont [2/16] %v622, 128
    %627 = vxpose.xlu0.b32.cont [3/16] 0.0, 128
    %628 = vxpose.xlu0.b32.cont [4/16] 0.0, 128
    %629 = vxpose.xlu0.b32.cont [5/16] 0.0, 128
    %630 = vxpose.xlu0.b32.cont [6/16] 0.0, 128
    %631 = vxpose.xlu0.b32.cont [7/16] 0.0, 128
    %632 = vxpose.xlu0.b32.cont [8/16] 0.0, 128
    %633 = vxpose.xlu0.b32.cont [9/16] 0.0, 128
    %634 = vxpose.xlu0.b32.cont [10/16] 0.0, 128
    %635 = vxpose.xlu0.b32.cont [11/16] 0.0, 128
    %636 = vxpose.xlu0.b32.cont [12/16] 0.0, 128
    %637 = vxpose.xlu0.b32.cont [13/16] 0.0, 128
    %638 = vxpose.xlu0.b32.cont [14/16] 0.0, 128
    %639 = vxpose.xlu0.b32.cont [15/16] 0.0, 128
    %640 = vxpose.xlu0.b32.end [16/16] 0.0, 128
    %v641 = vpop.trf.xlu0
    %v642 = vpop.trf.xlu0
    %v643 = vpop.trf.xlu0
    %v644 = vpop.trf.xlu0
    %v645 = vpop.trf.xlu0
    %v646 = vpop.trf.xlu0
    %v647 = vpop.trf.xlu0
    %v648 = vpop.trf.xlu0
    %v649 = vpop.trf.xlu0
    %v650 = vpop.trf.xlu0
    %v651 = vpop.trf.xlu0
    %v652 = vpop.trf.xlu0
    %v653 = vpop.trf.xlu0
    %v654 = vpop.trf.xlu0
    %v655 = vpop.trf.xlu0
    %v656 = vpop.trf.xlu0
    %v657 = vpack.c.bf16 %v641, %v641
    %658 = vrot.lane.b32.xlu0 %v188, 112
    %v659 = vpop.permute.xlu0 %658
    %v661 = vsel %vm230, %v659, 0
    %v664 = vsel %vm234, %v657, 0
    %666 = vmatprep.subr.bf16.mxu0 0
    %667 = vmatpush1.bf16.msra.mxu0 %v664
    %668 = vmatprep.subr.bf16.mxu0 0
    %669 = vmatpush1.bf16.msra.mxu0 0
    %670 = vmatprep.subr.bf16.mxu0 0
    %671 = vmatpush1.bf16.msra.mxu0 0
    %672 = vmatprep.subr.bf16.mxu0 0
    %673 = vmatpush1.bf16.msra.mxu0 0
    %674 = vmatprep.subr.bf16.mxu0 0
    %675 = vmatpush1.bf16.msra.mxu0 0
    %676 = vmatprep.subr.bf16.mxu0 0
    %677 = vmatpush1.bf16.msra.mxu0 0
    %678 = vmatprep.subr.bf16.mxu0 0
    %679 = vmatpush1.bf16.msra.mxu0 0
    %680 = vmatprep.subr.bf16.mxu0 0
    %681 = vmatpush1.bf16.msra.mxu0 0
    %682 = vmatprep.subr.bf16.mxu0 0
    %683 = vmatpush1.bf16.msra.mxu0 0
    %684 = vmatprep.subr.bf16.mxu0 0
    %685 = vmatpush1.bf16.msra.mxu0 0
    %686 = vmatprep.subr.bf16.mxu0 0
    %687 = vmatpush1.bf16.msra.mxu0 0
    %688 = vmatprep.subr.bf16.mxu0 0
    %689 = vmatpush1.bf16.msra.mxu0 0
    %690 = vmatprep.subr.bf16.mxu0 0
    %691 = vmatpush1.bf16.msra.mxu0 0
    %692 = vmatprep.subr.bf16.mxu0 0
    %693 = vmatpush1.bf16.msra.mxu0 0
    %694 = vmatprep.subr.bf16.mxu0 0
    %695 = vmatpush1.bf16.msra.mxu0 0
    %696 = vmatprep.subr.bf16.mxu0 0
    %697 = vmatpush1.bf16.msra.mxu0 0
    %698 = vmatprep.mubr.bf16.mxu0 0
    %699 = vmatmul.mubr.bf16.gmra.mrb[0].mxu0 %v661
    %v700 = vpop.f32.mrb[0].mxu0
    %v701 = vadd.f32 0.0, %v700
    %v702 = vpop.f32.mrb[0].mxu0
    %v703 = vpop.f32.mrb[0].mxu0
    %v704 = vadd.f32 0.0, %v703
    %v705 = vpop.f32.mrb[0].mxu0
    %706 = vdwg.mxu0
    %v707 = vmul.f32 %v701, 0.35355338
    %v708 = vmul.f32 %v704, 0.35355338
    %v709 = vadd.f32 %v707, %v99
    %v710 = vadd.f32 %v708, %v100
    %v711 = vsel %vm283, %v709, -inf
    %712 = vmax.xlane.f32.xlu0 %v711
    %v713 = vpop.xlane.xlu0 %712
    %v714 = vsel %vm283, %v710, -inf
    %715 = vmax.xlane.f32.xlu0 %v714
    %v716 = vpop.xlane.xlu0 %715
    %v717 = vsub.f32 %v709, %v713
    %v718 = vsub.f32 %v710, %v716
    %v719 = vmul.f32 %v717, 1.442695
    %v720 = vpow.pop %v719
    %v721 = vmul.f32 %v718, 1.442695
    %v722 = vpow.pop %v721
    %v723 = vsel %vm283, %v720, 0.0
    %724 = vadd.xlane.f32.xlu0 %v723
    %v725 = vpop.xlane.xlu0 %724
    %v726 = vsel %vm283, %v722, 0.0
    %727 = vadd.xlane.f32.xlu0 %v726
    %v728 = vpop.xlane.xlu0 %727
    %v729 = vrcp.pop %v725
    %v730 = vrcp.pop %v728
    %v731 = vmul.f32 %v720, %v729
    %v732 = vmul.f32 %v722, %v730
    %v733 = vpack.c.bf16 %v732, %v731
    %734 = vrot.lane.b32.xlu0 %v188, 48
    %v735 = vpop.permute.xlu0 %734
    %v738 = vsel %vm283, %v733, 0
    %740 = vmatprep.subr.bf16.mxu0 0
    %741 = vmatpush1.bf16.msra.mxu0 %v735
    %742 = vmatprep.subr.bf16.mxu0 0
    %743 = vmatpush1.bf16.msra.mxu0 0
    %744 = vmatprep.subr.bf16.mxu0 0
    %745 = vmatpush1.bf16.msra.mxu0 0
    %746 = vmatprep.subr.bf16.mxu0 0
    %747 = vmatpush1.bf16.msra.mxu0 0
    %748 = vmatprep.subr.bf16.mxu0 0
    %749 = vmatpush1.bf16.msra.mxu0 0
    %750 = vmatprep.subr.bf16.mxu0 0
    %751 = vmatpush1.bf16.msra.mxu0 0
    %752 = vmatprep.subr.bf16.mxu0 0
    %753 = vmatpush1.bf16.msra.mxu0 0
    %754 = vmatprep.subr.bf16.mxu0 0
    %755 = vmatpush1.bf16.msra.mxu0 0
    %756 = vmatprep.subr.bf16.mxu0 0
    %757 = vmatpush1.bf16.msra.mxu0 0
    %758 = vmatprep.subr.bf16.mxu0 0
    %759 = vmatpush1.bf16.msra.mxu0 0
    %760 = vmatprep.subr.bf16.mxu0 0
    %761 = vmatpush1.bf16.msra.mxu0 0
    %762 = vmatprep.subr.bf16.mxu0 0
    %763 = vmatpush1.bf16.msra.mxu0 0
    %764 = vmatprep.subr.bf16.mxu0 0
    %765 = vmatpush1.bf16.msra.mxu0 0
    %766 = vmatprep.subr.bf16.mxu0 0
    %767 = vmatpush1.bf16.msra.mxu0 0
    %768 = vmatprep.subr.bf16.mxu0 0
    %769 = vmatpush1.bf16.msra.mxu0 0
    %770 = vmatprep.subr.bf16.mxu0 0
    %771 = vmatpush1.bf16.msra.mxu0 0
    %772 = vmatprep.mubr.bf16.mxu0 0
    %773 = vmatmul.mubr.bf16.gmra.mrb[0].mxu0 %v738
    %v774 = vpop.f32.mrb[0].mxu0
    %v775 = vadd.f32 0.0, %v774
    %v776 = vpop.f32.mrb[0].mxu0
    %v777 = vpop.f32.mrb[0].mxu0
    %v778 = vadd.f32 0.0, %v777
    %v779 = vpop.f32.mrb[0].mxu0
    %780 = vdwg.mxu0
    %v781 = vpack.c.bf16 %v778, %v775
    %v782 = vpack.c.b16 %v137, %v137
    %783 = vrot.lane.b32.xlu0 %v782, 32
    %v784 = vpop.permute.xlu0 %783
    %v786 = vsel %vm230, %v781, 0
    %v789 = vsel %vm234, %v784, 0
    %791 = vmatprep.subr.bf16.mxu0 0
    %792 = vmatpush1.bf16.msra.mxu0 %v789
    %793 = vmatprep.subr.bf16.mxu0 0
    %794 = vmatpush1.bf16.msra.mxu0 0
    %795 = vmatprep.subr.bf16.mxu0 0
    %796 = vmatpush1.bf16.msra.mxu0 0
    %797 = vmatprep.subr.bf16.mxu0 0
    %798 = vmatpush1.bf16.msra.mxu0 0
    %799 = vmatprep.subr.bf16.mxu0 0
    %800 = vmatpush1.bf16.msra.mxu0 0
    %801 = vmatprep.subr.bf16.mxu0 0
    %802 = vmatpush1.bf16.msra.mxu0 0
    %803 = vmatprep.subr.bf16.mxu0 0
    %804 = vmatpush1.bf16.msra.mxu0 0
    %805 = vmatprep.subr.bf16.mxu0 0
    %806 = vmatpush1.bf16.msra.mxu0 0
    %807 = vmatprep.subr.bf16.mxu0 0
    %808 = vmatpush1.bf16.msra.mxu0 0
    %809 = vmatprep.subr.bf16.mxu0 0
    %810 = vmatpush1.bf16.msra.mxu0 0
    %811 = vmatprep.subr.bf16.mxu0 0
    %812 = vmatpush1.bf16.msra.mxu0 0
    %813 = vmatprep.subr.bf16.mxu0 0
    %814 = vmatpush1.bf16.msra.mxu0 0
    %815 = vmatprep.subr.bf16.mxu0 0
    %816 = vmatpush1.bf16.msra.mxu0 0
    %817 = vmatprep.subr.bf16.mxu0 0
    %818 = vmatpush1.bf16.msra.mxu0 0
    %819 = vmatprep.subr.bf16.mxu0 0
    %820 = vmatpush1.bf16.msra.mxu0 0
    %821 = vmatprep.subr.bf16.mxu0 0
    %822 = vmatpush1.bf16.msra.mxu0 0
    %823 = vmatprep.mubr.bf16.mxu0 0
    %824 = vmatmul.mubr.bf16.gmra.mrb[0].mxu0 %v786
    %v825 = vpop.f32.mrb[0].mxu0
    %v826 = vadd.f32 0.0, %v825
    %v827 = vpop.f32.mrb[0].mxu0
    %v828 = vpop.f32.mrb[0].mxu0
    %v829 = vadd.f32 0.0, %v828
    %v830 = vpop.f32.mrb[0].mxu0
    %831 = vdwg.mxu0
    %v832 = vadd.f32 %v613, %v826
    %v833 = vadd.f32 %v616, %v829
    %834 = vrot.lane.b32.xlu0 %v182, 72
    %v835 = vpop.permute.xlu0 %834
    %836 = vrot.lane.b32.xlu0 %v185, 72
    %v837 = vpop.permute.xlu0 %836
    %840 = vxpose.xlu0.b32.start [1/16] %v835, 128
    %841 = vxpose.xlu0.b32.cont [2/16] %v837, 128
    %842 = vxpose.xlu0.b32.cont [3/16] 0.0, 128
    %843 = vxpose.xlu0.b32.cont [4/16] 0.0, 128
    %844 = vxpose.xlu0.b32.cont [5/16] 0.0, 128
    %845 = vxpose.xlu0.b32.cont [6/16] 0.0, 128
    %846 = vxpose.xlu0.b32.cont [7/16] 0.0, 128
    %847 = vxpose.xlu0.b32.cont [8/16] 0.0, 128
    %848 = vxpose.xlu0.b32.cont [9/16] 0.0, 128
    %849 = vxpose.xlu0.b32.cont [10/16] 0.0, 128
    %850 = vxpose.xlu0.b32.cont [11/16] 0.0, 128
    %851 = vxpose.xlu0.b32.cont [12/16] 0.0, 128
    %852 = vxpose.xlu0.b32.cont [13/16] 0.0, 128
    %853 = vxpose.xlu0.b32.cont [14/16] 0.0, 128
    %854 = vxpose.xlu0.b32.cont [15/16] 0.0, 128
    %855 = vxpose.xlu0.b32.end [16/16] 0.0, 128
    %v856 = vpop.trf.xlu0
    %v857 = vpop.trf.xlu0
    %v858 = vpop.trf.xlu0
    %v859 = vpop.trf.xlu0
    %v860 = vpop.trf.xlu0
    %v861 = vpop.trf.xlu0
    %v862 = vpop.trf.xlu0
    %v863 = vpop.trf.xlu0
    %v864 = vpop.trf.xlu0
    %v865 = vpop.trf.xlu0
    %v866 = vpop.trf.xlu0
    %v867 = vpop.trf.xlu0
    %v868 = vpop.trf.xlu0
    %v869 = vpop.trf.xlu0
    %v870 = vpop.trf.xlu0
    %v871 = vpop.trf.xlu0
    %v872 = vpack.c.bf16 %v856, %v856
    %873 = vrot.lane.b32.xlu0 %v188, 104
    %v874 = vpop.permute.xlu0 %873
    %v876 = vsel %vm230, %v874, 0
    %v879 = vsel %vm234, %v872, 0
    %881 = vmatprep.subr.bf16.mxu0 0
    %882 = vmatpush1.bf16.msra.mxu0 %v879
    %883 = vmatprep.subr.bf16.mxu0 0
    %884 = vmatpush1.bf16.msra.mxu0 0
    %885 = vmatprep.subr.bf16.mxu0 0
    %886 = vmatpush1.bf16.msra.mxu0 0
    %887 = vmatprep.subr.bf16.mxu0 0
    %888 = vmatpush1.bf16.msra.mxu0 0
    %889 = vmatprep.subr.bf16.mxu0 0
    %890 = vmatpush1.bf16.msra.mxu0 0
    %891 = vmatprep.subr.bf16.mxu0 0
    %892 = vmatpush1.bf16.msra.mxu0 0
    %893 = vmatprep.subr.bf16.mxu0 0
    %894 = vmatpush1.bf16.msra.mxu0 0
    %895 = vmatprep.subr.bf16.mxu0 0
    %896 = vmatpush1.bf16.msra.mxu0 0
    %897 = vmatprep.subr.bf16.mxu0 0
    %898 = vmatpush1.bf16.msra.mxu0 0
    %899 = vmatprep.subr.bf16.mxu0 0
    %900 = vmatpush1.bf16.msra.mxu0 0
    %901 = vmatprep.subr.bf16.mxu0 0
    %902 = vmatpush1.bf16.msra.mxu0 0
    %903 = vmatprep.subr.bf16.mxu0 0
    %904 = vmatpush1.bf16.msra.mxu0 0
    %905 = vmatprep.subr.bf16.mxu0 0
    %906 = vmatpush1.bf16.msra.mxu0 0
    %907 = vmatprep.subr.bf16.mxu0 0
    %908 = vmatpush1.bf16.msra.mxu0 0
    %909 = vmatprep.subr.bf16.mxu0 0
    %910 = vmatpush1.bf16.msra.mxu0 0
    %911 = vmatprep.subr.bf16.mxu0 0
    %912 = vmatpush1.bf16.msra.mxu0 0
    %913 = vmatprep.mubr.bf16.mxu0 0
    %914 = vmatmul.mubr.bf16.gmra.mrb[0].mxu0 %v876
    %v915 = vpop.f32.mrb[0].mxu0
    %v916 = vadd.f32 0.0, %v915
    %v917 = vpop.f32.mrb[0].mxu0
    %v918 = vpop.f32.mrb[0].mxu0
    %v919 = vadd.f32 0.0, %v918
    %v920 = vpop.f32.mrb[0].mxu0
    %921 = vdwg.mxu0
    %v922 = vmul.f32 %v916, 0.35355338
    %v923 = vmul.f32 %v919, 0.35355338
    %v924 = vadd.f32 %v922, %v99
    %v925 = vadd.f32 %v923, %v100
    %v926 = vsel %vm283, %v924, -inf
    %927 = vmax.xlane.f32.xlu0 %v926
    %v928 = vpop.xlane.xlu0 %927
    %v929 = vsel %vm283, %v925, -inf
    %930 = vmax.xlane.f32.xlu0 %v929
    %v931 = vpop.xlane.xlu0 %930
    %v932 = vsub.f32 %v924, %v928
    %v933 = vsub.f32 %v925, %v931
    %v934 = vmul.f32 %v932, 1.442695
    %v935 = vpow.pop %v934
    %v936 = vmul.f32 %v933, 1.442695
    %v937 = vpow.pop %v936
    %v938 = vsel %vm283, %v935, 0.0
    %939 = vadd.xlane.f32.xlu0 %v938
    %v940 = vpop.xlane.xlu0 %939
    %v941 = vsel %vm283, %v937, 0.0
    %942 = vadd.xlane.f32.xlu0 %v941
    %v943 = vpop.xlane.xlu0 %942
    %v944 = vrcp.pop %v940
    %v945 = vrcp.pop %v943
    %v946 = vmul.f32 %v935, %v944
    %v947 = vmul.f32 %v937, %v945
    %v948 = vpack.c.bf16 %v947, %v946
    %949 = vrot.lane.b32.xlu0 %v188, 40
    %v950 = vpop.permute.xlu0 %949
    %v953 = vsel %vm283, %v948, 0
    %955 = vmatprep.subr.bf16.mxu0 0
    %956 = vmatpush1.bf16.msra.mxu0 %v950
    %957 = vmatprep.subr.bf16.mxu0 0
    %958 = vmatpush1.bf16.msra.mxu0 0
    %959 = vmatprep.subr.bf16.mxu0 0
    %960 = vmatpush1.bf16.msra.mxu0 0
    %961 = vmatprep.subr.bf16.mxu0 0
    %962 = vmatpush1.bf16.msra.mxu0 0
    %963 = vmatprep.subr.bf16.mxu0 0
    %964 = vmatpush1.bf16.msra.mxu0 0
    %965 = vmatprep.subr.bf16.mxu0 0
    %966 = vmatpush1.bf16.msra.mxu0 0
    %967 = vmatprep.subr.bf16.mxu0 0
    %968 = vmatpush1.bf16.msra.mxu0 0
    %969 = vmatprep.subr.bf16.mxu0 0
    %970 = vmatpush1.bf16.msra.mxu0 0
    %971 = vmatprep.subr.bf16.mxu0 0
    %972 = vmatpush1.bf16.msra.mxu0 0
    %973 = vmatprep.subr.bf16.mxu0 0
    %974 = vmatpush1.bf16.msra.mxu0 0
    %975 = vmatprep.subr.bf16.mxu0 0
    %976 = vmatpush1.bf16.msra.mxu0 0
    %977 = vmatprep.subr.bf16.mxu0 0
    %978 = vmatpush1.bf16.msra.mxu0 0
    %979 = vmatprep.subr.bf16.mxu0 0
    %980 = vmatpush1.bf16.msra.mxu0 0
    %981 = vmatprep.subr.bf16.mxu0 0
    %982 = vmatpush1.bf16.msra.mxu0 0
    %983 = vmatprep.subr.bf16.mxu0 0
    %984 = vmatpush1.bf16.msra.mxu0 0
    %985 = vmatprep.subr.bf16.mxu0 0
    %986 = vmatpush1.bf16.msra.mxu0 0
    %987 = vmatprep.mubr.bf16.mxu0 0
    %988 = vmatmul.mubr.bf16.gmra.mrb[0].mxu0 %v953
    %v989 = vpop.f32.mrb[0].mxu0
    %v990 = vadd.f32 0.0, %v989
    %v991 = vpop.f32.mrb[0].mxu0
    %v992 = vpop.f32.mrb[0].mxu0
    %v993 = vadd.f32 0.0, %v992
    %v994 = vpop.f32.mrb[0].mxu0
    %995 = vdwg.mxu0
    %v996 = vpack.c.bf16 %v993, %v990
    %v997 = vpack.c.b16 %v138, %v138
    %998 = vrot.lane.b32.xlu0 %v997, 32
    %v999 = vpop.permute.xlu0 %998
    %v1001 = vsel %vm230, %v996, 0
    %v1004 = vsel %vm234, %v999, 0
    %1006 = vmatprep.subr.bf16.mxu0 0
    %1007 = vmatpush1.bf16.msra.mxu0 %v1004
    %1008 = vmatprep.subr.bf16.mxu0 0
    %1009 = vmatpush1.bf16.msra.mxu0 0
    %1010 = vmatprep.subr.bf16.mxu0 0
    %1011 = vmatpush1.bf16.msra.mxu0 0
    %1012 = vmatprep.subr.bf16.mxu0 0
    %1013 = vmatpush1.bf16.msra.mxu0 0
    %1014 = vmatprep.subr.bf16.mxu0 0
    %1015 = vmatpush1.bf16.msra.mxu0 0
    %1016 = vmatprep.subr.bf16.mxu0 0
    %1017 = vmatpush1.bf16.msra.mxu0 0
    %1018 = vmatprep.subr.bf16.mxu0 0
    %1019 = vmatpush1.bf16.msra.mxu0 0
    %1020 = vmatprep.subr.bf16.mxu0 0
    %1021 = vmatpush1.bf16.msra.mxu0 0
    %1022 = vmatprep.subr.bf16.mxu0 0
    %1023 = vmatpush1.bf16.msra.mxu0 0
    %1024 = vmatprep.subr.bf16.mxu0 0
    %1025 = vmatpush1.bf16.msra.mxu0 0
    %1026 = vmatprep.subr.bf16.mxu0 0
    %1027 = vmatpush1.bf16.msra.mxu0 0
    %1028 = vmatprep.subr.bf16.mxu0 0
    %1029 = vmatpush1.bf16.msra.mxu0 0
    %1030 = vmatprep.subr.bf16.mxu0 0
    %1031 = vmatpush1.bf16.msra.mxu0 0
    %1032 = vmatprep.subr.bf16.mxu0 0
    %1033 = vmatpush1.bf16.msra.mxu0 0
    %1034 = vmatprep.subr.bf16.mxu0 0
    %1035 = vmatpush1.bf16.msra.mxu0 0
    %1036 = vmatprep.subr.bf16.mxu0 0
    %1037 = vmatpush1.bf16.msra.mxu0 0
    %1038 = vmatprep.mubr.bf16.mxu0 0
    %1039 = vmatmul.mubr.bf16.gmra.mrb[0].mxu0 %v1001
    %v1040 = vpop.f32.mrb[0].mxu0
    %v1041 = vadd.f32 0.0, %v1040
    %v1042 = vpop.f32.mrb[0].mxu0
    %v1043 = vpop.f32.mrb[0].mxu0
    %v1044 = vadd.f32 0.0, %v1043
    %v1045 = vpop.f32.mrb[0].mxu0
    %1046 = vdwg.mxu0
    %v1047 = vadd.f32 %v832, %v1041
    %v1048 = vadd.f32 %v833, %v1044
    %1050 = vrot.lane.b32.xlu0 %v130, 32
    %v1051 = vpop.permute.xlu0 %1050
    %v1053 = vadd.f32 %v1047, %v1051
    %v1054 = vadd.f32 %v1048, %v1051
    %v1055 = vadd.f32 %v97, %v1053
    %v1056 = vadd.f32 %v98, %v1054
    %v1057 = vsel %vm143, %v1055, 0.0
    %1058 = vadd.xlane.f32.xlu0 %v1057
    %v1059 = vpop.xlane.xlu0 %1058
    %v1060 = vsel %vm143, %v1056, 0.0
    %1061 = vadd.xlane.f32.xlu0 %v1060
    %v1062 = vpop.xlane.xlu0 %1061
    %v1063 = vrcp.pop 32.0
    %v1064 = vmul.f32 %v1059, %v1063
    %v1065 = vmul.f32 %v1062, %v1063
    %v1066 = vsub.f32 %v1055, %v1064
    %v1067 = vsub.f32 %v1056, %v1065
    %v1068 = vmul.f32 %v1066, %v1066
    %v1069 = vmul.f32 %v1067, %v1067
    %v1070 = vsel %vm143, %v1068, 0.0
    %1071 = vadd.xlane.f32.xlu0 %v1070
    %v1072 = vpop.xlane.xlu0 %1071
    %v1073 = vsel %vm143, %v1069, 0.0
    %1074 = vadd.xlane.f32.xlu0 %v1073
    %v1075 = vpop.xlane.xlu0 %1074
    %v1076 = vmul.f32 %v1072, %v1063
    %v1077 = vmul.f32 %v1075, %v1063
    %v1078 = vadd.f32 %v1076, 1e-05
    %v1079 = vadd.f32 %v1077, 1e-05
    %v1080 = vrsqrt.pop %v1078
    %v1081 = vrsqrt.pop %v1079
    %v1082 = vmul.f32 %v1066, %v1080
    %v1083 = vmul.f32 %v1067, %v1081
    %v1084 = vlaneseq
    %v1085 = vshrl.u32 %v1084, 7
    %v1086 = vsub.s32 0, %v1085
    %v1087 = vrot.slane %v125, %v1086
    %v1088 = vmul.f32 %v1082, %v1087
    %v1089 = vmul.f32 %v1083, %v1087
    %v1090 = vlaneseq
    %v1091 = vshrl.u32 %v1090, 7
    %v1092 = vsub.s32 3, %v1091
    %v1093 = vrot.slane %v125, %v1092
    %v1094 = vadd.f32 %v1088, %v1093
    %v1095 = vadd.f32 %v1089, %v1093
    %v1096 = vpack.c.bf16 %v1095, %v1094
    %v1097 = vlaneseq
    %v1098 = vshrl.u32 %v1097, 7
    %v1099 = vsub.s32 1, %v1098
    %v1100 = vrot.slane %v111, %v1099
    %v1105 = vunpack.c.l.b16 %v107
    %v1106 = vunpack.c.l.b16 %v108
    %v1107 = vunpack.c.l.b16 %v109
    %v1108 = vunpack.c.l.b16 %v110
    %v1109 = vpack.c.b16 %v1106, %v1105
    %v1110 = vpack.c.b16 %v1108, %v1107
    %v1114 = vsel %vm143, %v1096, 0
    %1116 = vmatprep.subr.bf16.mxu0 0
    %1117 = vmatpush1.bf16.msra.mxu0 %v1109
    %1118 = vmatprep.subr.bf16.mxu0 0
    %1119 = vmatpush1.bf16.msra.mxu0 %v1110
    %1120 = vmatprep.subr.bf16.mxu0 0
    %1121 = vmatpush1.bf16.msra.mxu0 0
    %1122 = vmatprep.subr.bf16.mxu0 0
    %1123 = vmatpush1.bf16.msra.mxu0 0
    %1124 = vmatprep.subr.bf16.mxu0 0
    %1125 = vmatpush1.bf16.msra.mxu0 0
    %1126 = vmatprep.subr.bf16.mxu0 0
    %1127 = vmatpush1.bf16.msra.mxu0 0
    %1128 = vmatprep.subr.bf16.mxu0 0
    %1129 = vmatpush1.bf16.msra.mxu0 0
    %1130 = vmatprep.subr.bf16.mxu0 0
    %1131 = vmatpush1.bf16.msra.mxu0 0
    %1132 = vmatprep.subr.bf16.mxu0 0
    %1133 = vmatpush1.bf16.msra.mxu0 0
    %1134 = vmatprep.subr.bf16.mxu0 0
    %1135 = vmatpush1.bf16.msra.mxu0 0
    %1136 = vmatprep.subr.bf16.mxu0 0
    %1137 = vmatpush1.bf16.msra.mxu0 0
    %1138 = vmatprep.subr.bf16.mxu0 0
    %1139 = vmatpush1.bf16.msra.mxu0 0
    %1140 = vmatprep.subr.bf16.mxu0 0
    %1141 = vmatpush1.bf16.msra.mxu0 0
    %1142 = vmatprep.subr.bf16.mxu0 0
    %1143 = vmatpush1.bf16.msra.mxu0 0
    %1144 = vmatprep.subr.bf16.mxu0 0
    %1145 = vmatpush1.bf16.msra.mxu0 0
    %1146 = vmatprep.subr.bf16.mxu0 0
    %1147 = vmatpush1.bf16.msra.mxu0 0
    %1148 = vmatprep.mubr.bf16.mxu0 0
    %1149 = vmatmul.mubr.bf16.gmra.mrb[0].mxu0 %v1114
    %v1150 = vpop.f32.mrb[0].mxu0
    %v1151 = vadd.f32 %v1100, %v1150
    %v1152 = vpop.f32.mrb[0].mxu0
    %v1153 = vpop.f32.mrb[0].mxu0
    %v1154 = vadd.f32 %v1100, %v1153
    %v1155 = vpop.f32.mrb[0].mxu0
    %1156 = vdwg.mxu0
    %v1157 = vpack.c.bf16 %v96, %v95
    %1158 = vrot.lane.b32.xlu0 %v1109, 96
    %v1159 = vpop.permute.xlu0 %1158
    %1160 = vrot.lane.b32.xlu0 %v1110, 96
    %v1161 = vpop.permute.xlu0 %1160
    %1165 = vrot.lane.b32.xlu0 %v1100, 96
    %v1166 = vpop.permute.xlu0 %1165
    %v1169 = vsel %vm143, %v1157, 0
    %1171 = vmatprep.subr.bf16.mxu0 0
    %1172 = vmatpush1.bf16.msra.mxu0 %v1159
    %1173 = vmatprep.subr.bf16.mxu0 0
    %1174 = vmatpush1.bf16.msra.mxu0 %v1161
    %1175 = vmatprep.subr.bf16.mxu0 0
    %1176 = vmatpush1.bf16.msra.mxu0 0
    %1177 = vmatprep.subr.bf16.mxu0 0
    %1178 = vmatpush1.bf16.msra.mxu0 0
    %1179 = vmatprep.subr.bf16.mxu0 0
    %1180 = vmatpush1.bf16.msra.mxu0 0
    %1181 = vmatprep.subr.bf16.mxu0 0
    %1182 = vmatpush1.bf16.msra.mxu0 0
    %1183 = vmatprep.subr.bf16.mxu0 0
    %1184 = vmatpush1.bf16.msra.mxu0 0
    %1185 = vmatprep.subr.bf16.mxu0 0
    %1186 = vmatpush1.bf16.msra.mxu0 0
    %1187 = vmatprep.subr.bf16.mxu0 0
    %1188 = vmatpush1.bf16.msra.mxu0 0
    %1189 = vmatprep.subr.bf16.mxu0 0
    %1190 = vmatpush1.bf16.msra.mxu0 0
    %1191 = vmatprep.subr.bf16.mxu0 0
    %1192 = vmatpush1.bf16.msra.mxu0 0
    %1193 = vmatprep.subr.bf16.mxu0 0
    %1194 = vmatpush1.bf16.msra.mxu0 0
    %1195 = vmatprep.subr.bf16.mxu0 0
    %1196 = vmatpush1.bf16.msra.mxu0 0
    %1197 = vmatprep.subr.bf16.mxu0 0
    %1198 = vmatpush1.bf16.msra.mxu0 0
    %1199 = vmatprep.subr.bf16.mxu0 0
    %1200 = vmatpush1.bf16.msra.mxu0 0
    %1201 = vmatprep.subr.bf16.mxu0 0
    %1202 = vmatpush1.bf16.msra.mxu0 0
    %1203 = vmatprep.mubr.bf16.mxu0 0
    %1204 = vmatmul.mubr.bf16.gmra.mrb[0].mxu0 %v1169
    %v1205 = vpop.f32.mrb[0].mxu0
    %v1206 = vadd.f32 %v1166, %v1205
    %v1207 = vpop.f32.mrb[0].mxu0
    %v1208 = vpop.f32.mrb[0].mxu0
    %v1209 = vadd.f32 %v1166, %v1208
    %v1210 = vpop.f32.mrb[0].mxu0
    %1211 = vdwg.mxu0
    %v1212 = vpack.c.bf16 %v1154, %v1151
    %1213 = vxpose.xlu0.b32.start [1/16] %v1206, 128
    %1214 = vxpose.xlu0.b32.cont [2/16] %v1209, 128
    %1215 = vxpose.xlu0.b32.cont [3/16] 0.0, 128
    %1216 = vxpose.xlu0.b32.cont [4/16] 0.0, 128
    %1217 = vxpose.xlu0.b32.cont [5/16] 0.0, 128
    %1218 = vxpose.xlu0.b32.cont [6/16] 0.0, 128
    %1219 = vxpose.xlu0.b32.cont [7/16] 0.0, 128
    %1220 = vxpose.xlu0.b32.cont [8/16] 0.0, 128
    %1221 = vxpose.xlu0.b32.cont [9/16] 0.0, 128
    %1222 = vxpose.xlu0.b32.cont [10/16] 0.0, 128
    %1223 = vxpose.xlu0.b32.cont [11/16] 0.0, 128
    %1224 = vxpose.xlu0.b32.cont [12/16] 0.0, 128
    %1225 = vxpose.xlu0.b32.cont [13/16] 0.0, 128
    %1226 = vxpose.xlu0.b32.cont [14/16] 0.0, 128
    %1227 = vxpose.xlu0.b32.cont [15/16] 0.0, 128
    %1228 = vxpose.xlu0.b32.end [16/16] 0.0, 128
    %v1229 = vpop.trf.xlu0
    %v1230 = vpop.trf.xlu0
    %v1231 = vpop.trf.xlu0
    %v1232 = vpop.trf.xlu0
    %v1233 = vpop.trf.xlu0
    %v1234 = vpop.trf.xlu0
    %v1235 = vpop.trf.xlu0
    %v1236 = vpop.trf.xlu0
    %v1237 = vpop.trf.xlu0
    %v1238 = vpop.trf.xlu0
    %v1239 = vpop.trf.xlu0
    %v1240 = vpop.trf.xlu0
    %v1241 = vpop.trf.xlu0
    %v1242 = vpop.trf.xlu0
    %v1243 = vpop.trf.xlu0
    %v1244 = vpop.trf.xlu0
    %v1245 = vpack.c.bf16 %v1229, %v1229
    %v1247 = vsel %vm230, %v1212, 0
    %v1250 = vsel %vm234, %v1245, 0
    %1252 = vmatprep.subr.bf16.mxu0 0
    %1253 = vmatpush1.bf16.msra.mxu0 %v1250
    %1254 = vmatprep.subr.bf16.mxu0 0
    %1255 = vmatpush1.bf16.msra.mxu0 0
    %1256 = vmatprep.subr.bf16.mxu0 0
    %1257 = vmatpush1.bf16.msra.mxu0 0
    %1258 = vmatprep.subr.bf16.mxu0 0
    %1259 = vmatpush1.bf16.msra.mxu0 0
    %1260 = vmatprep.subr.bf16.mxu0 0
    %1261 = vmatpush1.bf16.msra.mxu0 0
    %1262 = vmatprep.subr.bf16.mxu0 0
    %1263 = vmatpush1.bf16.msra.mxu0 0
    %1264 = vmatprep.subr.bf16.mxu0 0
    %1265 = vmatpush1.bf16.msra.mxu0 0
    %1266 = vmatprep.subr.bf16.mxu0 0
    %1267 = vmatpush1.bf16.msra.mxu0 0
    %1268 = vmatprep.subr.bf16.mxu0 0
    %1269 = vmatpush1.bf16.msra.mxu0 0
    %1270 = vmatprep.subr.bf16.mxu0 0
    %1271 = vmatpush1.bf16.msra.mxu0 0
    %1272 = vmatprep.subr.bf16.mxu0 0
    %1273 = vmatpush1.bf16.msra.mxu0 0
    %1274 = vmatprep.subr.bf16.mxu0 0
    %1275 = vmatpush1.bf16.msra.mxu0 0
    %1276 = vmatprep.subr.bf16.mxu0 0
    %1277 = vmatpush1.bf16.msra.mxu0 0
    %1278 = vmatprep.subr.bf16.mxu0 0
    %1279 = vmatpush1.bf16.msra.mxu0 0
    %1280 = vmatprep.subr.bf16.mxu0 0
    %1281 = vmatpush1.bf16.msra.mxu0 0
    %1282 = vmatprep.subr.bf16.mxu0 0
    %1283 = vmatpush1.bf16.msra.mxu0 0
    %1284 = vmatprep.mubr.bf16.mxu0 0
    %1285 = vmatmul.mubr.bf16.gmra.mrb[0].mxu0 %v1247
    %v1286 = vpop.f32.mrb[0].mxu0
    %v1287 = vadd.f32 0.0, %v1286
    %v1288 = vpop.f32.mrb[0].mxu0
    %v1289 = vpop.f32.mrb[0].mxu0
    %v1290 = vadd.f32 0.0, %v1289
    %v1291 = vpop.f32.mrb[0].mxu0
    %1292 = vdwg.mxu0
    %v1293 = vmul.f32 %v1287, 0.35355338
    %v1294 = vmul.f32 %v1290, 0.35355338
    %v1295 = vadd.f32 %v1293, %v101
    %v1296 = vadd.f32 %v1294, %v102
    %v1297 = vsel %vm283, %v1295, -inf
    %1298 = vmax.xlane.f32.xlu0 %v1297
    %v1299 = vpop.xlane.xlu0 %1298
    %v1300 = vsel %vm283, %v1296, -inf
    %1301 = vmax.xlane.f32.xlu0 %v1300
    %v1302 = vpop.xlane.xlu0 %1301
    %v1303 = vsub.f32 %v1295, %v1299
    %v1304 = vsub.f32 %v1296, %v1302
    %v1305 = vmul.f32 %v1303, 1.442695
    %v1306 = vpow.pop %v1305
    %v1307 = vmul.f32 %v1304, 1.442695
    %v1308 = vpow.pop %v1307
    %v1309 = vsel %vm283, %v1306, 0.0
    %1310 = vadd.xlane.f32.xlu0 %v1309
    %v1311 = vpop.xlane.xlu0 %1310
    %v1312 = vsel %vm283, %v1308, 0.0
    %1313 = vadd.xlane.f32.xlu0 %v1312
    %v1314 = vpop.xlane.xlu0 %1313
    %v1315 = vrcp.pop %v1311
    %v1316 = vrcp.pop %v1314
    %v1317 = vmul.f32 %v1306, %v1315
    %v1318 = vmul.f32 %v1308, %v1316
    %v1319 = vpack.c.bf16 %v1318, %v1317
    %v1320 = vpack.c.bf16 %v1209, %v1206
    %1322 = vrot.lane.b32.xlu0 %v1320, 96
    %v1323 = vpop.permute.xlu0 %1322
    %v1326 = vsel %vm283, %v1319, 0
    %1328 = vmatprep.subr.bf16.mxu0 0
    %1329 = vmatpush1.bf16.msra.mxu0 %v1323
    %1330 = vmatprep.subr.bf16.mxu0 0
    %1331 = vmatpush1.bf16.msra.mxu0 0
    %1332 = vmatprep.subr.bf16.mxu0 0
    %1333 = vmatpush1.bf16.msra.mxu0 0
    %1334 = vmatprep.subr.bf16.mxu0 0
    %1335 = vmatpush1.bf16.msra.mxu0 0
    %1336 = vmatprep.subr.bf16.mxu0 0
    %1337 = vmatpush1.bf16.msra.mxu0 0
    %1338 = vmatprep.subr.bf16.mxu0 0
    %1339 = vmatpush1.bf16.msra.mxu0 0
    %1340 = vmatprep.subr.bf16.mxu0 0
    %1341 = vmatpush1.bf16.msra.mxu0 0
    %1342 = vmatprep.subr.bf16.mxu0 0
    %1343 = vmatpush1.bf16.msra.mxu0 0
    %1344 = vmatprep.subr.bf16.mxu0 0
    %1345 = vmatpush1.bf16.msra.mxu0 0
    %1346 = vmatprep.subr.bf16.mxu0 0
    %1347 = vmatpush1.bf16.msra.mxu0 0
    %1348 = vmatprep.subr.bf16.mxu0 0
    %1349 = vmatpush1.bf16.msra.mxu0 0
    %1350 = vmatprep.subr.bf16.mxu0 0
    %1351 = vmatpush1.bf16.msra.mxu0 0
    %1352 = vmatprep.subr.bf16.mxu0 0
    %1353 = vmatpush1.bf16.msra.mxu0 0
    %1354 = vmatprep.subr.bf16.mxu0 0
    %1355 = vmatpush1.bf16.msra.mxu0 0
    %1356 = vmatprep.subr.bf16.mxu0 0
    %1357 = vmatpush1.bf16.msra.mxu0 0
    %1358 = vmatprep.subr.bf16.mxu0 0
    %1359 = vmatpush1.bf16.msra.mxu0 0
    %1360 = vmatprep.mubr.bf16.mxu0 0
    %1361 = vmatmul.mubr.bf16.gmra.mrb[0].mxu0 %v1326
    %v1362 = vpop.f32.mrb[0].mxu0
    %v1363 = vadd.f32 0.0, %v1362
    %v1364 = vpop.f32.mrb[0].mxu0
    %v1365 = vpop.f32.mrb[0].mxu0
    %v1366 = vadd.f32 0.0, %v1365
    %v1367 = vpop.f32.mrb[0].mxu0
    %1368 = vdwg.mxu0
    %v1369 = vpack.c.bf16 %v1366, %v1363
    %1372 = vrot.lane.b32.xlu0 %v1206, 120
    %v1373 = vpop.permute.xlu0 %1372
    %1374 = vrot.lane.b32.xlu0 %v1209, 120
    %v1375 = vpop.permute.xlu0 %1374
    %1378 = vxpose.xlu0.b32.start [1/16] %v1373, 128
    %1379 = vxpose.xlu0.b32.cont [2/16] %v1375, 128
    %1380 = vxpose.xlu0.b32.cont [3/16] 0.0, 128
    %1381 = vxpose.xlu0.b32.cont [4/16] 0.0, 128
    %1382 = vxpose.xlu0.b32.cont [5/16] 0.0, 128
    %1383 = vxpose.xlu0.b32.cont [6/16] 0.0, 128
    %1384 = vxpose.xlu0.b32.cont [7/16] 0.0, 128
    %1385 = vxpose.xlu0.b32.cont [8/16] 0.0, 128
    %1386 = vxpose.xlu0.b32.cont [9/16] 0.0, 128
    %1387 = vxpose.xlu0.b32.cont [10/16] 0.0, 128
    %1388 = vxpose.xlu0.b32.cont [11/16] 0.0, 128
    %1389 = vxpose.xlu0.b32.cont [12/16] 0.0, 128
    %1390 = vxpose.xlu0.b32.cont [13/16] 0.0, 128
    %1391 = vxpose.xlu0.b32.cont [14/16] 0.0, 128
    %1392 = vxpose.xlu0.b32.cont [15/16] 0.0, 128
    %1393 = vxpose.xlu0.b32.end [16/16] 0.0, 128
    %v1394 = vpop.trf.xlu0
    %v1395 = vpop.trf.xlu0
    %v1396 = vpop.trf.xlu0
    %v1397 = vpop.trf.xlu0
    %v1398 = vpop.trf.xlu0
    %v1399 = vpop.trf.xlu0
    %v1400 = vpop.trf.xlu0
    %v1401 = vpop.trf.xlu0
    %v1402 = vpop.trf.xlu0
    %v1403 = vpop.trf.xlu0
    %v1404 = vpop.trf.xlu0
    %v1405 = vpop.trf.xlu0
    %v1406 = vpop.trf.xlu0
    %v1407 = vpop.trf.xlu0
    %v1408 = vpop.trf.xlu0
    %v1409 = vpop.trf.xlu0
    %v1410 = vpack.c.bf16 %v1394, %v1394
    %1412 = vrot.lane.b32.xlu0 %v1212, 120
    %v1413 = vpop.permute.xlu0 %1412
    %v1415 = vsel %vm230, %v1413, 0
    %v1418 = vsel %vm234, %v1410, 0
    %1420 = vmatprep.subr.bf16.mxu0 0
    %1421 = vmatpush1.bf16.msra.mxu0 %v1418
    %1422 = vmatprep.subr.bf16.mxu0 0
    %1423 = vmatpush1.bf16.msra.mxu0 0
    %1424 = vmatprep.subr.bf16.mxu0 0
    %1425 = vmatpush1.bf16.msra.mxu0 0
    %1426 = vmatprep.subr.bf16.mxu0 0
    %1427 = vmatpush1.bf16.msra.mxu0 0
    %1428 = vmatprep.subr.bf16.mxu0 0
    %1429 = vmatpush1.bf16.msra.mxu0 0
    %1430 = vmatprep.subr.bf16.mxu0 0
    %1431 = vmatpush1.bf16.msra.mxu0 0
    %1432 = vmatprep.subr.bf16.mxu0 0
    %1433 = vmatpush1.bf16.msra.mxu0 0
    %1434 = vmatprep.subr.bf16.mxu0 0
    %1435 = vmatpush1.bf16.msra.mxu0 0
    %1436 = vmatprep.subr.bf16.mxu0 0
    %1437 = vmatpush1.bf16.msra.mxu0 0
    %1438 = vmatprep.subr.bf16.mxu0 0
    %1439 = vmatpush1.bf16.msra.mxu0 0
    %1440 = vmatprep.subr.bf16.mxu0 0
    %1441 = vmatpush1.bf16.msra.mxu0 0
    %1442 = vmatprep.subr.bf16.mxu0 0
    %1443 = vmatpush1.bf16.msra.mxu0 0
    %1444 = vmatprep.subr.bf16.mxu0 0
    %1445 = vmatpush1.bf16.msra.mxu0 0
    %1446 = vmatprep.subr.bf16.mxu0 0
    %1447 = vmatpush1.bf16.msra.mxu0 0
    %1448 = vmatprep.subr.bf16.mxu0 0
    %1449 = vmatpush1.bf16.msra.mxu0 0
    %1450 = vmatprep.subr.bf16.mxu0 0
    %1451 = vmatpush1.bf16.msra.mxu0 0
    %1452 = vmatprep.mubr.bf16.mxu0 0
    %1453 = vmatmul.mubr.bf16.gmra.mrb[0].mxu0 %v1415
    %v1454 = vpop.f32.mrb[0].mxu0
    %v1455 = vadd.f32 0.0, %v1454
    %v1456 = vpop.f32.mrb[0].mxu0
    %v1457 = vpop.f32.mrb[0].mxu0
    %v1458 = vadd.f32 0.0, %v1457
    %v1459 = vpop.f32.mrb[0].mxu0
    %1460 = vdwg.mxu0
    %v1461 = vmul.f32 %v1455, 0.35355338
    %v1462 = vmul.f32 %v1458, 0.35355338
    %v1463 = vadd.f32 %v1461, %v101
    %v1464 = vadd.f32 %v1462, %v102
    %v1465 = vsel %vm283, %v1463, -inf
    %1466 = vmax.xlane.f32.xlu0 %v1465
    %v1467 = vpop.xlane.xlu0 %1466
    %v1468 = vsel %vm283, %v1464, -inf
    %1469 = vmax.xlane.f32.xlu0 %v1468
    %v1470 = vpop.xlane.xlu0 %1469
    %v1471 = vsub.f32 %v1463, %v1467
    %v1472 = vsub.f32 %v1464, %v1470
    %v1473 = vmul.f32 %v1471, 1.442695
    %v1474 = vpow.pop %v1473
    %v1475 = vmul.f32 %v1472, 1.442695
    %v1476 = vpow.pop %v1475
    %v1477 = vsel %vm283, %v1474, 0.0
    %1478 = vadd.xlane.f32.xlu0 %v1477
    %v1479 = vpop.xlane.xlu0 %1478
    %v1480 = vsel %vm283, %v1476, 0.0
    %1481 = vadd.xlane.f32.xlu0 %v1480
    %v1482 = vpop.xlane.xlu0 %1481
    %v1483 = vrcp.pop %v1479
    %v1484 = vrcp.pop %v1482
    %v1485 = vmul.f32 %v1474, %v1483
    %v1486 = vmul.f32 %v1476, %v1484
    %v1487 = vpack.c.bf16 %v1486, %v1485
    %1488 = vrot.lane.b32.xlu0 %v1320, 88
    %v1489 = vpop.permute.xlu0 %1488
    %v1492 = vsel %vm283, %v1487, 0
    %1494 = vmatprep.subr.bf16.mxu0 0
    %1495 = vmatpush1.bf16.msra.mxu0 %v1489
    %1496 = vmatprep.subr.bf16.mxu0 0
    %1497 = vmatpush1.bf16.msra.mxu0 0
    %1498 = vmatprep.subr.bf16.mxu0 0
    %1499 = vmatpush1.bf16.msra.mxu0 0
    %1500 = vmatprep.subr.bf16.mxu0 0
    %1501 = vmatpush1.bf16.msra.mxu0 0
    %1502 = vmatprep.subr.bf16.mxu0 0
    %1503 = vmatpush1.bf16.msra.mxu0 0
    %1504 = vmatprep.subr.bf16.mxu0 0
    %1505 = vmatpush1.bf16.msra.mxu0 0
    %1506 = vmatprep.subr.bf16.mxu0 0
    %1507 = vmatpush1.bf16.msra.mxu0 0
    %1508 = vmatprep.subr.bf16.mxu0 0
    %1509 = vmatpush1.bf16.msra.mxu0 0
    %1510 = vmatprep.subr.bf16.mxu0 0
    %1511 = vmatpush1.bf16.msra.mxu0 0
    %1512 = vmatprep.subr.bf16.mxu0 0
    %1513 = vmatpush1.bf16.msra.mxu0 0
    %1514 = vmatprep.subr.bf16.mxu0 0
    %1515 = vmatpush1.bf16.msra.mxu0 0
    %1516 = vmatprep.subr.bf16.mxu0 0
    %1517 = vmatpush1.bf16.msra.mxu0 0
    %1518 = vmatprep.subr.bf16.mxu0 0
    %1519 = vmatpush1.bf16.msra.mxu0 0
    %1520 = vmatprep.subr.bf16.mxu0 0
    %1521 = vmatpush1.bf16.msra.mxu0 0
    %1522 = vmatprep.subr.bf16.mxu0 0
    %1523 = vmatpush1.bf16.msra.mxu0 0
    %1524 = vmatprep.subr.bf16.mxu0 0
    %1525 = vmatpush1.bf16.msra.mxu0 0
    %1526 = vmatprep.mubr.bf16.mxu0 0
    %1527 = vmatmul.mubr.bf16.gmra.mrb[0].mxu0 %v1492
    %v1528 = vpop.f32.mrb[0].mxu0
    %v1529 = vadd.f32 0.0, %v1528
    %v1530 = vpop.f32.mrb[0].mxu0
    %v1531 = vpop.f32.mrb[0].mxu0
    %v1532 = vadd.f32 0.0, %v1531
    %v1533 = vpop.f32.mrb[0].mxu0
    %1534 = vdwg.mxu0
    %v1535 = vpack.c.bf16 %v1532, %v1529
    %v1536 = vpack.c.b16 %v1106, %v1106
    %1537 = vrot.lane.b32.xlu0 %v1536, 32
    %v1538 = vpop.permute.xlu0 %1537
    %v1540 = vsel %vm230, %v1535, 0
    %v1543 = vsel %vm234, %v1538, 0
    %1545 = vmatprep.subr.bf16.mxu0 0
    %1546 = vmatpush1.bf16.msra.mxu0 %v1543
    %1547 = vmatprep.subr.bf16.mxu0 0
    %1548 = vmatpush1.bf16.msra.mxu0 0
    %1549 = vmatprep.subr.bf16.mxu0 0
    %1550 = vmatpush1.bf16.msra.mxu0 0
    %1551 = vmatprep.subr.bf16.mxu0 0
    %1552 = vmatpush1.bf16.msra.mxu0 0
    %1553 = vmatprep.subr.bf16.mxu0 0
    %1554 = vmatpush1.bf16.msra.mxu0 0
    %1555 = vmatprep.subr.bf16.mxu0 0
    %1556 = vmatpush1.bf16.msra.mxu0 0
    %1557 = vmatprep.subr.bf16.mxu0 0
    %1558 = vmatpush1.bf16.msra.mxu0 0
    %1559 = vmatprep.subr.bf16.mxu0 0
    %1560 = vmatpush1.bf16.msra.mxu0 0
    %1561 = vmatprep.subr.bf16.mxu0 0
    %1562 = vmatpush1.bf16.msra.mxu0 0
    %1563 = vmatprep.subr.bf16.mxu0 0
    %1564 = vmatpush1.bf16.msra.mxu0 0
    %1565 = vmatprep.subr.bf16.mxu0 0
    %1566 = vmatpush1.bf16.msra.mxu0 0
    %1567 = vmatprep.subr.bf16.mxu0 0
    %1568 = vmatpush1.bf16.msra.mxu0 0
    %1569 = vmatprep.subr.bf16.mxu0 0
    %1570 = vmatpush1.bf16.msra.mxu0 0
    %1571 = vmatprep.subr.bf16.mxu0 0
    %1572 = vmatpush1.bf16.msra.mxu0 0
    %1573 = vmatprep.subr.bf16.mxu0 0
    %1574 = vmatpush1.bf16.msra.mxu0 0
    %1575 = vmatprep.subr.bf16.mxu0 0
    %1576 = vmatpush1.bf16.msra.mxu0 0
    %1577 = vmatprep.mubr.bf16.mxu0 0
    %1578 = vmatmul.mubr.bf16.gmra.mrb[0].mxu0 %v1540
    %v1579 = vpop.f32.mrb[0].mxu0
    %v1580 = vadd.f32 0.0, %v1579
    %v1581 = vpop.f32.mrb[0].mxu0
    %v1582 = vpop.f32.mrb[0].mxu0
    %v1583 = vadd.f32 0.0, %v1582
    %v1584 = vpop.f32.mrb[0].mxu0
    %1585 = vdwg.mxu0
    %v1586 = vpack.c.b16 %v1105, %v1105
    %1587 = vrot.lane.b32.xlu0 %v1586, 32
    %v1588 = vpop.permute.xlu0 %1587
    %v1590 = vsel %vm230, %v1369, 0
    %v1593 = vsel %vm234, %v1588, 0
    %1595 = vmatprep.subr.bf16.mxu0 0
    %1596 = vmatpush1.bf16.msra.mxu0 %v1593
    %1597 = vmatprep.subr.bf16.mxu0 0
    %1598 = vmatpush1.bf16.msra.mxu0 0
    %1599 = vmatprep.subr.bf16.mxu0 0
    %1600 = vmatpush1.bf16.msra.mxu0 0
    %1601 = vmatprep.subr.bf16.mxu0 0
    %1602 = vmatpush1.bf16.msra.mxu0 0
    %1603 = vmatprep.subr.bf16.mxu0 0
    %1604 = vmatpush1.bf16.msra.mxu0 0
    %1605 = vmatprep.subr.bf16.mxu0 0
    %1606 = vmatpush1.bf16.msra.mxu0 0
    %1607 = vmatprep.subr.bf16.mxu0 0
    %1608 = vmatpush1.bf16.msra.mxu0 0
    %1609 = vmatprep.subr.bf16.mxu0 0
    %1610 = vmatpush1.bf16.msra.mxu0 0
    %1611 = vmatprep.subr.bf16.mxu0 0
    %1612 = vmatpush1.bf16.msra.mxu0 0
    %1613 = vmatprep.subr.bf16.mxu0 0
    %1614 = vmatpush1.bf16.msra.mxu0 0
    %1615 = vmatprep.subr.bf16.mxu0 0
    %1616 = vmatpush1.bf16.msra.mxu0 0
    %1617 = vmatprep.subr.bf16.mxu0 0
    %1618 = vmatpush1.bf16.msra.mxu0 0
    %1619 = vmatprep.subr.bf16.mxu0 0
    %1620 = vmatpush1.bf16.msra.mxu0 0
    %1621 = vmatprep.subr.bf16.mxu0 0
    %1622 = vmatpush1.bf16.msra.mxu0 0
    %1623 = vmatprep.subr.bf16.mxu0 0
    %1624 = vmatpush1.bf16.msra.mxu0 0
    %1625 = vmatprep.subr.bf16.mxu0 0
    %1626 = vmatpush1.bf16.msra.mxu0 0
    %1627 = vmatprep.mubr.bf16.mxu0 0
    %1628 = vmatmul.mubr.bf16.gmra.mrb[0].mxu0 %v1590
    %v1629 = vpop.f32.mrb[0].mxu0
    %v1630 = vadd.f32 %v1580, %v1629
    %v1631 = vpop.f32.mrb[0].mxu0
    %v1632 = vpop.f32.mrb[0].mxu0
    %v1633 = vadd.f32 %v1583, %v1632
    %v1634 = vpop.f32.mrb[0].mxu0
    %1635 = vdwg.mxu0
    %1636 = vrot.lane.b32.xlu0 %v1206, 112
    %v1637 = vpop.permute.xlu0 %1636
    %1638 = vrot.lane.b32.xlu0 %v1209, 112
    %v1639 = vpop.permute.xlu0 %1638
    %1642 = vxpose.xlu0.b32.start [1/16] %v1637, 128
    %1643 = vxpose.xlu0.b32.cont [2/16] %v1639, 128
    %1644 = vxpose.xlu0.b32.cont [3/16] 0.0, 128
    %1645 = vxpose.xlu0.b32.cont [4/16] 0.0, 128
    %1646 = vxpose.xlu0.b32.cont [5/16] 0.0, 128
    %1647 = vxpose.xlu0.b32.cont [6/16] 0.0, 128
    %1648 = vxpose.xlu0.b32.cont [7/16] 0.0, 128
    %1649 = vxpose.xlu0.b32.cont [8/16] 0.0, 128
    %1650 = vxpose.xlu0.b32.cont [9/16] 0.0, 128
    %1651 = vxpose.xlu0.b32.cont [10/16] 0.0, 128
    %1652 = vxpose.xlu0.b32.cont [11/16] 0.0, 128
    %1653 = vxpose.xlu0.b32.cont [12/16] 0.0, 128
    %1654 = vxpose.xlu0.b32.cont [13/16] 0.0, 128
    %1655 = vxpose.xlu0.b32.cont [14/16] 0.0, 128
    %1656 = vxpose.xlu0.b32.cont [15/16] 0.0, 128
    %1657 = vxpose.xlu0.b32.end [16/16] 0.0, 128
    %v1658 = vpop.trf.xlu0
    %v1659 = vpop.trf.xlu0
    %v1660 = vpop.trf.xlu0
    %v1661 = vpop.trf.xlu0
    %v1662 = vpop.trf.xlu0
    %v1663 = vpop.trf.xlu0
    %v1664 = vpop.trf.xlu0
    %v1665 = vpop.trf.xlu0
    %v1666 = vpop.trf.xlu0
    %v1667 = vpop.trf.xlu0
    %v1668 = vpop.trf.xlu0
    %v1669 = vpop.trf.xlu0
    %v1670 = vpop.trf.xlu0
    %v1671 = vpop.trf.xlu0
    %v1672 = vpop.trf.xlu0
    %v1673 = vpop.trf.xlu0
    %v1674 = vpack.c.bf16 %v1658, %v1658
    %1675 = vrot.lane.b32.xlu0 %v1212, 112
    %v1676 = vpop.permute.xlu0 %1675
    %v1678 = vsel %vm230, %v1676, 0
    %v1681 = vsel %vm234, %v1674, 0
    %1683 = vmatprep.subr.bf16.mxu0 0
    %1684 = vmatpush1.bf16.msra.mxu0 %v1681
    %1685 = vmatprep.subr.bf16.mxu0 0
    %1686 = vmatpush1.bf16.msra.mxu0 0
    %1687 = vmatprep.subr.bf16.mxu0 0
    %1688 = vmatpush1.bf16.msra.mxu0 0
    %1689 = vmatprep.subr.bf16.mxu0 0
    %1690 = vmatpush1.bf16.msra.mxu0 0
    %1691 = vmatprep.subr.bf16.mxu0 0
    %1692 = vmatpush1.bf16.msra.mxu0 0
    %1693 = vmatprep.subr.bf16.mxu0 0
    %1694 = vmatpush1.bf16.msra.mxu0 0
    %1695 = vmatprep.subr.bf16.mxu0 0
    %1696 = vmatpush1.bf16.msra.mxu0 0
    %1697 = vmatprep.subr.bf16.mxu0 0
    %1698 = vmatpush1.bf16.msra.mxu0 0
    %1699 = vmatprep.subr.bf16.mxu0 0
    %1700 = vmatpush1.bf16.msra.mxu0 0
    %1701 = vmatprep.subr.bf16.mxu0 0
    %1702 = vmatpush1.bf16.msra.mxu0 0
    %1703 = vmatprep.subr.bf16.mxu0 0
    %1704 = vmatpush1.bf16.msra.mxu0 0
    %1705 = vmatprep.subr.bf16.mxu0 0
    %1706 = vmatpush1.bf16.msra.mxu0 0
    %1707 = vmatprep.subr.bf16.mxu0 0
    %1708 = vmatpush1.bf16.msra.mxu0 0
    %1709 = vmatprep.subr.bf16.mxu0 0
    %1710 = vmatpush1.bf16.msra.mxu0 0
    %1711 = vmatprep.subr.bf16.mxu0 0
    %1712 = vmatpush1.bf16.msra.mxu0 0
    %1713 = vmatprep.subr.bf16.mxu0 0
    %1714 = vmatpush1.bf16.msra.mxu0 0
    %1715 = vmatprep.mubr.bf16.mxu0 0
    %1716 = vmatmul.mubr.bf16.gmra.mrb[0].mxu0 %v1678
    %v1717 = vpop.f32.mrb[0].mxu0
    %v1718 = vadd.f32 0.0, %v1717
    %v1719 = vpop.f32.mrb[0].mxu0
    %v1720 = vpop.f32.mrb[0].mxu0
    %v1721 = vadd.f32 0.0, %v1720
    %v1722 = vpop.f32.mrb[0].mxu0
    %1723 = vdwg.mxu0
    %v1724 = vmul.f32 %v1718, 0.35355338
    %v1725 = vmul.f32 %v1721, 0.35355338
    %v1726 = vadd.f32 %v1724, %v101
    %v1727 = vadd.f32 %v1725, %v102
    %v1728 = vsel %vm283, %v1726, -inf
    %1729 = vmax.xlane.f32.xlu0 %v1728
    %v1730 = vpop.xlane.xlu0 %1729
    %v1731 = vsel %vm283, %v1727, -inf
    %1732 = vmax.xlane.f32.xlu0 %v1731
    %v1733 = vpop.xlane.xlu0 %1732
    %v1734 = vsub.f32 %v1726, %v1730
    %v1735 = vsub.f32 %v1727, %v1733
    %v1736 = vmul.f32 %v1734, 1.442695
    %v1737 = vpow.pop %v1736
    %v1738 = vmul.f32 %v1735, 1.442695
    %v1739 = vpow.pop %v1738
    %v1740 = vsel %vm283, %v1737, 0.0
    %1741 = vadd.xlane.f32.xlu0 %v1740
    %v1742 = vpop.xlane.xlu0 %1741
    %v1743 = vsel %vm283, %v1739, 0.0
    %1744 = vadd.xlane.f32.xlu0 %v1743
    %v1745 = vpop.xlane.xlu0 %1744
    %v1746 = vrcp.pop %v1742
    %v1747 = vrcp.pop %v1745
    %v1748 = vmul.f32 %v1737, %v1746
    %v1749 = vmul.f32 %v1739, %v1747
    %v1750 = vpack.c.bf16 %v1749, %v1748
    %1751 = vrot.lane.b32.xlu0 %v1320, 80
    %v1752 = vpop.permute.xlu0 %1751
    %v1755 = vsel %vm283, %v1750, 0
    %1757 = vmatprep.subr.bf16.mxu0 0
    %1758 = vmatpush1.bf16.msra.mxu0 %v1752
    %1759 = vmatprep.subr.bf16.mxu0 0
    %1760 = vmatpush1.bf16.msra.mxu0 0
    %1761 = vmatprep.subr.bf16.mxu0 0
    %1762 = vmatpush1.bf16.msra.mxu0 0
    %1763 = vmatprep.subr.bf16.mxu0 0
    %1764 = vmatpush1.bf16.msra.mxu0 0
    %1765 = vmatprep.subr.bf16.mxu0 0
    %1766 = vmatpush1.bf16.msra.mxu0 0
    %1767 = vmatprep.subr.bf16.mxu0 0
    %1768 = vmatpush1.bf16.msra.mxu0 0
    %1769 = vmatprep.subr.bf16.mxu0 0
    %1770 = vmatpush1.bf16.msra.mxu0 0
    %1771 = vmatprep.subr.bf16.mxu0 0
    %1772 = vmatpush1.bf16.msra.mxu0 0
    %1773 = vmatprep.subr.bf16.mxu0 0
    %1774 = vmatpush1.bf16.msra.mxu0 0
    %1775 = vmatprep.subr.bf16.mxu0 0
    %1776 = vmatpush1.bf16.msra.mxu0 0
    %1777 = vmatprep.subr.bf16.mxu0 0
    %1778 = vmatpush1.bf16.msra.mxu0 0
    %1779 = vmatprep.subr.bf16.mxu0 0
    %1780 = vmatpush1.bf16.msra.mxu0 0
    %1781 = vmatprep.subr.bf16.mxu0 0
    %1782 = vmatpush1.bf16.msra.mxu0 0
    %1783 = vmatprep.subr.bf16.mxu0 0
    %1784 = vmatpush1.bf16.msra.mxu0 0
    %1785 = vmatprep.subr.bf16.mxu0 0
    %1786 = vmatpush1.bf16.msra.mxu0 0
    %1787 = vmatprep.subr.bf16.mxu0 0
    %1788 = vmatpush1.bf16.msra.mxu0 0
    %1789 = vmatprep.mubr.bf16.mxu0 0
    %1790 = vmatmul.mubr.bf16.gmra.mrb[0].mxu0 %v1755
    %v1791 = vpop.f32.mrb[0].mxu0
    %v1792 = vadd.f32 0.0, %v1791
    %v1793 = vpop.f32.mrb[0].mxu0
    %v1794 = vpop.f32.mrb[0].mxu0
    %v1795 = vadd.f32 0.0, %v1794
    %v1796 = vpop.f32.mrb[0].mxu0
    %1797 = vdwg.mxu0
    %v1798 = vpack.c.bf16 %v1795, %v1792
    %v1799 = vpack.c.b16 %v1107, %v1107
    %1800 = vrot.lane.b32.xlu0 %v1799, 32
    %v1801 = vpop.permute.xlu0 %1800
    %v1803 = vsel %vm230, %v1798, 0
    %v1806 = vsel %vm234, %v1801, 0
    %1808 = vmatprep.subr.bf16.mxu0 0
    %1809 = vmatpush1.bf16.msra.mxu0 %v1806
    %1810 = vmatprep.subr.bf16.mxu0 0
    %1811 = vmatpush1.bf16.msra.mxu0 0
    %1812 = vmatprep.subr.bf16.mxu0 0
    %1813 = vmatpush1.bf16.msra.mxu0 0
    %1814 = vmatprep.subr.bf16.mxu0 0
    %1815 = vmatpush1.bf16.msra.mxu0 0
    %1816 = vmatprep.subr.bf16.mxu0 0
    %1817 = vmatpush1.bf16.msra.mxu0 0
    %1818 = vmatprep.subr.bf16.mxu0 0
    %1819 = vmatpush1.bf16.msra.mxu0 0
    %1820 = vmatprep.subr.bf16.mxu0 0
    %1821 = vmatpush1.bf16.msra.mxu0 0
    %1822 = vmatprep.subr.bf16.mxu0 0
    %1823 = vmatpush1.bf16.msra.mxu0 0
    %1824 = vmatprep.subr.bf16.mxu0 0
    %1825 = vmatpush1.bf16.msra.mxu0 0
    %1826 = vmatprep.subr.bf16.mxu0 0
    %1827 = vmatpush1.bf16.msra.mxu0 0
    %1828 = vmatprep.subr.bf16.mxu0 0
    %1829 = vmatpush1.bf16.msra.mxu0 0
    %1830 = vmatprep.subr.bf16.mxu0 0
    %1831 = vmatpush1.bf16.msra.mxu0 0
    %1832 = vmatprep.subr.bf16.mxu0 0
    %1833 = vmatpush1.bf16.msra.mxu0 0
    %1834 = vmatprep.subr.bf16.mxu0 0
    %1835 = vmatpush1.bf16.msra.mxu0 0
    %1836 = vmatprep.subr.bf16.mxu0 0
    %1837 = vmatpush1.bf16.msra.mxu0 0
    %1838 = vmatprep.subr.bf16.mxu0 0
    %1839 = vmatpush1.bf16.msra.mxu0 0
    %1840 = vmatprep.mubr.bf16.mxu0 0
    %1841 = vmatmul.mubr.bf16.gmra.mrb[0].mxu0 %v1803
    %v1842 = vpop.f32.mrb[0].mxu0
    %v1843 = vadd.f32 0.0, %v1842
    %v1844 = vpop.f32.mrb[0].mxu0
    %v1845 = vpop.f32.mrb[0].mxu0
    %v1846 = vadd.f32 0.0, %v1845
    %v1847 = vpop.f32.mrb[0].mxu0
    %1848 = vdwg.mxu0
    %v1849 = vadd.f32 %v1630, %v1843
    %v1850 = vadd.f32 %v1633, %v1846
    %1851 = vrot.lane.b32.xlu0 %v1206, 104
    %v1852 = vpop.permute.xlu0 %1851
    %1853 = vrot.lane.b32.xlu0 %v1209, 104
    %v1854 = vpop.permute.xlu0 %1853
    %1857 = vxpose.xlu0.b32.start [1/16] %v1852, 128
    %1858 = vxpose.xlu0.b32.cont [2/16] %v1854, 128
    %1859 = vxpose.xlu0.b32.cont [3/16] 0.0, 128
    %1860 = vxpose.xlu0.b32.cont [4/16] 0.0, 128
    %1861 = vxpose.xlu0.b32.cont [5/16] 0.0, 128
    %1862 = vxpose.xlu0.b32.cont [6/16] 0.0, 128
    %1863 = vxpose.xlu0.b32.cont [7/16] 0.0, 128
    %1864 = vxpose.xlu0.b32.cont [8/16] 0.0, 128
    %1865 = vxpose.xlu0.b32.cont [9/16] 0.0, 128
    %1866 = vxpose.xlu0.b32.cont [10/16] 0.0, 128
    %1867 = vxpose.xlu0.b32.cont [11/16] 0.0, 128
    %1868 = vxpose.xlu0.b32.cont [12/16] 0.0, 128
    %1869 = vxpose.xlu0.b32.cont [13/16] 0.0, 128
    %1870 = vxpose.xlu0.b32.cont [14/16] 0.0, 128
    %1871 = vxpose.xlu0.b32.cont [15/16] 0.0, 128
    %1872 = vxpose.xlu0.b32.end [16/16] 0.0, 128
    %v1873 = vpop.trf.xlu0
    %v1874 = vpop.trf.xlu0
    %v1875 = vpop.trf.xlu0
    %v1876 = vpop.trf.xlu0
    %v1877 = vpop.trf.xlu0
    %v1878 = vpop.trf.xlu0
    %v1879 = vpop.trf.xlu0
    %v1880 = vpop.trf.xlu0
    %v1881 = vpop.trf.xlu0
    %v1882 = vpop.trf.xlu0
    %v1883 = vpop.trf.xlu0
    %v1884 = vpop.trf.xlu0
    %v1885 = vpop.trf.xlu0
    %v1886 = vpop.trf.xlu0
    %v1887 = vpop.trf.xlu0
    %v1888 = vpop.trf.xlu0
    %v1889 = vpack.c.bf16 %v1873, %v1873
    %1890 = vrot.lane.b32.xlu0 %v1212, 104
    %v1891 = vpop.permute.xlu0 %1890
    %v1893 = vsel %vm230, %v1891, 0
    %v1896 = vsel %vm234, %v1889, 0
    %1898 = vmatprep.subr.bf16.mxu0 0
    %1899 = vmatpush1.bf16.msra.mxu0 %v1896
    %1900 = vmatprep.subr.bf16.mxu0 0
    %1901 = vmatpush1.bf16.msra.mxu0 0
    %1902 = vmatprep.subr.bf16.mxu0 0
    %1903 = vmatpush1.bf16.msra.mxu0 0
    %1904 = vmatprep.subr.bf16.mxu0 0
    %1905 = vmatpush1.bf16.msra.mxu0 0
    %1906 = vmatprep.subr.bf16.mxu0 0
    %1907 = vmatpush1.bf16.msra.mxu0 0
    %1908 = vmatprep.subr.bf16.mxu0 0
    %1909 = vmatpush1.bf16.msra.mxu0 0
    %1910 = vmatprep.subr.bf16.mxu0 0
    %1911 = vmatpush1.bf16.msra.mxu0 0
    %1912 = vmatprep.subr.bf16.mxu0 0
    %1913 = vmatpush1.bf16.msra.mxu0 0
    %1914 = vmatprep.subr.bf16.mxu0 0
    %1915 = vmatpush1.bf16.msra.mxu0 0
    %1916 = vmatprep.subr.bf16.mxu0 0
    %1917 = vmatpush1.bf16.msra.mxu0 0
    %1918 = vmatprep.subr.bf16.mxu0 0
    %1919 = vmatpush1.bf16.msra.mxu0 0
    %1920 = vmatprep.subr.bf16.mxu0 0
    %1921 = vmatpush1.bf16.msra.mxu0 0
    %1922 = vmatprep.subr.bf16.mxu0 0
    %1923 = vmatpush1.bf16.msra.mxu0 0
    %1924 = vmatprep.subr.bf16.mxu0 0
    %1925 = vmatpush1.bf16.msra.mxu0 0
    %1926 = vmatprep.subr.bf16.mxu0 0
    %1927 = vmatpush1.bf16.msra.mxu0 0
    %1928 = vmatprep.subr.bf16.mxu0 0
    %1929 = vmatpush1.bf16.msra.mxu0 0
    %1930 = vmatprep.mubr.bf16.mxu0 0
    %1931 = vmatmul.mubr.bf16.gmra.mrb[0].mxu0 %v1893
    %v1932 = vpop.f32.mrb[0].mxu0
    %v1933 = vadd.f32 0.0, %v1932
    %v1934 = vpop.f32.mrb[0].mxu0
    %v1935 = vpop.f32.mrb[0].mxu0
    %v1936 = vadd.f32 0.0, %v1935
    %v1937 = vpop.f32.mrb[0].mxu0
    %1938 = vdwg.mxu0
    %v1939 = vmul.f32 %v1933, 0.35355338
    %v1940 = vmul.f32 %v1936, 0.35355338
    %v1941 = vadd.f32 %v1939, %v101
    %v1942 = vadd.f32 %v1940, %v102
    %v1943 = vsel %vm283, %v1941, -inf
    %1944 = vmax.xlane.f32.xlu0 %v1943
    %v1945 = vpop.xlane.xlu0 %1944
    %v1946 = vsel %vm283, %v1942, -inf
    %1947 = vmax.xlane.f32.xlu0 %v1946
    %v1948 = vpop.xlane.xlu0 %1947
    %v1949 = vsub.f32 %v1941, %v1945
    %v1950 = vsub.f32 %v1942, %v1948
    %v1951 = vmul.f32 %v1949, 1.442695
    %v1952 = vpow.pop %v1951
    %v1953 = vmul.f32 %v1950, 1.442695
    %v1954 = vpow.pop %v1953
    %v1955 = vsel %vm283, %v1952, 0.0
    %1956 = vadd.xlane.f32.xlu0 %v1955
    %v1957 = vpop.xlane.xlu0 %1956
    %v1958 = vsel %vm283, %v1954, 0.0
    %1959 = vadd.xlane.f32.xlu0 %v1958
    %v1960 = vpop.xlane.xlu0 %1959
    %v1961 = vrcp.pop %v1957
    %v1962 = vrcp.pop %v1960
    %v1963 = vmul.f32 %v1952, %v1961
    %v1964 = vmul.f32 %v1954, %v1962
    %v1965 = vpack.c.bf16 %v1964, %v1963
    %1966 = vrot.lane.b32.xlu0 %v1320, 72
    %v1967 = vpop.permute.xlu0 %1966
    %v1970 = vsel %vm283, %v1965, 0
    %1972 = vmatprep.subr.bf16.mxu0 0
    %1973 = vmatpush1.bf16.msra.mxu0 %v1967
    %1974 = vmatprep.subr.bf16.mxu0 0
    %1975 = vmatpush1.bf16.msra.mxu0 0
    %1976 = vmatprep.subr.bf16.mxu0 0
    %1977 = vmatpush1.bf16.msra.mxu0 0
    %1978 = vmatprep.subr.bf16.mxu0 0
    %1979 = vmatpush1.bf16.msra.mxu0 0
    %1980 = vmatprep.subr.bf16.mxu0 0
    %1981 = vmatpush1.bf16.msra.mxu0 0
    %1982 = vmatprep.subr.bf16.mxu0 0
    %1983 = vmatpush1.bf16.msra.mxu0 0
    %1984 = vmatprep.subr.bf16.mxu0 0
    %1985 = vmatpush1.bf16.msra.mxu0 0
    %1986 = vmatprep.subr.bf16.mxu0 0
    %1987 = vmatpush1.bf16.msra.mxu0 0
    %1988 = vmatprep.subr.bf16.mxu0 0
    %1989 = vmatpush1.bf16.msra.mxu0 0
    %1990 = vmatprep.subr.bf16.mxu0 0
    %1991 = vmatpush1.bf16.msra.mxu0 0
    %1992 = vmatprep.subr.bf16.mxu0 0
    %1993 = vmatpush1.bf16.msra.mxu0 0
    %1994 = vmatprep.subr.bf16.mxu0 0
    %1995 = vmatpush1.bf16.msra.mxu0 0
    %1996 = vmatprep.subr.bf16.mxu0 0
    %1997 = vmatpush1.bf16.msra.mxu0 0
    %1998 = vmatprep.subr.bf16.mxu0 0
    %1999 = vmatpush1.bf16.msra.mxu0 0
    %2000 = vmatprep.subr.bf16.mxu0 0
    %2001 = vmatpush1.bf16.msra.mxu0 0
    %2002 = vmatprep.subr.bf16.mxu0 0
    %2003 = vmatpush1.bf16.msra.mxu0 0
    %2004 = vmatprep.mubr.bf16.mxu0 0
    %2005 = vmatmul.mubr.bf16.gmra.mrb[0].mxu0 %v1970
    %v2006 = vpop.f32.mrb[0].mxu0
    %v2007 = vadd.f32 0.0, %v2006
    %v2008 = vpop.f32.mrb[0].mxu0
    %v2009 = vpop.f32.mrb[0].mxu0
    %v2010 = vadd.f32 0.0, %v2009
    %v2011 = vpop.f32.mrb[0].mxu0
    %2012 = vdwg.mxu0
    %v2013 = vpack.c.bf16 %v2010, %v2007
    %v2014 = vpack.c.b16 %v1108, %v1108
    %2015 = vrot.lane.b32.xlu0 %v2014, 32
    %v2016 = vpop.permute.xlu0 %2015
    %v2018 = vsel %vm230, %v2013, 0
    %v2021 = vsel %vm234, %v2016, 0
    %2023 = vmatprep.subr.bf16.mxu0 0
    %2024 = vmatpush1.bf16.msra.mxu0 %v2021
    %2025 = vmatprep.subr.bf16.mxu0 0
    %2026 = vmatpush1.bf16.msra.mxu0 0
    %2027 = vmatprep.subr.bf16.mxu0 0
    %2028 = vmatpush1.bf16.msra.mxu0 0
    %2029 = vmatprep.subr.bf16.mxu0 0
    %2030 = vmatpush1.bf16.msra.mxu0 0
    %2031 = vmatprep.subr.bf16.mxu0 0
    %2032 = vmatpush1.bf16.msra.mxu0 0
    %2033 = vmatprep.subr.bf16.mxu0 0
    %2034 = vmatpush1.bf16.msra.mxu0 0
    %2035 = vmatprep.subr.bf16.mxu0 0
    %2036 = vmatpush1.bf16.msra.mxu0 0
    %2037 = vmatprep.subr.bf16.mxu0 0
    %2038 = vmatpush1.bf16.msra.mxu0 0
    %2039 = vmatprep.subr.bf16.mxu0 0
    %2040 = vmatpush1.bf16.msra.mxu0 0
    %2041 = vmatprep.subr.bf16.mxu0 0
    %2042 = vmatpush1.bf16.msra.mxu0 0
    %2043 = vmatprep.subr.bf16.mxu0 0
    %2044 = vmatpush1.bf16.msra.mxu0 0
    %2045 = vmatprep.subr.bf16.mxu0 0
    %2046 = vmatpush1.bf16.msra.mxu0 0
    %2047 = vmatprep.subr.bf16.mxu0 0
    %2048 = vmatpush1.bf16.msra.mxu0 0
    %2049 = vmatprep.subr.bf16.mxu0 0
    %2050 = vmatpush1.bf16.msra.mxu0 0
    %2051 = vmatprep.subr.bf16.mxu0 0
    %2052 = vmatpush1.bf16.msra.mxu0 0
    %2053 = vmatprep.subr.bf16.mxu0 0
    %2054 = vmatpush1.bf16.msra.mxu0 0
    %2055 = vmatprep.mubr.bf16.mxu0 0
    %2056 = vmatmul.mubr.bf16.gmra.mrb[0].mxu0 %v2018
    %v2057 = vpop.f32.mrb[0].mxu0
    %v2058 = vadd.f32 0.0, %v2057
    %v2059 = vpop.f32.mrb[0].mxu0
    %v2060 = vpop.f32.mrb[0].mxu0
    %v2061 = vadd.f32 0.0, %v2060
    %v2062 = vpop.f32.mrb[0].mxu0
    %2063 = vdwg.mxu0
    %v2064 = vadd.f32 %v1849, %v2058
    %v2065 = vadd.f32 %v1850, %v2061
    %2066 = vrot.lane.b32.xlu0 %v1100, 32
    %v2067 = vpop.permute.xlu0 %2066
    %v2069 = vadd.f32 %v2064, %v2067
    %v2070 = vadd.f32 %v2065, %v2067
    %v2071 = vadd.f32 %v1094, %v2069
    %v2072 = vadd.f32 %v1095, %v2070
    %v2073 = vsel %vm143, %v2071, 0.0
    %2074 = vadd.xlane.f32.xlu0 %v2073
    %v2075 = vpop.xlane.xlu0 %2074
    %v2076 = vsel %vm143, %v2072, 0.0
    %2077 = vadd.xlane.f32.xlu0 %v2076
    %v2078 = vpop.xlane.xlu0 %2077
    %v2079 = vmul.f32 %v2075, %v1063
    %v2080 = vmul.f32 %v2078, %v1063
    %v2081 = vsub.f32 %v2071, %v2079
    %v2082 = vsub.f32 %v2072, %v2080
    %v2083 = vmul.f32 %v2081, %v2081
    %v2084 = vmul.f32 %v2082, %v2082
    %v2085 = vsel %vm143, %v2083, 0.0
    %2086 = vadd.xlane.f32.xlu0 %v2085
    %v2087 = vpop.xlane.xlu0 %2086
    %v2088 = vsel %vm143, %v2084, 0.0
    %2089 = vadd.xlane.f32.xlu0 %v2088
    %v2090 = vpop.xlane.xlu0 %2089
    %v2091 = vmul.f32 %v2087, %v1063
    %v2092 = vmul.f32 %v2090, %v1063
    %v2093 = vadd.f32 %v2091, 1e-05
    %v2094 = vadd.f32 %v2092, 1e-05
    %v2095 = vrsqrt.pop %v2093
    %v2096 = vrsqrt.pop %v2094
    %v2097 = vmul.f32 %v2081, %v2095
    %v2098 = vmul.f32 %v2082, %v2096
    %v2099 = vlaneseq
    %v2100 = vshrl.u32 %v2099, 7
    %v2101 = vsub.s32 1, %v2100
    %v2102 = vrot.slane %v125, %v2101
    %v2103 = vmul.f32 %v2097, %v2102
    %v2104 = vmul.f32 %v2098, %v2102
    %v2105 = vlaneseq
    %v2106 = vshrl.u32 %v2105, 7
    %v2107 = vsub.s32 4, %v2106
    %v2108 = vrot.slane %v125, %v2107
    %v2109 = vadd.f32 %v2103, %v2108
    %v2110 = vadd.f32 %v2104, %v2108
    %v2111 = vpack.c.bf16 %v2110, %v2109
    %v2113 = vlaneseq
    %v2114 = vshrl.u32 %v2113, 7
    %v2115 = vsub.s32 0, %v2114
    %v2116 = vrot.slane %v124, %v2115
    %v2122 = vunpack.c.l.b16 %v112
    %v2123 = vunpack.c.l.b16 %v113
    %v2124 = vunpack.c.l.b16 %v114
    %v2125 = vunpack.c.l.b16 %v115
    %v2126 = vpack.c.b16 %v2123, %v2122
    %v2127 = vpack.c.b16 %v2125, %v2124
    %v2131 = vsel %vm143, %v2111, 0
    %2133 = vmatprep.subr.bf16.mxu0 0
    %2134 = vmatpush1.bf16.msra.mxu0 %v2126
    %2135 = vmatprep.subr.bf16.mxu0 0
    %2136 = vmatpush1.bf16.msra.mxu0 %v2127
    %2137 = vmatprep.subr.bf16.mxu0 0
    %2138 = vmatpush1.bf16.msra.mxu0 0
    %2139 = vmatprep.subr.bf16.mxu0 0
    %2140 = vmatpush1.bf16.msra.mxu0 0
    %2141 = vmatprep.subr.bf16.mxu0 0
    %2142 = vmatpush1.bf16.msra.mxu0 0
    %2143 = vmatprep.subr.bf16.mxu0 0
    %2144 = vmatpush1.bf16.msra.mxu0 0
    %2145 = vmatprep.subr.bf16.mxu0 0
    %2146 = vmatpush1.bf16.msra.mxu0 0
    %2147 = vmatprep.subr.bf16.mxu0 0
    %2148 = vmatpush1.bf16.msra.mxu0 0
    %2149 = vmatprep.subr.bf16.mxu0 0
    %2150 = vmatpush1.bf16.msra.mxu0 0
    %2151 = vmatprep.subr.bf16.mxu0 0
    %2152 = vmatpush1.bf16.msra.mxu0 0
    %2153 = vmatprep.subr.bf16.mxu0 0
    %2154 = vmatpush1.bf16.msra.mxu0 0
    %2155 = vmatprep.subr.bf16.mxu0 0
    %2156 = vmatpush1.bf16.msra.mxu0 0
    %2157 = vmatprep.subr.bf16.mxu0 0
    %2158 = vmatpush1.bf16.msra.mxu0 0
    %2159 = vmatprep.subr.bf16.mxu0 0
    %2160 = vmatpush1.bf16.msra.mxu0 0
    %2161 = vmatprep.subr.bf16.mxu0 0
    %2162 = vmatpush1.bf16.msra.mxu0 0
    %2163 = vmatprep.subr.bf16.mxu0 0
    %2164 = vmatpush1.bf16.msra.mxu0 0
    %2165 = vmatprep.mubr.bf16.mxu0 0
    %2166 = vmatmul.mubr.bf16.gmra.mrb[0].mxu0 %v2131
    %v2167 = vpop.f32.mrb[0].mxu0
    %v2168 = vadd.f32 %v2116, %v2167
    %v2169 = vpop.f32.mrb[0].mxu0
    %v2170 = vpop.f32.mrb[0].mxu0
    %v2171 = vadd.f32 %v2116, %v2170
    %v2172 = vpop.f32.mrb[0].mxu0
    %2173 = vdwg.mxu0
    %v2174 = vmax.f32 %v2168, 0.0
    %v2175 = vmax.f32 %v2171, 0.0
    %v2176 = vpack.c.bf16 %v2175, %v2174
    %v2185 = vunpack.c.l.b16 %v116
    %v2186 = vunpack.c.l.b16 %v117
    %v2187 = vunpack.c.l.b16 %v118
    %v2188 = vunpack.c.l.b16 %v119
    %v2189 = vunpack.c.l.b16 %v120
    %v2190 = vunpack.c.l.b16 %v121
    %v2191 = vunpack.c.l.b16 %v122
    %v2192 = vunpack.c.l.b16 %v123
    %v2193 = vpack.c.b16 %v2186, %v2185
    %v2194 = vpack.c.b16 %v2188, %v2187
    %v2195 = vpack.c.b16 %v2190, %v2189
    %v2196 = vpack.c.b16 %v2192, %v2191
    %2201 = vrot.lane.b32.xlu0 %v2116, 64
    %v2202 = vpop.permute.xlu0 %2201
    %vm2204 = vcmask 523264
    %v2206 = vsel %vm2204, %v2176, 0
    %2208 = vmatprep.subr.bf16.mxu0 0
    %2209 = vmatpush1.bf16.msra.mxu0 %v2193
    %2210 = vmatprep.subr.bf16.mxu0 0
    %2211 = vmatpush1.bf16.msra.mxu0 %v2194
    %2212 = vmatprep.subr.bf16.mxu0 0
    %2213 = vmatpush1.bf16.msra.mxu0 %v2195
    %2214 = vmatprep.subr.bf16.mxu0 0
    %2215 = vmatpush1.bf16.msra.mxu0 %v2196
    %2216 = vmatprep.subr.bf16.mxu0 0
    %2217 = vmatpush1.bf16.msra.mxu0 0
    %2218 = vmatprep.subr.bf16.mxu0 0
    %2219 = vmatpush1.bf16.msra.mxu0 0
    %2220 = vmatprep.subr.bf16.mxu0 0
    %2221 = vmatpush1.bf16.msra.mxu0 0
    %2222 = vmatprep.subr.bf16.mxu0 0
    %2223 = vmatpush1.bf16.msra.mxu0 0
    %2224 = vmatprep.subr.bf16.mxu0 0
    %2225 = vmatpush1.bf16.msra.mxu0 0
    %2226 = vmatprep.subr.bf16.mxu0 0
    %2227 = vmatpush1.bf16.msra.mxu0 0
    %2228 = vmatprep.subr.bf16.mxu0 0
    %2229 = vmatpush1.bf16.msra.mxu0 0
    %2230 = vmatprep.subr.bf16.mxu0 0
    %2231 = vmatpush1.bf16.msra.mxu0 0
    %2232 = vmatprep.subr.bf16.mxu0 0
    %2233 = vmatpush1.bf16.msra.mxu0 0
    %2234 = vmatprep.subr.bf16.mxu0 0
    %2235 = vmatpush1.bf16.msra.mxu0 0
    %2236 = vmatprep.subr.bf16.mxu0 0
    %2237 = vmatpush1.bf16.msra.mxu0 0
    %2238 = vmatprep.subr.bf16.mxu0 0
    %2239 = vmatpush1.bf16.msra.mxu0 0
    %2240 = vmatprep.mubr.bf16.mxu0 0
    %2241 = vmatmul.mubr.bf16.gmra.mrb[0].mxu0 %v2206
    %v2242 = vpop.f32.mrb[0].mxu0
    %v2243 = vadd.f32 %v2202, %v2242
    %v2244 = vpop.f32.mrb[0].mxu0
    %v2245 = vpop.f32.mrb[0].mxu0
    %v2246 = vadd.f32 %v2202, %v2245
    %v2247 = vpop.f32.mrb[0].mxu0
    %2248 = vdwg.mxu0
    %v2249 = vadd.f32 %v2109, %v2243
    %v2250 = vadd.f32 %v2110, %v2246
    %v2251 = vsel %vm143, %v2249, 0.0
    %2252 = vadd.xlane.f32.xlu0 %v2251
    %v2253 = vpop.xlane.xlu0 %2252
    %v2254 = vsel %vm143, %v2250, 0.0
    %2255 = vadd.xlane.f32.xlu0 %v2254
    %v2256 = vpop.xlane.xlu0 %2255
    %v2257 = vmul.f32 %v2253, %v1063
    %v2258 = vmul.f32 %v2256, %v1063
    %v2259 = vsub.f32 %v2249, %v2257
    %v2260 = vsub.f32 %v2250, %v2258
    %v2261 = vmul.f32 %v2259, %v2259
    %v2262 = vmul.f32 %v2260, %v2260
    %v2263 = vsel %vm143, %v2261, 0.0
    %2264 = vadd.xlane.f32.xlu0 %v2263
    %v2265 = vpop.xlane.xlu0 %2264
    %v2266 = vsel %vm143, %v2262, 0.0
    %2267 = vadd.xlane.f32.xlu0 %v2266
    %v2268 = vpop.xlane.xlu0 %2267
    %v2269 = vmul.f32 %v2265, %v1063
    %v2270 = vmul.f32 %v2268, %v1063
    %v2271 = vadd.f32 %v2269, 1e-05
    %v2272 = vadd.f32 %v2270, 1e-05
    %v2273 = vrsqrt.pop %v2271
    %v2274 = vrsqrt.pop %v2272
    %v2275 = vmul.f32 %v2259, %v2273
    %v2276 = vmul.f32 %v2260, %v2274
    %v2277 = vlaneseq
    %v2278 = vshrl.u32 %v2277, 7
    %v2279 = vsub.s32 2, %v2278
    %v2280 = vrot.slane %v125, %v2279
    %v2281 = vmul.f32 %v2275, %v2280
    %v2282 = vmul.f32 %v2276, %v2280
    %v2283 = vlaneseq
    %v2284 = vshrl.u32 %v2283, 7
    %v2285 = vsub.s32 5, %v2284
    %v2286 = vrot.slane %v125, %v2285
    %v2287 = vadd.f32 %v2281, %v2286
    %v2288 = vadd.f32 %v2282, %v2286
    %2289 = vst.msk [vmem:[#allocation10] sm:$0xff] %vm143, %v2287
    %2290 = vst.msk [vmem:[#allocation10 + $0x8] sm:$0xff] %vm143, %v2288
    // Predicated region
    $region62: #{tpu_custom_call.1} parent=1 // pred_check
      _
    $region63: #{tpu_custom_call.1} parent=1 // pred_check_branch
      %2292 = sbr.rel (0) target = $region65
    $region64: #{tpu_custom_call.1} parent=1 // pred_region
      %s2294 = ssub.s32 256, 256
      %2295 = vsyncadd [#allocation4], %s2294
      %s2296 = sshll.u32 [#allocation10], 4
      %s2297 = int_to_ptr.vmem [resolvable:$true] %s2296
      %2302 = dma.vmem_to_hbm [thread:$0]  %s2297, 256, %s11, [#allocation4], 128, 128, 8
    $region65: #{tpu_custom_call.1} parent=1 // pred_fallthru
      _
    // Predicated region
    $region66: #{tpu_custom_call.1} parent=1 // pred_check
      _
    $region67: #{tpu_custom_call.1} parent=1 // pred_check_branch
      %2304 = sbr.rel (0) target = $region69
    $region68: #{tpu_custom_call.1} parent=1 // pred_region
      %2305 = dma.done [#allocation4], 256
    $region69: #{tpu_custom_call.1} parent=1 // pred_fallthru
      _
    %2306 = vsyncpa [#allocation3], 1
    %2307 = vsyncpa [#allocation6], 1
    %2308 = vsyncpa [#allocation9], 1
    %2309 = vsyncpa [#allocation4], 1

</llo_original>
